<compile_context>
chip_gen: v7x
topology: tpu7x:2x2x1
jax: 0.10.0
libtpu: 0.0.40
codegen_flags: <defaults>
</compile_context>

<pallas_src>
import functools

import numpy as np
import jax
import jax.numpy as jnp
from jax.experimental import pallas as pl
from jax.experimental.pallas import tpu as pltpu


@functools.partial(jax.jit,
                   static_argnames=("stride", "padding", "eps", "negative_slope"))
def cnn_forward(x_nchw, w_oihw, gamma, beta, *, stride=1, padding=1,
                eps=1e-5, negative_slope=0.1):
    N, C_in, H, W = x_nchw.shape
    C_out, C_in_w, kH, kW = w_oihw.shape
    assert C_in_w == C_in
    # Fused kernel currently specializes to stride-1 "same" convs (the way the
    # module is used: kernel_size=3, stride=1, padding=1).
    assert stride == 1 and kH == kW and 2 * padding == kH - 1, \
        "fused kernel supports stride=1 'same' convolutions"

    H_out, W_out = H, W
    HW = H_out * W_out
    p = padding

    # ---- wrapper glue: ONE pad op; everything else is free reshapes / consts ----
    # Flatten spatial and add a halo of (p rows + p lanes) of zeros on each side
    # so every (kh, kw) tap is a contiguous HW-long window at offset kh*W + kw.
    halo = p * W + p
    x_aug = jnp.pad(x_nchw.reshape(N, C_in, H * W),
                    ((0, 0), (0, 0), (halo, halo)))               # (N, C_in, L)
    L = H * W + 2 * halo

    # Weight flattened so column (kh*kW + kw)*C_in + c == w[:, c, kh, kw].
    w_flat = jnp.transpose(w_oihw, (0, 2, 3, 1)).reshape(C_out, kH * kW * C_in)
    w_flat = w_flat.astype(jnp.float32)

    gamma2 = gamma.reshape(C_out, 1).astype(jnp.float32)
    beta2 = beta.reshape(C_out, 1).astype(jnp.float32)

    # Horizontal-padding masks (compile-time constants), one row per kw tap:
    # lane j (with w = j mod W) is valid for tap kw iff 0 <= w + kw - p < W.
    col = np.tile(np.arange(W_out, dtype=np.int64), H_out)
    masks_np = np.zeros((kW, HW), np.float32)
    full_row = []
    for kw in range(kW):
        lo = max(0, p - kw)
        hi = min(W_out, W_out + p - kw)
        masks_np[kw] = ((col >= lo) & (col < hi)).astype(np.float32)
        full_row.append(lo == 0 and hi == W_out)
    masks = jnp.asarray(masks_np)

    inv_count = 1.0 / float(N * HW)

    def kernel(x_ref, w_ref, m_ref, g_ref, b_ref, o_ref):
        wv = w_ref[...]                                   # (C_out, kH*kW*C_in)

        # ---- conv: accumulate the kH*kW shifted taps; contraction over C_in on
        # the VPU (exact f32).  y_n stays lane-dense: (C_out, HW) = 4 vregs.
        ys = []
        for n in range(N):
            acc = jnp.zeros((C_out, HW), jnp.float32)
            for kh in range(kH):
                for kw in range(kW):
                    t = kh * kW + kw
                    xs = x_ref[n, :, pl.ds(kh * W_out + kw, HW)]   # (C_in, HW)
                    if not full_row[kw]:
                        xs = xs * m_ref[pl.ds(kw, 1), :]           # zero horiz pad lanes
                    for c in range(C_in):
                        w_col = wv[:, t * C_in + c:t * C_in + c + 1]   # (C_out, 1)
                        acc = acc + w_col * xs[c:c + 1, :]
            ys.append(acc)

        # ---- train-mode batch statistics over (N, H*W); biased variance,
        # two-pass (centered) for stability.
        total = ys[0].sum(axis=-1, keepdims=True)
        for n in range(1, N):
            total = total + ys[n].sum(axis=-1, keepdims=True)
        mean = total * inv_count                                   # (C_out, 1)

        cs = [y - mean for y in ys]
        sqsum = (cs[0] * cs[0]).sum(axis=-1, keepdims=True)
        for n in range(1, N):
            sqsum = sqsum + (cs[n] * cs[n]).sum(axis=-1, keepdims=True)
        var = sqsum * inv_count                                    # (C_out, 1)

        # ---- BN affine + LeakyReLU(0.1), lane-dense stores.
        scale = g_ref[...] * jax.lax.rsqrt(var + eps)              # (C_out, 1)
        shift = b_ref[...]
        for n in range(N):
            z = cs[n] * scale + shift
            o_ref[n] = jnp.where(z > 0, z, negative_slope * z)

    out3 = pl.pallas_call(
        kernel,
        out_shape=jax.ShapeDtypeStruct((N, C_out, HW), jnp.float32),
        grid=(1,),
        in_specs=[
            pl.BlockSpec((N, C_in, L), lambda i: (0, 0, 0)),           # haloed input
            pl.BlockSpec((C_out, kH * kW * C_in), lambda i: (0, 0)),   # weight
            pl.BlockSpec((kW, HW), lambda i: (0, 0)),                  # pad masks
            pl.BlockSpec((C_out, 1), lambda i: (0, 0)),                # gamma
            pl.BlockSpec((C_out, 1), lambda i: (0, 0)),                # beta
        ],
        out_specs=pl.BlockSpec((N, C_out, HW), lambda i: (0, 0, 0)),
        compiler_params=pltpu.CompilerParams(
            dimension_semantics=("arbitrary",)),
    )(x_aug.astype(jnp.float32), w_flat, masks, gamma2, beta2)

    # (N, C_out, H*W) is already channel-major: NCHW via a free reshape.
    return out3.reshape(N, C_out, H_out, W_out)


if __name__ == "__main__":
    key = jax.random.PRNGKey(0)
    k1, k2, k3, k4 = jax.random.split(key, 4)

    # Small shapes consistent with the module: CNN(3, 16, kernel_size=3,
    # stride=1, padding=1) on a (2, 3, 16, 16) input.
    N, C_in, H, W = 2, 3, 16, 16
    C_out, kH, kW = 16, 3, 3

    x = jax.random.normal(k1, (N, C_in, H, W), dtype=jnp.float32)
    w = jax.random.normal(k2, (C_out, C_in, kH, kW), dtype=jnp.float32) * 0.1
    gamma = 1.0 + 0.1 * jax.random.normal(k3, (C_out,), dtype=jnp.float32)
    beta = 0.1 * jax.random.normal(k4, (C_out,), dtype=jnp.float32)

    out = cnn_forward(x, w, gamma, beta, stride=1, padding=1)
    out = jax.block_until_ready(out)
    assert out.shape == (N, C_out, H, W)

    # Plain-JAX reference: conv -> batch-stat BN -> LeakyReLU, all in f32.
    ref_conv = jax.lax.conv_general_dilated(
        x, w, window_strides=(1, 1), padding=((1, 1), (1, 1)),
        dimension_numbers=("NCHW", "OIHW", "NCHW"),
        precision=jax.lax.Precision.HIGHEST)
    m = ref_conv.mean(axis=(0, 2, 3), keepdims=True)
    v = ref_conv.var(axis=(0, 2, 3), keepdims=True)
    ref = (ref_conv - m) * jax.lax.rsqrt(v + 1e-5)
    ref = gamma.reshape(1, -1, 1, 1) * ref + beta.reshape(1, -1, 1, 1)
    ref = jnp.where(ref > 0, ref, 0.1 * ref)

    max_err = float(jnp.max(jnp.abs(out - ref)))
    assert jnp.allclose(out, ref, atol=1e-3, rtol=1e-3), f"max_err={max_err}"

    print("KERNEL_OK")
</pallas_src>

<mosaic_0001>
module attributes {stable_mosaic.version = 11 : i64} {
  func.func @kernel(%arg0: i32, %arg1: memref<2x3x290xf32, #tpu.memory_space<vmem>>, %arg2: memref<16x27xf32, #tpu.memory_space<vmem>>, %arg3: memref<3x256xf32, #tpu.memory_space<vmem>>, %arg4: memref<16x1xf32, #tpu.memory_space<vmem>>, %arg5: memref<16x1xf32, #tpu.memory_space<vmem>>, %arg6: memref<2x16x256xf32, #tpu.memory_space<vmem>>) attributes {dimension_semantics = [#tpu.dimension_semantics<arbitrary>], iteration_bounds = array<i64: 1>, scalar_prefetch = 0 : i64, scratch_operands = 0 : i64, tpu.core_type = #tpu.core_type<tc>, window_params = [{pipeline_mode = #tpu.pipeline_mode<synchronous>, transform_indices = @transform_0, window_bounds = array<i64: 2, 3, 290>}, {pipeline_mode = #tpu.pipeline_mode<synchronous>, transform_indices = @transform_1, window_bounds = array<i64: 16, 27>}, {pipeline_mode = #tpu.pipeline_mode<synchronous>, transform_indices = @transform_2, window_bounds = array<i64: 3, 256>}, {pipeline_mode = #tpu.pipeline_mode<synchronous>, transform_indices = @transform_3, window_bounds = array<i64: 16, 1>}, {pipeline_mode = #tpu.pipeline_mode<synchronous>, transform_indices = @transform_4, window_bounds = array<i64: 16, 1>}, {pipeline_mode = #tpu.pipeline_mode<synchronous>, transform_indices = @transform_5, window_bounds = array<i64: 2, 16, 256>}]} {
    %c0 = arith.constant 0 : index
    %c0_0 = arith.constant 0 : index
    %0 = vector.load %arg2[%c0, %c0_0] : memref<16x27xf32, #tpu.memory_space<vmem>>, vector<16x27xf32>
    %cst = arith.constant 0.000000e+00 : f32
    %1 = vector.broadcast %cst : f32 to vector<16x256xf32>
    %c0_1 = arith.constant 0 : index
    %c0_2 = arith.constant 0 : index
    %c0_3 = arith.constant 0 : index
    %2 = vector.load %arg1[%c0_1, %c0_2, %c0_3] : memref<2x3x290xf32, #tpu.memory_space<vmem>>, vector<1x3x256xf32>
    %3 = vector.shape_cast %2 : vector<1x3x256xf32> to vector<3x256xf32>
    %c0_4 = arith.constant 0 : index
    %c0_5 = arith.constant 0 : index
    %4 = vector.load %arg3[%c0_4, %c0_5] : memref<3x256xf32, #tpu.memory_space<vmem>>, vector<1x256xf32>
    %5 = vector.broadcast %4 : vector<1x256xf32> to vector<3x256xf32>
    %6 = arith.mulf %3, %5 : vector<3x256xf32>
    %7 = vector.extract_strided_slice %0 {offsets = [0, 0], sizes = [16, 1], strides = [1, 1]} : vector<16x27xf32> to vector<16x1xf32>
    %8 = vector.extract_strided_slice %6 {offsets = [0, 0], sizes = [1, 256], strides = [1, 1]} : vector<3x256xf32> to vector<1x256xf32>
    %9 = vector.broadcast %7 : vector<16x1xf32> to vector<16x256xf32>
    %10 = vector.broadcast %8 : vector<1x256xf32> to vector<16x256xf32>
    %11 = arith.mulf %9, %10 : vector<16x256xf32>
    %12 = arith.addf %1, %11 : vector<16x256xf32>
    %13 = vector.extract_strided_slice %0 {offsets = [0, 1], sizes = [16, 1], strides = [1, 1]} : vector<16x27xf32> to vector<16x1xf32>
    %14 = vector.extract_strided_slice %6 {offsets = [1, 0], sizes = [1, 256], strides = [1, 1]} : vector<3x256xf32> to vector<1x256xf32>
    %15 = vector.broadcast %13 : vector<16x1xf32> to vector<16x256xf32>
    %16 = vector.broadcast %14 : vector<1x256xf32> to vector<16x256xf32>
    %17 = arith.mulf %15, %16 : vector<16x256xf32>
    %18 = arith.addf %12, %17 : vector<16x256xf32>
    %19 = vector.extract_strided_slice %0 {offsets = [0, 2], sizes = [16, 1], strides = [1, 1]} : vector<16x27xf32> to vector<16x1xf32>
    %20 = vector.extract_strided_slice %6 {offsets = [2, 0], sizes = [1, 256], strides = [1, 1]} : vector<3x256xf32> to vector<1x256xf32>
    %21 = vector.broadcast %19 : vector<16x1xf32> to vector<16x256xf32>
    %22 = vector.broadcast %20 : vector<1x256xf32> to vector<16x256xf32>
    %23 = arith.mulf %21, %22 : vector<16x256xf32>
    %24 = arith.addf %18, %23 : vector<16x256xf32>
    %c0_6 = arith.constant 0 : index
    %c0_7 = arith.constant 0 : index
    %c1 = arith.constant 1 : index
    %25 = vector.load %arg1[%c0_6, %c0_7, %c1] : memref<2x3x290xf32, #tpu.memory_space<vmem>>, vector<1x3x256xf32>
    %26 = vector.shape_cast %25 : vector<1x3x256xf32> to vector<3x256xf32>
    %27 = vector.extract_strided_slice %0 {offsets = [0, 3], sizes = [16, 1], strides = [1, 1]} : vector<16x27xf32> to vector<16x1xf32>
    %28 = vector.extract_strided_slice %26 {offsets = [0, 0], sizes = [1, 256], strides = [1, 1]} : vector<3x256xf32> to vector<1x256xf32>
    %29 = vector.broadcast %27 : vector<16x1xf32> to vector<16x256xf32>
    %30 = vector.broadcast %28 : vector<1x256xf32> to vector<16x256xf32>
    %31 = arith.mulf %29, %30 : vector<16x256xf32>
    %32 = arith.addf %24, %31 : vector<16x256xf32>
    %33 = vector.extract_strided_slice %0 {offsets = [0, 4], sizes = [16, 1], strides = [1, 1]} : vector<16x27xf32> to vector<16x1xf32>
    %34 = vector.extract_strided_slice %26 {offsets = [1, 0], sizes = [1, 256], strides = [1, 1]} : vector<3x256xf32> to vector<1x256xf32>
    %35 = vector.broadcast %33 : vector<16x1xf32> to vector<16x256xf32>
    %36 = vector.broadcast %34 : vector<1x256xf32> to vector<16x256xf32>
    %37 = arith.mulf %35, %36 : vector<16x256xf32>
    %38 = arith.addf %32, %37 : vector<16x256xf32>
    %39 = vector.extract_strided_slice %0 {offsets = [0, 5], sizes = [16, 1], strides = [1, 1]} : vector<16x27xf32> to vector<16x1xf32>
    %40 = vector.extract_strided_slice %26 {offsets = [2, 0], sizes = [1, 256], strides = [1, 1]} : vector<3x256xf32> to vector<1x256xf32>
    %41 = vector.broadcast %39 : vector<16x1xf32> to vector<16x256xf32>
    %42 = vector.broadcast %40 : vector<1x256xf32> to vector<16x256xf32>
    %43 = arith.mulf %41, %42 : vector<16x256xf32>
    %44 = arith.addf %38, %43 : vector<16x256xf32>
    %c0_8 = arith.constant 0 : index
    %c0_9 = arith.constant 0 : index
    %c2 = arith.constant 2 : index
    %45 = vector.load %arg1[%c0_8, %c0_9, %c2] : memref<2x3x290xf32, #tpu.memory_space<vmem>>, vector<1x3x256xf32>
    %46 = vector.shape_cast %45 : vector<1x3x256xf32> to vector<3x256xf32>
    %c2_10 = arith.constant 2 : index
    %c0_11 = arith.constant 0 : index
    %47 = vector.load %arg3[%c2_10, %c0_11] : memref<3x256xf32, #tpu.memory_space<vmem>>, vector<1x256xf32>
    %48 = vector.broadcast %47 : vector<1x256xf32> to vector<3x256xf32>
    %49 = arith.mulf %46, %48 : vector<3x256xf32>
    %50 = vector.extract_strided_slice %0 {offsets = [0, 6], sizes = [16, 1], strides = [1, 1]} : vector<16x27xf32> to vector<16x1xf32>
    %51 = vector.extract_strided_slice %49 {offsets = [0, 0], sizes = [1, 256], strides = [1, 1]} : vector<3x256xf32> to vector<1x256xf32>
    %52 = vector.broadcast %50 : vector<16x1xf32> to vector<16x256xf32>
    %53 = vector.broadcast %51 : vector<1x256xf32> to vector<16x256xf32>
    %54 = arith.mulf %52, %53 : vector<16x256xf32>
    %55 = arith.addf %44, %54 : vector<16x256xf32>
    %56 = vector.extract_strided_slice %0 {offsets = [0, 7], sizes = [16, 1], strides = [1, 1]} : vector<16x27xf32> to vector<16x1xf32>
    %57 = vector.extract_strided_slice %49 {offsets = [1, 0], sizes = [1, 256], strides = [1, 1]} : vector<3x256xf32> to vector<1x256xf32>
    %58 = vector.broadcast %56 : vector<16x1xf32> to vector<16x256xf32>
    %59 = vector.broadcast %57 : vector<1x256xf32> to vector<16x256xf32>
    %60 = arith.mulf %58, %59 : vector<16x256xf32>
    %61 = arith.addf %55, %60 : vector<16x256xf32>
    %62 = vector.extract_strided_slice %0 {offsets = [0, 8], sizes = [16, 1], strides = [1, 1]} : vector<16x27xf32> to vector<16x1xf32>
    %63 = vector.extract_strided_slice %49 {offsets = [2, 0], sizes = [1, 256], strides = [1, 1]} : vector<3x256xf32> to vector<1x256xf32>
    %64 = vector.broadcast %62 : vector<16x1xf32> to vector<16x256xf32>
    %65 = vector.broadcast %63 : vector<1x256xf32> to vector<16x256xf32>
    %66 = arith.mulf %64, %65 : vector<16x256xf32>
    %67 = arith.addf %61, %66 : vector<16x256xf32>
    %c0_12 = arith.constant 0 : index
    %c0_13 = arith.constant 0 : index
    %c16 = arith.constant 16 : index
    %68 = vector.load %arg1[%c0_12, %c0_13, %c16] : memref<2x3x290xf32, #tpu.memory_space<vmem>>, vector<1x3x256xf32>
    %69 = vector.shape_cast %68 : vector<1x3x256xf32> to vector<3x256xf32>
    %c0_14 = arith.constant 0 : index
    %c0_15 = arith.constant 0 : index
    %70 = vector.load %arg3[%c0_14, %c0_15] : memref<3x256xf32, #tpu.memory_space<vmem>>, vector<1x256xf32>
    %71 = vector.broadcast %70 : vector<1x256xf32> to vector<3x256xf32>
    %72 = arith.mulf %69, %71 : vector<3x256xf32>
    %73 = vector.extract_strided_slice %0 {offsets = [0, 9], sizes = [16, 1], strides = [1, 1]} : vector<16x27xf32> to vector<16x1xf32>
    %74 = vector.extract_strided_slice %72 {offsets = [0, 0], sizes = [1, 256], strides = [1, 1]} : vector<3x256xf32> to vector<1x256xf32>
    %75 = vector.broadcast %73 : vector<16x1xf32> to vector<16x256xf32>
    %76 = vector.broadcast %74 : vector<1x256xf32> to vector<16x256xf32>
    %77 = arith.mulf %75, %76 : vector<16x256xf32>
    %78 = arith.addf %67, %77 : vector<16x256xf32>
    %79 = vector.extract_strided_slice %0 {offsets = [0, 10], sizes = [16, 1], strides = [1, 1]} : vector<16x27xf32> to vector<16x1xf32>
    %80 = vector.extract_strided_slice %72 {offsets = [1, 0], sizes = [1, 256], strides = [1, 1]} : vector<3x256xf32> to vector<1x256xf32>
    %81 = vector.broadcast %79 : vector<16x1xf32> to vector<16x256xf32>
    %82 = vector.broadcast %80 : vector<1x256xf32> to vector<16x256xf32>
    %83 = arith.mulf %81, %82 : vector<16x256xf32>
    %84 = arith.addf %78, %83 : vector<16x256xf32>
    %85 = vector.extract_strided_slice %0 {offsets = [0, 11], sizes = [16, 1], strides = [1, 1]} : vector<16x27xf32> to vector<16x1xf32>
    %86 = vector.extract_strided_slice %72 {offsets = [2, 0], sizes = [1, 256], strides = [1, 1]} : vector<3x256xf32> to vector<1x256xf32>
    %87 = vector.broadcast %85 : vector<16x1xf32> to vector<16x256xf32>
    %88 = vector.broadcast %86 : vector<1x256xf32> to vector<16x256xf32>
    %89 = arith.mulf %87, %88 : vector<16x256xf32>
    %90 = arith.addf %84, %89 : vector<16x256xf32>
    %c0_16 = arith.constant 0 : index
    %c0_17 = arith.constant 0 : index
    %c17 = arith.constant 17 : index
    %91 = vector.load %arg1[%c0_16, %c0_17, %c17] : memref<2x3x290xf32, #tpu.memory_space<vmem>>, vector<1x3x256xf32>
    %92 = vector.shape_cast %91 : vector<1x3x256xf32> to vector<3x256xf32>
    %93 = vector.extract_strided_slice %0 {offsets = [0, 12], sizes = [16, 1], strides = [1, 1]} : vector<16x27xf32> to vector<16x1xf32>
    %94 = vector.extract_strided_slice %92 {offsets = [0, 0], sizes = [1, 256], strides = [1, 1]} : vector<3x256xf32> to vector<1x256xf32>
    %95 = vector.broadcast %93 : vector<16x1xf32> to vector<16x256xf32>
    %96 = vector.broadcast %94 : vector<1x256xf32> to vector<16x256xf32>
    %97 = arith.mulf %95, %96 : vector<16x256xf32>
    %98 = arith.addf %90, %97 : vector<16x256xf32>
    %99 = vector.extract_strided_slice %0 {offsets = [0, 13], sizes = [16, 1], strides = [1, 1]} : vector<16x27xf32> to vector<16x1xf32>
    %100 = vector.extract_strided_slice %92 {offsets = [1, 0], sizes = [1, 256], strides = [1, 1]} : vector<3x256xf32> to vector<1x256xf32>
    %101 = vector.broadcast %99 : vector<16x1xf32> to vector<16x256xf32>
    %102 = vector.broadcast %100 : vector<1x256xf32> to vector<16x256xf32>
    %103 = arith.mulf %101, %102 : vector<16x256xf32>
    %104 = arith.addf %98, %103 : vector<16x256xf32>
    %105 = vector.extract_strided_slice %0 {offsets = [0, 14], sizes = [16, 1], strides = [1, 1]} : vector<16x27xf32> to vector<16x1xf32>
    %106 = vector.extract_strided_slice %92 {offsets = [2, 0], sizes = [1, 256], strides = [1, 1]} : vector<3x256xf32> to vector<1x256xf32>
    %107 = vector.broadcast %105 : vector<16x1xf32> to vector<16x256xf32>
    %108 = vector.broadcast %106 : vector<1x256xf32> to vector<16x256xf32>
    %109 = arith.mulf %107, %108 : vector<16x256xf32>
    %110 = arith.addf %104, %109 : vector<16x256xf32>
    %c0_18 = arith.constant 0 : index
    %c0_19 = arith.constant 0 : index
    %c18 = arith.constant 18 : index
    %111 = vector.load %arg1[%c0_18, %c0_19, %c18] : memref<2x3x290xf32, #tpu.memory_space<vmem>>, vector<1x3x256xf32>
    %112 = vector.shape_cast %111 : vector<1x3x256xf32> to vector<3x256xf32>
    %c2_20 = arith.constant 2 : index
    %c0_21 = arith.constant 0 : index
    %113 = vector.load %arg3[%c2_20, %c0_21] : memref<3x256xf32, #tpu.memory_space<vmem>>, vector<1x256xf32>
    %114 = vector.broadcast %113 : vector<1x256xf32> to vector<3x256xf32>
    %115 = arith.mulf %112, %114 : vector<3x256xf32>
    %116 = vector.extract_strided_slice %0 {offsets = [0, 15], sizes = [16, 1], strides = [1, 1]} : vector<16x27xf32> to vector<16x1xf32>
    %117 = vector.extract_strided_slice %115 {offsets = [0, 0], sizes = [1, 256], strides = [1, 1]} : vector<3x256xf32> to vector<1x256xf32>
    %118 = vector.broadcast %116 : vector<16x1xf32> to vector<16x256xf32>
    %119 = vector.broadcast %117 : vector<1x256xf32> to vector<16x256xf32>
    %120 = arith.mulf %118, %119 : vector<16x256xf32>
    %121 = arith.addf %110, %120 : vector<16x256xf32>
    %122 = vector.extract_strided_slice %0 {offsets = [0, 16], sizes = [16, 1], strides = [1, 1]} : vector<16x27xf32> to vector<16x1xf32>
    %123 = vector.extract_strided_slice %115 {offsets = [1, 0], sizes = [1, 256], strides = [1, 1]} : vector<3x256xf32> to vector<1x256xf32>
    %124 = vector.broadcast %122 : vector<16x1xf32> to vector<16x256xf32>
    %125 = vector.broadcast %123 : vector<1x256xf32> to vector<16x256xf32>
    %126 = arith.mulf %124, %125 : vector<16x256xf32>
    %127 = arith.addf %121, %126 : vector<16x256xf32>
    %128 = vector.extract_strided_slice %0 {offsets = [0, 17], sizes = [16, 1], strides = [1, 1]} : vector<16x27xf32> to vector<16x1xf32>
    %129 = vector.extract_strided_slice %115 {offsets = [2, 0], sizes = [1, 256], strides = [1, 1]} : vector<3x256xf32> to vector<1x256xf32>
    %130 = vector.broadcast %128 : vector<16x1xf32> to vector<16x256xf32>
    %131 = vector.broadcast %129 : vector<1x256xf32> to vector<16x256xf32>
    %132 = arith.mulf %130, %131 : vector<16x256xf32>
    %133 = arith.addf %127, %132 : vector<16x256xf32>
    %c0_22 = arith.constant 0 : index
    %c0_23 = arith.constant 0 : index
    %c32 = arith.constant 32 : index
    %134 = vector.load %arg1[%c0_22, %c0_23, %c32] : memref<2x3x290xf32, #tpu.memory_space<vmem>>, vector<1x3x256xf32>
    %135 = vector.shape_cast %134 : vector<1x3x256xf32> to vector<3x256xf32>
    %c0_24 = arith.constant 0 : index
    %c0_25 = arith.constant 0 : index
    %136 = vector.load %arg3[%c0_24, %c0_25] : memref<3x256xf32, #tpu.memory_space<vmem>>, vector<1x256xf32>
    %137 = vector.broadcast %136 : vector<1x256xf32> to vector<3x256xf32>
    %138 = arith.mulf %135, %137 : vector<3x256xf32>
    %139 = vector.extract_strided_slice %0 {offsets = [0, 18], sizes = [16, 1], strides = [1, 1]} : vector<16x27xf32> to vector<16x1xf32>
    %140 = vector.extract_strided_slice %138 {offsets = [0, 0], sizes = [1, 256], strides = [1, 1]} : vector<3x256xf32> to vector<1x256xf32>
    %141 = vector.broadcast %139 : vector<16x1xf32> to vector<16x256xf32>
    %142 = vector.broadcast %140 : vector<1x256xf32> to vector<16x256xf32>
    %143 = arith.mulf %141, %142 : vector<16x256xf32>
    %144 = arith.addf %133, %143 : vector<16x256xf32>
    %145 = vector.extract_strided_slice %0 {offsets = [0, 19], sizes = [16, 1], strides = [1, 1]} : vector<16x27xf32> to vector<16x1xf32>
    %146 = vector.extract_strided_slice %138 {offsets = [1, 0], sizes = [1, 256], strides = [1, 1]} : vector<3x256xf32> to vector<1x256xf32>
    %147 = vector.broadcast %145 : vector<16x1xf32> to vector<16x256xf32>
    %148 = vector.broadcast %146 : vector<1x256xf32> to vector<16x256xf32>
    %149 = arith.mulf %147, %148 : vector<16x256xf32>
    %150 = arith.addf %144, %149 : vector<16x256xf32>
    %151 = vector.extract_strided_slice %0 {offsets = [0, 20], sizes = [16, 1], strides = [1, 1]} : vector<16x27xf32> to vector<16x1xf32>
    %152 = vector.extract_strided_slice %138 {offsets = [2, 0], sizes = [1, 256], strides = [1, 1]} : vector<3x256xf32> to vector<1x256xf32>
    %153 = vector.broadcast %151 : vector<16x1xf32> to vector<16x256xf32>
    %154 = vector.broadcast %152 : vector<1x256xf32> to vector<16x256xf32>
    %155 = arith.mulf %153, %154 : vector<16x256xf32>
    %156 = arith.addf %150, %155 : vector<16x256xf32>
    %c0_26 = arith.constant 0 : index
    %c0_27 = arith.constant 0 : index
    %c33 = arith.constant 33 : index
    %157 = vector.load %arg1[%c0_26, %c0_27, %c33] : memref<2x3x290xf32, #tpu.memory_space<vmem>>, vector<1x3x256xf32>
    %158 = vector.shape_cast %157 : vector<1x3x256xf32> to vector<3x256xf32>
    %159 = vector.extract_strided_slice %0 {offsets = [0, 21], sizes = [16, 1], strides = [1, 1]} : vector<16x27xf32> to vector<16x1xf32>
    %160 = vector.extract_strided_slice %158 {offsets = [0, 0], sizes = [1, 256], strides = [1, 1]} : vector<3x256xf32> to vector<1x256xf32>
    %161 = vector.broadcast %159 : vector<16x1xf32> to vector<16x256xf32>
    %162 = vector.broadcast %160 : vector<1x256xf32> to vector<16x256xf32>
    %163 = arith.mulf %161, %162 : vector<16x256xf32>
    %164 = arith.addf %156, %163 : vector<16x256xf32>
    %165 = vector.extract_strided_slice %0 {offsets = [0, 22], sizes = [16, 1], strides = [1, 1]} : vector<16x27xf32> to vector<16x1xf32>
    %166 = vector.extract_strided_slice %158 {offsets = [1, 0], sizes = [1, 256], strides = [1, 1]} : vector<3x256xf32> to vector<1x256xf32>
    %167 = vector.broadcast %165 : vector<16x1xf32> to vector<16x256xf32>
    %168 = vector.broadcast %166 : vector<1x256xf32> to vector<16x256xf32>
    %169 = arith.mulf %167, %168 : vector<16x256xf32>
    %170 = arith.addf %164, %169 : vector<16x256xf32>
    %171 = vector.extract_strided_slice %0 {offsets = [0, 23], sizes = [16, 1], strides = [1, 1]} : vector<16x27xf32> to vector<16x1xf32>
    %172 = vector.extract_strided_slice %158 {offsets = [2, 0], sizes = [1, 256], strides = [1, 1]} : vector<3x256xf32> to vector<1x256xf32>
    %173 = vector.broadcast %171 : vector<16x1xf32> to vector<16x256xf32>
    %174 = vector.broadcast %172 : vector<1x256xf32> to vector<16x256xf32>
    %175 = arith.mulf %173, %174 : vector<16x256xf32>
    %176 = arith.addf %170, %175 : vector<16x256xf32>
    %c0_28 = arith.constant 0 : index
    %c0_29 = arith.constant 0 : index
    %c34 = arith.constant 34 : index
    %177 = vector.load %arg1[%c0_28, %c0_29, %c34] : memref<2x3x290xf32, #tpu.memory_space<vmem>>, vector<1x3x256xf32>
    %178 = vector.shape_cast %177 : vector<1x3x256xf32> to vector<3x256xf32>
    %c2_30 = arith.constant 2 : index
    %c0_31 = arith.constant 0 : index
    %179 = vector.load %arg3[%c2_30, %c0_31] : memref<3x256xf32, #tpu.memory_space<vmem>>, vector<1x256xf32>
    %180 = vector.broadcast %179 : vector<1x256xf32> to vector<3x256xf32>
    %181 = arith.mulf %178, %180 : vector<3x256xf32>
    %182 = vector.extract_strided_slice %0 {offsets = [0, 24], sizes = [16, 1], strides = [1, 1]} : vector<16x27xf32> to vector<16x1xf32>
    %183 = vector.extract_strided_slice %181 {offsets = [0, 0], sizes = [1, 256], strides = [1, 1]} : vector<3x256xf32> to vector<1x256xf32>
    %184 = vector.broadcast %182 : vector<16x1xf32> to vector<16x256xf32>
    %185 = vector.broadcast %183 : vector<1x256xf32> to vector<16x256xf32>
    %186 = arith.mulf %184, %185 : vector<16x256xf32>
    %187 = arith.addf %176, %186 : vector<16x256xf32>
    %188 = vector.extract_strided_slice %0 {offsets = [0, 25], sizes = [16, 1], strides = [1, 1]} : vector<16x27xf32> to vector<16x1xf32>
    %189 = vector.extract_strided_slice %181 {offsets = [1, 0], sizes = [1, 256], strides = [1, 1]} : vector<3x256xf32> to vector<1x256xf32>
    %190 = vector.broadcast %188 : vector<16x1xf32> to vector<16x256xf32>
    %191 = vector.broadcast %189 : vector<1x256xf32> to vector<16x256xf32>
    %192 = arith.mulf %190, %191 : vector<16x256xf32>
    %193 = arith.addf %187, %192 : vector<16x256xf32>
    %194 = vector.extract_strided_slice %0 {offsets = [0, 26], sizes = [16, 1], strides = [1, 1]} : vector<16x27xf32> to vector<16x1xf32>
    %195 = vector.extract_strided_slice %181 {offsets = [2, 0], sizes = [1, 256], strides = [1, 1]} : vector<3x256xf32> to vector<1x256xf32>
    %196 = vector.broadcast %194 : vector<16x1xf32> to vector<16x256xf32>
    %197 = vector.broadcast %195 : vector<1x256xf32> to vector<16x256xf32>
    %198 = arith.mulf %196, %197 : vector<16x256xf32>
    %199 = arith.addf %193, %198 : vector<16x256xf32>
    %cst_32 = arith.constant 0.000000e+00 : f32
    %200 = vector.broadcast %cst_32 : f32 to vector<16x256xf32>
    %c1_33 = arith.constant 1 : index
    %c0_34 = arith.constant 0 : index
    %c0_35 = arith.constant 0 : index
    %201 = vector.load %arg1[%c1_33, %c0_34, %c0_35] : memref<2x3x290xf32, #tpu.memory_space<vmem>>, vector<1x3x256xf32>
    %202 = vector.shape_cast %201 : vector<1x3x256xf32> to vector<3x256xf32>
    %c0_36 = arith.constant 0 : index
    %c0_37 = arith.constant 0 : index
    %203 = vector.load %arg3[%c0_36, %c0_37] : memref<3x256xf32, #tpu.memory_space<vmem>>, vector<1x256xf32>
    %204 = vector.broadcast %203 : vector<1x256xf32> to vector<3x256xf32>
    %205 = arith.mulf %202, %204 : vector<3x256xf32>
    %206 = vector.extract_strided_slice %0 {offsets = [0, 0], sizes = [16, 1], strides = [1, 1]} : vector<16x27xf32> to vector<16x1xf32>
    %207 = vector.extract_strided_slice %205 {offsets = [0, 0], sizes = [1, 256], strides = [1, 1]} : vector<3x256xf32> to vector<1x256xf32>
    %208 = vector.broadcast %206 : vector<16x1xf32> to vector<16x256xf32>
    %209 = vector.broadcast %207 : vector<1x256xf32> to vector<16x256xf32>
    %210 = arith.mulf %208, %209 : vector<16x256xf32>
    %211 = arith.addf %200, %210 : vector<16x256xf32>
    %212 = vector.extract_strided_slice %0 {offsets = [0, 1], sizes = [16, 1], strides = [1, 1]} : vector<16x27xf32> to vector<16x1xf32>
    %213 = vector.extract_strided_slice %205 {offsets = [1, 0], sizes = [1, 256], strides = [1, 1]} : vector<3x256xf32> to vector<1x256xf32>
    %214 = vector.broadcast %212 : vector<16x1xf32> to vector<16x256xf32>
    %215 = vector.broadcast %213 : vector<1x256xf32> to vector<16x256xf32>
    %216 = arith.mulf %214, %215 : vector<16x256xf32>
    %217 = arith.addf %211, %216 : vector<16x256xf32>
    %218 = vector.extract_strided_slice %0 {offsets = [0, 2], sizes = [16, 1], strides = [1, 1]} : vector<16x27xf32> to vector<16x1xf32>
    %219 = vector.extract_strided_slice %205 {offsets = [2, 0], sizes = [1, 256], strides = [1, 1]} : vector<3x256xf32> to vector<1x256xf32>
    %220 = vector.broadcast %218 : vector<16x1xf32> to vector<16x256xf32>
    %221 = vector.broadcast %219 : vector<1x256xf32> to vector<16x256xf32>
    %222 = arith.mulf %220, %221 : vector<16x256xf32>
    %223 = arith.addf %217, %222 : vector<16x256xf32>
    %c1_38 = arith.constant 1 : index
    %c0_39 = arith.constant 0 : index
    %c1_40 = arith.constant 1 : index
    %224 = vector.load %arg1[%c1_38, %c0_39, %c1_40] : memref<2x3x290xf32, #tpu.memory_space<vmem>>, vector<1x3x256xf32>
    %225 = vector.shape_cast %224 : vector<1x3x256xf32> to vector<3x256xf32>
    %226 = vector.extract_strided_slice %0 {offsets = [0, 3], sizes = [16, 1], strides = [1, 1]} : vector<16x27xf32> to vector<16x1xf32>
    %227 = vector.extract_strided_slice %225 {offsets = [0, 0], sizes = [1, 256], strides = [1, 1]} : vector<3x256xf32> to vector<1x256xf32>
    %228 = vector.broadcast %226 : vector<16x1xf32> to vector<16x256xf32>
    %229 = vector.broadcast %227 : vector<1x256xf32> to vector<16x256xf32>
    %230 = arith.mulf %228, %229 : vector<16x256xf32>
    %231 = arith.addf %223, %230 : vector<16x256xf32>
    %232 = vector.extract_strided_slice %0 {offsets = [0, 4], sizes = [16, 1], strides = [1, 1]} : vector<16x27xf32> to vector<16x1xf32>
    %233 = vector.extract_strided_slice %225 {offsets = [1, 0], sizes = [1, 256], strides = [1, 1]} : vector<3x256xf32> to vector<1x256xf32>
    %234 = vector.broadcast %232 : vector<16x1xf32> to vector<16x256xf32>
    %235 = vector.broadcast %233 : vector<1x256xf32> to vector<16x256xf32>
    %236 = arith.mulf %234, %235 : vector<16x256xf32>
    %237 = arith.addf %231, %236 : vector<16x256xf32>
    %238 = vector.extract_strided_slice %0 {offsets = [0, 5], sizes = [16, 1], strides = [1, 1]} : vector<16x27xf32> to vector<16x1xf32>
    %239 = vector.extract_strided_slice %225 {offsets = [2, 0], sizes = [1, 256], strides = [1, 1]} : vector<3x256xf32> to vector<1x256xf32>
    %240 = vector.broadcast %238 : vector<16x1xf32> to vector<16x256xf32>
    %241 = vector.broadcast %239 : vector<1x256xf32> to vector<16x256xf32>
    %242 = arith.mulf %240, %241 : vector<16x256xf32>
    %243 = arith.addf %237, %242 : vector<16x256xf32>
    %c1_41 = arith.constant 1 : index
    %c0_42 = arith.constant 0 : index
    %c2_43 = arith.constant 2 : index
    %244 = vector.load %arg1[%c1_41, %c0_42, %c2_43] : memref<2x3x290xf32, #tpu.memory_space<vmem>>, vector<1x3x256xf32>
    %245 = vector.shape_cast %244 : vector<1x3x256xf32> to vector<3x256xf32>
    %c2_44 = arith.constant 2 : index
    %c0_45 = arith.constant 0 : index
    %246 = vector.load %arg3[%c2_44, %c0_45] : memref<3x256xf32, #tpu.memory_space<vmem>>, vector<1x256xf32>
    %247 = vector.broadcast %246 : vector<1x256xf32> to vector<3x256xf32>
    %248 = arith.mulf %245, %247 : vector<3x256xf32>
    %249 = vector.extract_strided_slice %0 {offsets = [0, 6], sizes = [16, 1], strides = [1, 1]} : vector<16x27xf32> to vector<16x1xf32>
    %250 = vector.extract_strided_slice %248 {offsets = [0, 0], sizes = [1, 256], strides = [1, 1]} : vector<3x256xf32> to vector<1x256xf32>
    %251 = vector.broadcast %249 : vector<16x1xf32> to vector<16x256xf32>
    %252 = vector.broadcast %250 : vector<1x256xf32> to vector<16x256xf32>
    %253 = arith.mulf %251, %252 : vector<16x256xf32>
    %254 = arith.addf %243, %253 : vector<16x256xf32>
    %255 = vector.extract_strided_slice %0 {offsets = [0, 7], sizes = [16, 1], strides = [1, 1]} : vector<16x27xf32> to vector<16x1xf32>
    %256 = vector.extract_strided_slice %248 {offsets = [1, 0], sizes = [1, 256], strides = [1, 1]} : vector<3x256xf32> to vector<1x256xf32>
    %257 = vector.broadcast %255 : vector<16x1xf32> to vector<16x256xf32>
    %258 = vector.broadcast %256 : vector<1x256xf32> to vector<16x256xf32>
    %259 = arith.mulf %257, %258 : vector<16x256xf32>
    %260 = arith.addf %254, %259 : vector<16x256xf32>
    %261 = vector.extract_strided_slice %0 {offsets = [0, 8], sizes = [16, 1], strides = [1, 1]} : vector<16x27xf32> to vector<16x1xf32>
    %262 = vector.extract_strided_slice %248 {offsets = [2, 0], sizes = [1, 256], strides = [1, 1]} : vector<3x256xf32> to vector<1x256xf32>
    %263 = vector.broadcast %261 : vector<16x1xf32> to vector<16x256xf32>
    %264 = vector.broadcast %262 : vector<1x256xf32> to vector<16x256xf32>
    %265 = arith.mulf %263, %264 : vector<16x256xf32>
    %266 = arith.addf %260, %265 : vector<16x256xf32>
    %c1_46 = arith.constant 1 : index
    %c0_47 = arith.constant 0 : index
    %c16_48 = arith.constant 16 : index
    %267 = vector.load %arg1[%c1_46, %c0_47, %c16_48] : memref<2x3x290xf32, #tpu.memory_space<vmem>>, vector<1x3x256xf32>
    %268 = vector.shape_cast %267 : vector<1x3x256xf32> to vector<3x256xf32>
    %c0_49 = arith.constant 0 : index
    %c0_50 = arith.constant 0 : index
    %269 = vector.load %arg3[%c0_49, %c0_50] : memref<3x256xf32, #tpu.memory_space<vmem>>, vector<1x256xf32>
    %270 = vector.broadcast %269 : vector<1x256xf32> to vector<3x256xf32>
    %271 = arith.mulf %268, %270 : vector<3x256xf32>
    %272 = vector.extract_strided_slice %0 {offsets = [0, 9], sizes = [16, 1], strides = [1, 1]} : vector<16x27xf32> to vector<16x1xf32>
    %273 = vector.extract_strided_slice %271 {offsets = [0, 0], sizes = [1, 256], strides = [1, 1]} : vector<3x256xf32> to vector<1x256xf32>
    %274 = vector.broadcast %272 : vector<16x1xf32> to vector<16x256xf32>
    %275 = vector.broadcast %273 : vector<1x256xf32> to vector<16x256xf32>
    %276 = arith.mulf %274, %275 : vector<16x256xf32>
    %277 = arith.addf %266, %276 : vector<16x256xf32>
    %278 = vector.extract_strided_slice %0 {offsets = [0, 10], sizes = [16, 1], strides = [1, 1]} : vector<16x27xf32> to vector<16x1xf32>
    %279 = vector.extract_strided_slice %271 {offsets = [1, 0], sizes = [1, 256], strides = [1, 1]} : vector<3x256xf32> to vector<1x256xf32>
    %280 = vector.broadcast %278 : vector<16x1xf32> to vector<16x256xf32>
    %281 = vector.broadcast %279 : vector<1x256xf32> to vector<16x256xf32>
    %282 = arith.mulf %280, %281 : vector<16x256xf32>
    %283 = arith.addf %277, %282 : vector<16x256xf32>
    %284 = vector.extract_strided_slice %0 {offsets = [0, 11], sizes = [16, 1], strides = [1, 1]} : vector<16x27xf32> to vector<16x1xf32>
    %285 = vector.extract_strided_slice %271 {offsets = [2, 0], sizes = [1, 256], strides = [1, 1]} : vector<3x256xf32> to vector<1x256xf32>
    %286 = vector.broadcast %284 : vector<16x1xf32> to vector<16x256xf32>
    %287 = vector.broadcast %285 : vector<1x256xf32> to vector<16x256xf32>
    %288 = arith.mulf %286, %287 : vector<16x256xf32>
    %289 = arith.addf %283, %288 : vector<16x256xf32>
    %c1_51 = arith.constant 1 : index
    %c0_52 = arith.constant 0 : index
    %c17_53 = arith.constant 17 : index
    %290 = vector.load %arg1[%c1_51, %c0_52, %c17_53] : memref<2x3x290xf32, #tpu.memory_space<vmem>>, vector<1x3x256xf32>
    %291 = vector.shape_cast %290 : vector<1x3x256xf32> to vector<3x256xf32>
    %292 = vector.extract_strided_slice %0 {offsets = [0, 12], sizes = [16, 1], strides = [1, 1]} : vector<16x27xf32> to vector<16x1xf32>
    %293 = vector.extract_strided_slice %291 {offsets = [0, 0], sizes = [1, 256], strides = [1, 1]} : vector<3x256xf32> to vector<1x256xf32>
    %294 = vector.broadcast %292 : vector<16x1xf32> to vector<16x256xf32>
    %295 = vector.broadcast %293 : vector<1x256xf32> to vector<16x256xf32>
    %296 = arith.mulf %294, %295 : vector<16x256xf32>
    %297 = arith.addf %289, %296 : vector<16x256xf32>
    %298 = vector.extract_strided_slice %0 {offsets = [0, 13], sizes = [16, 1], strides = [1, 1]} : vector<16x27xf32> to vector<16x1xf32>
    %299 = vector.extract_strided_slice %291 {offsets = [1, 0], sizes = [1, 256], strides = [1, 1]} : vector<3x256xf32> to vector<1x256xf32>
    %300 = vector.broadcast %298 : vector<16x1xf32> to vector<16x256xf32>
    %301 = vector.broadcast %299 : vector<1x256xf32> to vector<16x256xf32>
    %302 = arith.mulf %300, %301 : vector<16x256xf32>
    %303 = arith.addf %297, %302 : vector<16x256xf32>
    %304 = vector.extract_strided_slice %0 {offsets = [0, 14], sizes = [16, 1], strides = [1, 1]} : vector<16x27xf32> to vector<16x1xf32>
    %305 = vector.extract_strided_slice %291 {offsets = [2, 0], sizes = [1, 256], strides = [1, 1]} : vector<3x256xf32> to vector<1x256xf32>
    %306 = vector.broadcast %304 : vector<16x1xf32> to vector<16x256xf32>
    %307 = vector.broadcast %305 : vector<1x256xf32> to vector<16x256xf32>
    %308 = arith.mulf %306, %307 : vector<16x256xf32>
    %309 = arith.addf %303, %308 : vector<16x256xf32>
    %c1_54 = arith.constant 1 : index
    %c0_55 = arith.constant 0 : index
    %c18_56 = arith.constant 18 : index
    %310 = vector.load %arg1[%c1_54, %c0_55, %c18_56] : memref<2x3x290xf32, #tpu.memory_space<vmem>>, vector<1x3x256xf32>
    %311 = vector.shape_cast %310 : vector<1x3x256xf32> to vector<3x256xf32>
    %c2_57 = arith.constant 2 : index
    %c0_58 = arith.constant 0 : index
    %312 = vector.load %arg3[%c2_57, %c0_58] : memref<3x256xf32, #tpu.memory_space<vmem>>, vector<1x256xf32>
    %313 = vector.broadcast %312 : vector<1x256xf32> to vector<3x256xf32>
    %314 = arith.mulf %311, %313 : vector<3x256xf32>
    %315 = vector.extract_strided_slice %0 {offsets = [0, 15], sizes = [16, 1], strides = [1, 1]} : vector<16x27xf32> to vector<16x1xf32>
    %316 = vector.extract_strided_slice %314 {offsets = [0, 0], sizes = [1, 256], strides = [1, 1]} : vector<3x256xf32> to vector<1x256xf32>
    %317 = vector.broadcast %315 : vector<16x1xf32> to vector<16x256xf32>
    %318 = vector.broadcast %316 : vector<1x256xf32> to vector<16x256xf32>
    %319 = arith.mulf %317, %318 : vector<16x256xf32>
    %320 = arith.addf %309, %319 : vector<16x256xf32>
    %321 = vector.extract_strided_slice %0 {offsets = [0, 16], sizes = [16, 1], strides = [1, 1]} : vector<16x27xf32> to vector<16x1xf32>
    %322 = vector.extract_strided_slice %314 {offsets = [1, 0], sizes = [1, 256], strides = [1, 1]} : vector<3x256xf32> to vector<1x256xf32>
    %323 = vector.broadcast %321 : vector<16x1xf32> to vector<16x256xf32>
    %324 = vector.broadcast %322 : vector<1x256xf32> to vector<16x256xf32>
    %325 = arith.mulf %323, %324 : vector<16x256xf32>
    %326 = arith.addf %320, %325 : vector<16x256xf32>
    %327 = vector.extract_strided_slice %0 {offsets = [0, 17], sizes = [16, 1], strides = [1, 1]} : vector<16x27xf32> to vector<16x1xf32>
    %328 = vector.extract_strided_slice %314 {offsets = [2, 0], sizes = [1, 256], strides = [1, 1]} : vector<3x256xf32> to vector<1x256xf32>
    %329 = vector.broadcast %327 : vector<16x1xf32> to vector<16x256xf32>
    %330 = vector.broadcast %328 : vector<1x256xf32> to vector<16x256xf32>
    %331 = arith.mulf %329, %330 : vector<16x256xf32>
    %332 = arith.addf %326, %331 : vector<16x256xf32>
    %c1_59 = arith.constant 1 : index
    %c0_60 = arith.constant 0 : index
    %c32_61 = arith.constant 32 : index
    %333 = vector.load %arg1[%c1_59, %c0_60, %c32_61] : memref<2x3x290xf32, #tpu.memory_space<vmem>>, vector<1x3x256xf32>
    %334 = vector.shape_cast %333 : vector<1x3x256xf32> to vector<3x256xf32>
    %c0_62 = arith.constant 0 : index
    %c0_63 = arith.constant 0 : index
    %335 = vector.load %arg3[%c0_62, %c0_63] : memref<3x256xf32, #tpu.memory_space<vmem>>, vector<1x256xf32>
    %336 = vector.broadcast %335 : vector<1x256xf32> to vector<3x256xf32>
    %337 = arith.mulf %334, %336 : vector<3x256xf32>
    %338 = vector.extract_strided_slice %0 {offsets = [0, 18], sizes = [16, 1], strides = [1, 1]} : vector<16x27xf32> to vector<16x1xf32>
    %339 = vector.extract_strided_slice %337 {offsets = [0, 0], sizes = [1, 256], strides = [1, 1]} : vector<3x256xf32> to vector<1x256xf32>
    %340 = vector.broadcast %338 : vector<16x1xf32> to vector<16x256xf32>
    %341 = vector.broadcast %339 : vector<1x256xf32> to vector<16x256xf32>
    %342 = arith.mulf %340, %341 : vector<16x256xf32>
    %343 = arith.addf %332, %342 : vector<16x256xf32>
    %344 = vector.extract_strided_slice %0 {offsets = [0, 19], sizes = [16, 1], strides = [1, 1]} : vector<16x27xf32> to vector<16x1xf32>
    %345 = vector.extract_strided_slice %337 {offsets = [1, 0], sizes = [1, 256], strides = [1, 1]} : vector<3x256xf32> to vector<1x256xf32>
    %346 = vector.broadcast %344 : vector<16x1xf32> to vector<16x256xf32>
    %347 = vector.broadcast %345 : vector<1x256xf32> to vector<16x256xf32>
    %348 = arith.mulf %346, %347 : vector<16x256xf32>
    %349 = arith.addf %343, %348 : vector<16x256xf32>
    %350 = vector.extract_strided_slice %0 {offsets = [0, 20], sizes = [16, 1], strides = [1, 1]} : vector<16x27xf32> to vector<16x1xf32>
    %351 = vector.extract_strided_slice %337 {offsets = [2, 0], sizes = [1, 256], strides = [1, 1]} : vector<3x256xf32> to vector<1x256xf32>
    %352 = vector.broadcast %350 : vector<16x1xf32> to vector<16x256xf32>
    %353 = vector.broadcast %351 : vector<1x256xf32> to vector<16x256xf32>
    %354 = arith.mulf %352, %353 : vector<16x256xf32>
    %355 = arith.addf %349, %354 : vector<16x256xf32>
    %c1_64 = arith.constant 1 : index
    %c0_65 = arith.constant 0 : index
    %c33_66 = arith.constant 33 : index
    %356 = vector.load %arg1[%c1_64, %c0_65, %c33_66] : memref<2x3x290xf32, #tpu.memory_space<vmem>>, vector<1x3x256xf32>
    %357 = vector.shape_cast %356 : vector<1x3x256xf32> to vector<3x256xf32>
    %358 = vector.extract_strided_slice %0 {offsets = [0, 21], sizes = [16, 1], strides = [1, 1]} : vector<16x27xf32> to vector<16x1xf32>
    %359 = vector.extract_strided_slice %357 {offsets = [0, 0], sizes = [1, 256], strides = [1, 1]} : vector<3x256xf32> to vector<1x256xf32>
    %360 = vector.broadcast %358 : vector<16x1xf32> to vector<16x256xf32>
    %361 = vector.broadcast %359 : vector<1x256xf32> to vector<16x256xf32>
    %362 = arith.mulf %360, %361 : vector<16x256xf32>
    %363 = arith.addf %355, %362 : vector<16x256xf32>
    %364 = vector.extract_strided_slice %0 {offsets = [0, 22], sizes = [16, 1], strides = [1, 1]} : vector<16x27xf32> to vector<16x1xf32>
    %365 = vector.extract_strided_slice %357 {offsets = [1, 0], sizes = [1, 256], strides = [1, 1]} : vector<3x256xf32> to vector<1x256xf32>
    %366 = vector.broadcast %364 : vector<16x1xf32> to vector<16x256xf32>
    %367 = vector.broadcast %365 : vector<1x256xf32> to vector<16x256xf32>
    %368 = arith.mulf %366, %367 : vector<16x256xf32>
    %369 = arith.addf %363, %368 : vector<16x256xf32>
    %370 = vector.extract_strided_slice %0 {offsets = [0, 23], sizes = [16, 1], strides = [1, 1]} : vector<16x27xf32> to vector<16x1xf32>
    %371 = vector.extract_strided_slice %357 {offsets = [2, 0], sizes = [1, 256], strides = [1, 1]} : vector<3x256xf32> to vector<1x256xf32>
    %372 = vector.broadcast %370 : vector<16x1xf32> to vector<16x256xf32>
    %373 = vector.broadcast %371 : vector<1x256xf32> to vector<16x256xf32>
    %374 = arith.mulf %372, %373 : vector<16x256xf32>
    %375 = arith.addf %369, %374 : vector<16x256xf32>
    %c1_67 = arith.constant 1 : index
    %c0_68 = arith.constant 0 : index
    %c34_69 = arith.constant 34 : index
    %376 = vector.load %arg1[%c1_67, %c0_68, %c34_69] : memref<2x3x290xf32, #tpu.memory_space<vmem>>, vector<1x3x256xf32>
    %377 = vector.shape_cast %376 : vector<1x3x256xf32> to vector<3x256xf32>
    %c2_70 = arith.constant 2 : index
    %c0_71 = arith.constant 0 : index
    %378 = vector.load %arg3[%c2_70, %c0_71] : memref<3x256xf32, #tpu.memory_space<vmem>>, vector<1x256xf32>
    %379 = vector.broadcast %378 : vector<1x256xf32> to vector<3x256xf32>
    %380 = arith.mulf %377, %379 : vector<3x256xf32>
    %381 = vector.extract_strided_slice %0 {offsets = [0, 24], sizes = [16, 1], strides = [1, 1]} : vector<16x27xf32> to vector<16x1xf32>
    %382 = vector.extract_strided_slice %380 {offsets = [0, 0], sizes = [1, 256], strides = [1, 1]} : vector<3x256xf32> to vector<1x256xf32>
    %383 = vector.broadcast %381 : vector<16x1xf32> to vector<16x256xf32>
    %384 = vector.broadcast %382 : vector<1x256xf32> to vector<16x256xf32>
    %385 = arith.mulf %383, %384 : vector<16x256xf32>
    %386 = arith.addf %375, %385 : vector<16x256xf32>
    %387 = vector.extract_strided_slice %0 {offsets = [0, 25], sizes = [16, 1], strides = [1, 1]} : vector<16x27xf32> to vector<16x1xf32>
    %388 = vector.extract_strided_slice %380 {offsets = [1, 0], sizes = [1, 256], strides = [1, 1]} : vector<3x256xf32> to vector<1x256xf32>
    %389 = vector.broadcast %387 : vector<16x1xf32> to vector<16x256xf32>
    %390 = vector.broadcast %388 : vector<1x256xf32> to vector<16x256xf32>
    %391 = arith.mulf %389, %390 : vector<16x256xf32>
    %392 = arith.addf %386, %391 : vector<16x256xf32>
    %393 = vector.extract_strided_slice %0 {offsets = [0, 26], sizes = [16, 1], strides = [1, 1]} : vector<16x27xf32> to vector<16x1xf32>
    %394 = vector.extract_strided_slice %380 {offsets = [2, 0], sizes = [1, 256], strides = [1, 1]} : vector<3x256xf32> to vector<1x256xf32>
    %395 = vector.broadcast %393 : vector<16x1xf32> to vector<16x256xf32>
    %396 = vector.broadcast %394 : vector<1x256xf32> to vector<16x256xf32>
    %397 = arith.mulf %395, %396 : vector<16x256xf32>
    %398 = arith.addf %392, %397 : vector<16x256xf32>
    %cst_72 = arith.constant dense<0.000000e+00> : vector<16xf32>
    %399 = vector.multi_reduction <add>, %199, %cst_72 [1] : vector<16x256xf32> to vector<16xf32>
    %400 = vector.shape_cast %399 : vector<16xf32> to vector<16x1xf32>
    %cst_73 = arith.constant dense<0.000000e+00> : vector<16xf32>
    %401 = vector.multi_reduction <add>, %398, %cst_73 [1] : vector<16x256xf32> to vector<16xf32>
    %402 = vector.shape_cast %401 : vector<16xf32> to vector<16x1xf32>
    %403 = arith.addf %400, %402 : vector<16x1xf32>
    %cst_74 = arith.constant 0.001953125 : f32
    %404 = vector.broadcast %cst_74 : f32 to vector<16x1xf32>
    %405 = arith.mulf %403, %404 : vector<16x1xf32>
    %406 = vector.broadcast %405 : vector<16x1xf32> to vector<16x256xf32>
    %407 = arith.subf %199, %406 : vector<16x256xf32>
    %408 = vector.broadcast %405 : vector<16x1xf32> to vector<16x256xf32>
    %409 = arith.subf %398, %408 : vector<16x256xf32>
    %410 = arith.mulf %407, %407 : vector<16x256xf32>
    %cst_75 = arith.constant dense<0.000000e+00> : vector<16xf32>
    %411 = vector.multi_reduction <add>, %410, %cst_75 [1] : vector<16x256xf32> to vector<16xf32>
    %412 = vector.shape_cast %411 : vector<16xf32> to vector<16x1xf32>
    %413 = arith.mulf %409, %409 : vector<16x256xf32>
    %cst_76 = arith.constant dense<0.000000e+00> : vector<16xf32>
    %414 = vector.multi_reduction <add>, %413, %cst_76 [1] : vector<16x256xf32> to vector<16xf32>
    %415 = vector.shape_cast %414 : vector<16xf32> to vector<16x1xf32>
    %416 = arith.addf %412, %415 : vector<16x1xf32>
    %cst_77 = arith.constant 0.001953125 : f32
    %417 = vector.broadcast %cst_77 : f32 to vector<16x1xf32>
    %418 = arith.mulf %416, %417 : vector<16x1xf32>
    %c0_78 = arith.constant 0 : index
    %c0_79 = arith.constant 0 : index
    %419 = vector.load %arg4[%c0_78, %c0_79] : memref<16x1xf32, #tpu.memory_space<vmem>>, vector<16x1xf32>
    %cst_80 = arith.constant 9.99999974E-6 : f32
    %420 = vector.broadcast %cst_80 : f32 to vector<16x1xf32>
    %421 = arith.addf %418, %420 : vector<16x1xf32>
    %422 = math.rsqrt %421 : vector<16x1xf32>
    %423 = arith.mulf %419, %422 : vector<16x1xf32>
    %c0_81 = arith.constant 0 : index
    %c0_82 = arith.constant 0 : index
    %424 = vector.load %arg5[%c0_81, %c0_82] : memref<16x1xf32, #tpu.memory_space<vmem>>, vector<16x1xf32>
    %425 = vector.broadcast %423 : vector<16x1xf32> to vector<16x256xf32>
    %426 = arith.mulf %407, %425 : vector<16x256xf32>
    %427 = vector.broadcast %424 : vector<16x1xf32> to vector<16x256xf32>
    %428 = arith.addf %426, %427 : vector<16x256xf32>
    %cst_83 = arith.constant 0.000000e+00 : f32
    %429 = vector.broadcast %cst_83 : f32 to vector<16x256xf32>
    %430 = arith.cmpf ogt, %428, %429 : vector<16x256xf32>
    %cst_84 = arith.constant 1.000000e-01 : f32
    %431 = vector.broadcast %cst_84 : f32 to vector<16x256xf32>
    %432 = arith.mulf %431, %428 : vector<16x256xf32>
    %433 = arith.select %430, %428, %432 : vector<16x256xi1>, vector<16x256xf32>
    %c0_85 = arith.constant 0 : index
    %c0_86 = arith.constant 0 : index
    %c0_87 = arith.constant 0 : index
    %434 = vector.load %arg6[%c0_85, %c0_86, %c0_87] : memref<2x16x256xf32, #tpu.memory_space<vmem>>, vector<1x16x256xf32>
    %435 = vector.shape_cast %434 : vector<1x16x256xf32> to vector<16x256xf32>
    %436 = vector.shape_cast %433 : vector<16x256xf32> to vector<1x16x256xf32>
    tpu.vector_store %arg6[%c0_85, %c0_86, %c0_87], %436 {strides = array<i32>} : memref<2x16x256xf32, #tpu.memory_space<vmem>>, vector<1x16x256xf32>,
    %437 = vector.broadcast %423 : vector<16x1xf32> to vector<16x256xf32>
    %438 = arith.mulf %409, %437 : vector<16x256xf32>
    %439 = vector.broadcast %424 : vector<16x1xf32> to vector<16x256xf32>
    %440 = arith.addf %438, %439 : vector<16x256xf32>
    %cst_88 = arith.constant 0.000000e+00 : f32
    %441 = vector.broadcast %cst_88 : f32 to vector<16x256xf32>
    %442 = arith.cmpf ogt, %440, %441 : vector<16x256xf32>
    %cst_89 = arith.constant 1.000000e-01 : f32
    %443 = vector.broadcast %cst_89 : f32 to vector<16x256xf32>
    %444 = arith.mulf %443, %440 : vector<16x256xf32>
    %445 = arith.select %442, %440, %444 : vector<16x256xi1>, vector<16x256xf32>
    %c1_90 = arith.constant 1 : index
    %c0_91 = arith.constant 0 : index
    %c0_92 = arith.constant 0 : index
    %446 = vector.load %arg6[%c1_90, %c0_91, %c0_92] : memref<2x16x256xf32, #tpu.memory_space<vmem>>, vector<1x16x256xf32>
    %447 = vector.shape_cast %446 : vector<1x16x256xf32> to vector<16x256xf32>
    %448 = vector.shape_cast %445 : vector<16x256xf32> to vector<1x16x256xf32>
    tpu.vector_store %arg6[%c1_90, %c0_91, %c0_92], %448 {strides = array<i32>} : memref<2x16x256xf32, #tpu.memory_space<vmem>>, vector<1x16x256xf32>,
    return
  }
  func.func @transform_0(%arg0: i32) -> (i32, i32, i32) {
    %c0_i32 = arith.constant 0 : i32
    %c0_i32_0 = arith.constant 0 : i32
    %c0_i32_1 = arith.constant 0 : i32
    %c0_i32_2 = arith.constant 0 : i32
    return %c0_i32, %c0_i32_0, %c0_i32_1 : i32, i32, i32
  }
  func.func @transform_1(%arg0: i32) -> (i32, i32) {
    %c0_i32 = arith.constant 0 : i32
    %c0_i32_0 = arith.constant 0 : i32
    %c0_i32_1 = arith.constant 0 : i32
    return %c0_i32, %c0_i32_0 : i32, i32
  }
  func.func @transform_2(%arg0: i32) -> (i32, i32) {
    %c0_i32 = arith.constant 0 : i32
    %c0_i32_0 = arith.constant 0 : i32
    %c0_i32_1 = arith.constant 0 : i32
    return %c0_i32, %c0_i32_0 : i32, i32
  }
  func.func @transform_3(%arg0: i32) -> (i32, i32) {
    %c0_i32 = arith.constant 0 : i32
    %c0_i32_0 = arith.constant 0 : i32
    %c0_i32_1 = arith.constant 0 : i32
    return %c0_i32, %c0_i32_0 : i32, i32
  }
  func.func @transform_4(%arg0: i32) -> (i32, i32) {
    %c0_i32 = arith.constant 0 : i32
    %c0_i32_0 = arith.constant 0 : i32
    %c0_i32_1 = arith.constant 0 : i32
    return %c0_i32, %c0_i32_0 : i32, i32
  }
  func.func @transform_5(%arg0: i32) -> (i32, i32, i32) {
    %c0_i32 = arith.constant 0 : i32
    %c0_i32_0 = arith.constant 0 : i32
    %c0_i32_1 = arith.constant 0 : i32
    %c0_i32_2 = arith.constant 0 : i32
    return %c0_i32, %c0_i32_0, %c0_i32_1 : i32, i32, i32
  }
}

</mosaic_0001>

<llo_original>
// kernel: cnn_forward.1
$region0: #{cnn_forward.1}
  #allocation0 [shape = 'u32[]', space=smem, size = 0x4, offset = 0x4, fixed_abs, tag = 'smem constant byte address 0x4 - core index']
  #allocation1 [shape = 'u32[144,128]{1,0:T(1,128)}', space=vmem, size = 0x12000, scoped, tag = 'internal scratch']
  %s0 = inlined_call_operand.vmem [shape: f32[2,3,290], index: 0, kind: input, shape index: {}]
  %s1 = inlined_call_operand.vmem [shape: f32[16,27], index: 1, kind: input, shape index: {}]
  %s2 = inlined_call_operand.vmem [shape: f32[3,256], index: 2, kind: input, shape index: {}]
  %s3 = inlined_call_operand.vmem [shape: f32[16,1], index: 3, kind: input, shape index: {}]
  %s4 = inlined_call_operand.vmem [shape: f32[16,1], index: 4, kind: input, shape index: {}]
  %s5 = inlined_call_operand.vmem [shape: f32[2,16,256], index: 5, kind: output, shape index: {}]
  %s6 = sld [smem:[#allocation0]]
  $region30: #{cnn_forward.1} parent=0
    _
  %s8 = ssub.s32 1, %s6
  %s9 = scalar_select 0, %s8, %s6
  // Predicated region
  $region2: #{cnn_forward.1} parent=0 // pred_check
    _
  $region3: #{cnn_forward.1} parent=0 // pred_check_branch
    %11 = sbr.rel (0) target = $region5
  $region4: #{cnn_forward.1} parent=0 // pred_region
    _
  $region5: #{cnn_forward.1} parent=0 // pred_fallthru
    _
  // Predicated region
  $region6: #{cnn_forward.1} parent=0 // pred_check
    _
  $region7: #{cnn_forward.1} parent=0 // pred_check_branch
    %13 = sbr.rel (0) target = $region9
  $region8: #{cnn_forward.1} parent=0 // pred_region
    _
  $region9: #{cnn_forward.1} parent=0 // pred_fallthru
    _
  // Predicated region
  $region10: #{cnn_forward.1} parent=0 // pred_check
    _
  $region11: #{cnn_forward.1} parent=0 // pred_check_branch
    %15 = sbr.rel (0) target = $region13
  $region12: #{cnn_forward.1} parent=0 // pred_region
    _
  $region13: #{cnn_forward.1} parent=0 // pred_fallthru
    _
  // Predicated region
  $region14: #{cnn_forward.1} parent=0 // pred_check
    _
  $region15: #{cnn_forward.1} parent=0 // pred_check_branch
    %17 = sbr.rel (0) target = $region17
  $region16: #{cnn_forward.1} parent=0 // pred_region
    _
  $region17: #{cnn_forward.1} parent=0 // pred_fallthru
    _
  // Predicated region
  $region18: #{cnn_forward.1} parent=0 // pred_check
    _
  $region19: #{cnn_forward.1} parent=0 // pred_check_branch
    %19 = sbr.rel (0) target = $region21
  $region20: #{cnn_forward.1} parent=0 // pred_region
    _
  $region21: #{cnn_forward.1} parent=0 // pred_fallthru
    _
  %v20 = vld [vmem:[%s1] sm:$0xff]
  %v21 = vld [vmem:[%s1 + $0x8] sm:$0xff]
  %v22 = vld [vmem:[%s0] sm:$0x77]
  %v23 = vld [vmem:[%s2] ss:$4 sm:$0x3]
  %v25 = vlaneseq
  %v26 = vshrl.u32 %v25, 7
  %v27 = vsub.s32 0, %v26
  %v28 = vrot.slane %v23, %v27
  %v29 = vlaneseq
  %v30 = vshrl.u32 %v29, 7
  %v31 = vsub.s32 1, %v30
  %v32 = vrot.slane %v23, %v31
  %v33 = vcombine.low %v28, %v32
  %v35 = vmul.f32 %v22, %v33
  %37 = vset.pattern.permute.xlu0 0
  %38 = vperm.xlu0 %37, %v20
  %v39 = vpop.permute.xlu0 %38
  %42 = vset.pattern.permute.xlu0 0
  %43 = vperm.xlu0 %42, %v21
  %v44 = vpop.permute.xlu0 %43
  %v47 = vlaneseq
  %v48 = vshrl.u32 %v47, 7
  %v49 = vsub.s32 0, %v48
  %v50 = vrot.slane %v35, %v49
  %v51 = vlaneseq
  %v52 = vshrl.u32 %v51, 7
  %v53 = vsub.s32 4, %v52
  %v54 = vrot.slane %v35, %v53
  %v57 = vlaneseq
  %v58 = vshrl.u32 %v57, 7
  %v59 = vsub.s32 0, %v58
  %v60 = vrot.slane %v50, %v59
  %v61 = vlaneseq
  %v62 = vshrl.u32 %v61, 7
  %v63 = vsub.s32 0, %v62
  %v64 = vrot.slane %v54, %v63
  %v65 = vmul.f32 %v39, %v60
  %v66 = vmul.f32 %v39, %v64
  %v67 = vmul.f32 %v44, %v60
  %v68 = vmul.f32 %v44, %v64
  %v69 = vadd.f32 %v65, 0.0
  %v70 = vadd.f32 %v66, 0.0
  %v71 = vadd.f32 %v67, 0.0
  %v72 = vadd.f32 %v68, 0.0
  %73 = vset.pattern.permute.xlu0 1
  %74 = vperm.xlu0 %73, %v20
  %v75 = vpop.permute.xlu0 %74
  %77 = vset.pattern.permute.xlu0 1
  %78 = vperm.xlu0 %77, %v21
  %v79 = vpop.permute.xlu0 %78
  %v81 = vlaneseq
  %v82 = vshrl.u32 %v81, 7
  %v83 = vsub.s32 1, %v82
  %v84 = vrot.slane %v35, %v83
  %v85 = vlaneseq
  %v86 = vshrl.u32 %v85, 7
  %v87 = vsub.s32 5, %v86
  %v88 = vrot.slane %v35, %v87
  %v91 = vlaneseq
  %v92 = vshrl.u32 %v91, 7
  %v93 = vsub.s32 1, %v92
  %v94 = vrot.slane %v84, %v93
  %v95 = vlaneseq
  %v96 = vshrl.u32 %v95, 7
  %v97 = vsub.s32 1, %v96
  %v98 = vrot.slane %v88, %v97
  %v99 = vmul.f32 %v75, %v94
  %v100 = vmul.f32 %v75, %v98
  %v101 = vmul.f32 %v79, %v94
  %v102 = vmul.f32 %v79, %v98
  %v103 = vadd.f32 %v69, %v99
  %v104 = vadd.f32 %v70, %v100
  %v105 = vadd.f32 %v71, %v101
  %v106 = vadd.f32 %v72, %v102
  %107 = vset.pattern.permute.xlu0 2
  %108 = vperm.xlu0 %107, %v20
  %v109 = vpop.permute.xlu0 %108
  %111 = vset.pattern.permute.xlu0 2
  %112 = vperm.xlu0 %111, %v21
  %v113 = vpop.permute.xlu0 %112
  %v115 = vlaneseq
  %v116 = vshrl.u32 %v115, 7
  %v117 = vsub.s32 2, %v116
  %v118 = vrot.slane %v35, %v117
  %v119 = vlaneseq
  %v120 = vshrl.u32 %v119, 7
  %v121 = vsub.s32 6, %v120
  %v122 = vrot.slane %v35, %v121
  %v125 = vlaneseq
  %v126 = vshrl.u32 %v125, 7
  %v127 = vsub.s32 2, %v126
  %v128 = vrot.slane %v118, %v127
  %v129 = vlaneseq
  %v130 = vshrl.u32 %v129, 7
  %v131 = vsub.s32 2, %v130
  %v132 = vrot.slane %v122, %v131
  %v133 = vmul.f32 %v109, %v128
  %v134 = vmul.f32 %v109, %v132
  %v135 = vmul.f32 %v113, %v128
  %v136 = vmul.f32 %v113, %v132
  %v137 = vadd.f32 %v103, %v133
  %v138 = vadd.f32 %v104, %v134
  %v139 = vadd.f32 %v105, %v135
  %v140 = vadd.f32 %v106, %v136
  %v141 = vld [vmem:[%s0] sm:$0x77]
  %v142 = vld [vmem:[%s0 + $0x8] sm:$0x7]
  %143 = vset.pattern.permute.xlu0 3
  %144 = vperm.xlu0 %143, %v20
  %v145 = vpop.permute.xlu0 %144
  %147 = vset.pattern.permute.xlu0 3
  %148 = vperm.xlu0 %147, %v21
  %v149 = vpop.permute.xlu0 %148
  %v153 = vlaneseq
  %v154 = vshrl.u32 %v153, 7
  %v155 = vsub.s32 0, %v154
  %v156 = vrot.slane %v141, %v155
  %v157 = vlaneseq
  %v158 = vshrl.u32 %v157, 7
  %v159 = vsub.s32 4, %v158
  %v160 = vrot.slane %v141, %v159
  %v161 = vlaneseq
  %v162 = vshrl.u32 %v161, 7
  %v163 = vsub.s32 0, %v162
  %v164 = vrot.slane %v142, %v163
  %v168 = vlaneseq
  %v169 = vshrl.u32 %v168, 7
  %v170 = vsub.s32 0, %v169
  %v171 = vrot.slane %v156, %v170
  %v172 = vlaneseq
  %v173 = vshrl.u32 %v172, 7
  %v174 = vsub.s32 0, %v173
  %v175 = vrot.slane %v160, %v174
  %v176 = vlaneseq
  %v177 = vshrl.u32 %v176, 7
  %v178 = vsub.s32 0, %v177
  %v179 = vrot.slane %v164, %v178
  %v180 = vmul.f32 %v145, %v171
  %v181 = vmul.f32 %v145, %v175
  %v182 = vmul.f32 %v145, %v179
  %v183 = vmul.f32 %v149, %v171
  %v184 = vmul.f32 %v149, %v175
  %v185 = vmul.f32 %v149, %v179
  %192 = vrot.lane.b32.xlu0 %v180, 127
  %v193 = vpop.permute.xlu0 %192
  %194 = vrot.lane.b32.xlu0 %v181, 127
  %v195 = vpop.permute.xlu0 %194
  %196 = vrot.lane.b32.xlu0 %v182, 127
  %v197 = vpop.permute.xlu0 %196
  %198 = vrot.lane.b32.xlu0 %v183, 127
  %v199 = vpop.permute.xlu0 %198
  %200 = vrot.lane.b32.xlu0 %v184, 127
  %v201 = vpop.permute.xlu0 %200
  %202 = vrot.lane.b32.xlu0 %v185, 127
  %v203 = vpop.permute.xlu0 %202
  %vm204 = vcmask 1039360
  %v205 = vsel %vm204, %v193, %v195
  %v206 = vsel %vm204, %v195, %v197
  %v207 = vsel %vm204, %v199, %v201
  %v208 = vsel %vm204, %v201, %v203
  %v213 = vadd.f32 %v137, %v205
  %v214 = vadd.f32 %v138, %v206
  %v215 = vadd.f32 %v139, %v207
  %v216 = vadd.f32 %v140, %v208
  %217 = vset.pattern.permute.xlu0 4
  %218 = vperm.xlu0 %217, %v20
  %v219 = vpop.permute.xlu0 %218
  %221 = vset.pattern.permute.xlu0 4
  %222 = vperm.xlu0 %221, %v21
  %v223 = vpop.permute.xlu0 %222
  %v225 = vlaneseq
  %v226 = vshrl.u32 %v225, 7
  %v227 = vsub.s32 1, %v226
  %v228 = vrot.slane %v141, %v227
  %v229 = vlaneseq
  %v230 = vshrl.u32 %v229, 7
  %v231 = vsub.s32 5, %v230
  %v232 = vrot.slane %v141, %v231
  %v233 = vlaneseq
  %v234 = vshrl.u32 %v233, 7
  %v235 = vsub.s32 1, %v234
  %v236 = vrot.slane %v142, %v235
  %v240 = vlaneseq
  %v241 = vshrl.u32 %v240, 7
  %v242 = vsub.s32 1, %v241
  %v243 = vrot.slane %v228, %v242
  %v244 = vlaneseq
  %v245 = vshrl.u32 %v244, 7
  %v246 = vsub.s32 1, %v245
  %v247 = vrot.slane %v232, %v246
  %v248 = vlaneseq
  %v249 = vshrl.u32 %v248, 7
  %v250 = vsub.s32 1, %v249
  %v251 = vrot.slane %v236, %v250
  %v252 = vmul.f32 %v219, %v243
  %v253 = vmul.f32 %v219, %v247
  %v254 = vmul.f32 %v219, %v251
  %v255 = vmul.f32 %v223, %v243
  %v256 = vmul.f32 %v223, %v247
  %v257 = vmul.f32 %v223, %v251
  %264 = vrot.lane.b32.xlu0 %v252, 127
  %v265 = vpop.permute.xlu0 %264
  %266 = vrot.lane.b32.xlu0 %v253, 127
  %v267 = vpop.permute.xlu0 %266
  %268 = vrot.lane.b32.xlu0 %v254, 127
  %v269 = vpop.permute.xlu0 %268
  %270 = vrot.lane.b32.xlu0 %v255, 127
  %v271 = vpop.permute.xlu0 %270
  %272 = vrot.lane.b32.xlu0 %v256, 127
  %v273 = vpop.permute.xlu0 %272
  %274 = vrot.lane.b32.xlu0 %v257, 127
  %v275 = vpop.permute.xlu0 %274
  %v276 = vsel %vm204, %v265, %v267
  %v277 = vsel %vm204, %v267, %v269
  %v278 = vsel %vm204, %v271, %v273
  %v279 = vsel %vm204, %v273, %v275
  %v284 = vadd.f32 %v213, %v276
  %v285 = vadd.f32 %v214, %v277
  %v286 = vadd.f32 %v215, %v278
  %v287 = vadd.f32 %v216, %v279
  %288 = vset.pattern.permute.xlu0 5
  %289 = vperm.xlu0 %288, %v20
  %v290 = vpop.permute.xlu0 %289
  %292 = vset.pattern.permute.xlu0 5
  %293 = vperm.xlu0 %292, %v21
  %v294 = vpop.permute.xlu0 %293
  %v296 = vlaneseq
  %v297 = vshrl.u32 %v296, 7
  %v298 = vsub.s32 2, %v297
  %v299 = vrot.slane %v141, %v298
  %v300 = vlaneseq
  %v301 = vshrl.u32 %v300, 7
  %v302 = vsub.s32 6, %v301
  %v303 = vrot.slane %v141, %v302
  %v304 = vlaneseq
  %v305 = vshrl.u32 %v304, 7
  %v306 = vsub.s32 2, %v305
  %v307 = vrot.slane %v142, %v306
  %v311 = vlaneseq
  %v312 = vshrl.u32 %v311, 7
  %v313 = vsub.s32 2, %v312
  %v314 = vrot.slane %v299, %v313
  %v315 = vlaneseq
  %v316 = vshrl.u32 %v315, 7
  %v317 = vsub.s32 2, %v316
  %v318 = vrot.slane %v303, %v317
  %v319 = vlaneseq
  %v320 = vshrl.u32 %v319, 7
  %v321 = vsub.s32 2, %v320
  %v322 = vrot.slane %v307, %v321
  %v323 = vmul.f32 %v290, %v314
  %v324 = vmul.f32 %v290, %v318
  %v325 = vmul.f32 %v290, %v322
  %v326 = vmul.f32 %v294, %v314
  %v327 = vmul.f32 %v294, %v318
  %v328 = vmul.f32 %v294, %v322
  %335 = vrot.lane.b32.xlu0 %v323, 127
  %v336 = vpop.permute.xlu0 %335
  %337 = vrot.lane.b32.xlu0 %v324, 127
  %v338 = vpop.permute.xlu0 %337
  %339 = vrot.lane.b32.xlu0 %v325, 127
  %v340 = vpop.permute.xlu0 %339
  %341 = vrot.lane.b32.xlu0 %v326, 127
  %v342 = vpop.permute.xlu0 %341
  %343 = vrot.lane.b32.xlu0 %v327, 127
  %v344 = vpop.permute.xlu0 %343
  %345 = vrot.lane.b32.xlu0 %v328, 127
  %v346 = vpop.permute.xlu0 %345
  %v347 = vsel %vm204, %v336, %v338
  %v348 = vsel %vm204, %v338, %v340
  %v349 = vsel %vm204, %v342, %v344
  %v350 = vsel %vm204, %v344, %v346
  %v355 = vadd.f32 %v284, %v347
  %v356 = vadd.f32 %v285, %v348
  %v357 = vadd.f32 %v286, %v349
  %v358 = vadd.f32 %v287, %v350
  %s359 = scalar_lea.vmem %s2, 2
  %v360 = vld [vmem:[%s359] ss:$4 sm:$0x3]
  %v362 = vlaneseq
  %v363 = vshrl.u32 %v362, 7
  %v364 = vsub.s32 0, %v363
  %v365 = vrot.slane %v360, %v364
  %v366 = vlaneseq
  %v367 = vshrl.u32 %v366, 7
  %v368 = vsub.s32 1, %v367
  %v369 = vrot.slane %v360, %v368
  %v370 = vcombine.low %v365, %v369
  %371 = vrot.lane.b32.xlu0 %v370, 2
  %v372 = vpop.permute.xlu0 %371
  %v373 = vrot.slane %v372, 4
  %vm374 = vcmask 15360
  %v375 = vsel %vm374, %v373, %v372
  %v378 = vmul.f32 %v141, %v375
  %v379 = vmul.f32 %v142, %v373
  %380 = vset.pattern.permute.xlu0 6
  %381 = vperm.xlu0 %380, %v20
  %v382 = vpop.permute.xlu0 %381
  %384 = vset.pattern.permute.xlu0 6
  %385 = vperm.xlu0 %384, %v21
  %v386 = vpop.permute.xlu0 %385
  %v390 = vlaneseq
  %v391 = vshrl.u32 %v390, 7
  %v392 = vsub.s32 0, %v391
  %v393 = vrot.slane %v378, %v392
  %v394 = vlaneseq
  %v395 = vshrl.u32 %v394, 7
  %v396 = vsub.s32 4, %v395
  %v397 = vrot.slane %v378, %v396
  %v398 = vlaneseq
  %v399 = vshrl.u32 %v398, 7
  %v400 = vsub.s32 0, %v399
  %v401 = vrot.slane %v379, %v400
  %v405 = vlaneseq
  %v406 = vshrl.u32 %v405, 7
  %v407 = vsub.s32 0, %v406
  %v408 = vrot.slane %v393, %v407
  %v409 = vlaneseq
  %v410 = vshrl.u32 %v409, 7
  %v411 = vsub.s32 0, %v410
  %v412 = vrot.slane %v397, %v411
  %v413 = vlaneseq
  %v414 = vshrl.u32 %v413, 7
  %v415 = vsub.s32 0, %v414
  %v416 = vrot.slane %v401, %v415
  %v417 = vmul.f32 %v382, %v408
  %v418 = vmul.f32 %v382, %v412
  %v419 = vmul.f32 %v382, %v416
  %v420 = vmul.f32 %v386, %v408
  %v421 = vmul.f32 %v386, %v412
  %v422 = vmul.f32 %v386, %v416
  %429 = vrot.lane.b32.xlu0 %v417, 126
  %v430 = vpop.permute.xlu0 %429
  %431 = vrot.lane.b32.xlu0 %v418, 126
  %v432 = vpop.permute.xlu0 %431
  %433 = vrot.lane.b32.xlu0 %v419, 126
  %v434 = vpop.permute.xlu0 %433
  %435 = vrot.lane.b32.xlu0 %v420, 126
  %v436 = vpop.permute.xlu0 %435
  %437 = vrot.lane.b32.xlu0 %v421, 126
  %v438 = vpop.permute.xlu0 %437
  %439 = vrot.lane.b32.xlu0 %v422, 126
  %v440 = vpop.permute.xlu0 %439
  %vm441 = vcmask 1031168
  %v442 = vsel %vm441, %v430, %v432
  %v443 = vsel %vm441, %v432, %v434
  %v444 = vsel %vm441, %v436, %v438
  %v445 = vsel %vm441, %v438, %v440
  %v450 = vadd.f32 %v355, %v442
  %v451 = vadd.f32 %v356, %v443
  %v452 = vadd.f32 %v357, %v444
  %v453 = vadd.f32 %v358, %v445
  %454 = vset.pattern.permute.xlu0 7
  %455 = vperm.xlu0 %454, %v20
  %v456 = vpop.permute.xlu0 %455
  %458 = vset.pattern.permute.xlu0 7
  %459 = vperm.xlu0 %458, %v21
  %v460 = vpop.permute.xlu0 %459
  %v462 = vlaneseq
  %v463 = vshrl.u32 %v462, 7
  %v464 = vsub.s32 1, %v463
  %v465 = vrot.slane %v378, %v464
  %v466 = vlaneseq
  %v467 = vshrl.u32 %v466, 7
  %v468 = vsub.s32 5, %v467
  %v469 = vrot.slane %v378, %v468
  %v470 = vlaneseq
  %v471 = vshrl.u32 %v470, 7
  %v472 = vsub.s32 1, %v471
  %v473 = vrot.slane %v379, %v472
  %v477 = vlaneseq
  %v478 = vshrl.u32 %v477, 7
  %v479 = vsub.s32 1, %v478
  %v480 = vrot.slane %v465, %v479
  %v481 = vlaneseq
  %v482 = vshrl.u32 %v481, 7
  %v483 = vsub.s32 1, %v482
  %v484 = vrot.slane %v469, %v483
  %v485 = vlaneseq
  %v486 = vshrl.u32 %v485, 7
  %v487 = vsub.s32 1, %v486
  %v488 = vrot.slane %v473, %v487
  %v489 = vmul.f32 %v456, %v480
  %v490 = vmul.f32 %v456, %v484
  %v491 = vmul.f32 %v456, %v488
  %v492 = vmul.f32 %v460, %v480
  %v493 = vmul.f32 %v460, %v484
  %v494 = vmul.f32 %v460, %v488
  %501 = vrot.lane.b32.xlu0 %v489, 126
  %v502 = vpop.permute.xlu0 %501
  %503 = vrot.lane.b32.xlu0 %v490, 126
  %v504 = vpop.permute.xlu0 %503
  %505 = vrot.lane.b32.xlu0 %v491, 126
  %v506 = vpop.permute.xlu0 %505
  %507 = vrot.lane.b32.xlu0 %v492, 126
  %v508 = vpop.permute.xlu0 %507
  %509 = vrot.lane.b32.xlu0 %v493, 126
  %v510 = vpop.permute.xlu0 %509
  %511 = vrot.lane.b32.xlu0 %v494, 126
  %v512 = vpop.permute.xlu0 %511
  %v513 = vsel %vm441, %v502, %v504
  %v514 = vsel %vm441, %v504, %v506
  %v515 = vsel %vm441, %v508, %v510
  %v516 = vsel %vm441, %v510, %v512
  %v521 = vadd.f32 %v450, %v513
  %v522 = vadd.f32 %v451, %v514
  %v523 = vadd.f32 %v452, %v515
  %v524 = vadd.f32 %v453, %v516
  %525 = vset.pattern.permute.xlu0 8
  %526 = vperm.xlu0 %525, %v20
  %v527 = vpop.permute.xlu0 %526
  %529 = vset.pattern.permute.xlu0 8
  %530 = vperm.xlu0 %529, %v21
  %v531 = vpop.permute.xlu0 %530
  %v533 = vlaneseq
  %v534 = vshrl.u32 %v533, 7
  %v535 = vsub.s32 2, %v534
  %v536 = vrot.slane %v378, %v535
  %v537 = vlaneseq
  %v538 = vshrl.u32 %v537, 7
  %v539 = vsub.s32 6, %v538
  %v540 = vrot.slane %v378, %v539
  %v541 = vlaneseq
  %v542 = vshrl.u32 %v541, 7
  %v543 = vsub.s32 2, %v542
  %v544 = vrot.slane %v379, %v543
  %v548 = vlaneseq
  %v549 = vshrl.u32 %v548, 7
  %v550 = vsub.s32 2, %v549
  %v551 = vrot.slane %v536, %v550
  %v552 = vlaneseq
  %v553 = vshrl.u32 %v552, 7
  %v554 = vsub.s32 2, %v553
  %v555 = vrot.slane %v540, %v554
  %v556 = vlaneseq
  %v557 = vshrl.u32 %v556, 7
  %v558 = vsub.s32 2, %v557
  %v559 = vrot.slane %v544, %v558
  %v560 = vmul.f32 %v527, %v551
  %v561 = vmul.f32 %v527, %v555
  %v562 = vmul.f32 %v527, %v559
  %v563 = vmul.f32 %v531, %v551
  %v564 = vmul.f32 %v531, %v555
  %v565 = vmul.f32 %v531, %v559
  %572 = vrot.lane.b32.xlu0 %v560, 126
  %v573 = vpop.permute.xlu0 %572
  %574 = vrot.lane.b32.xlu0 %v561, 126
  %v575 = vpop.permute.xlu0 %574
  %576 = vrot.lane.b32.xlu0 %v562, 126
  %v577 = vpop.permute.xlu0 %576
  %578 = vrot.lane.b32.xlu0 %v563, 126
  %v579 = vpop.permute.xlu0 %578
  %580 = vrot.lane.b32.xlu0 %v564, 126
  %v581 = vpop.permute.xlu0 %580
  %582 = vrot.lane.b32.xlu0 %v565, 126
  %v583 = vpop.permute.xlu0 %582
  %v584 = vsel %vm441, %v573, %v575
  %v585 = vsel %vm441, %v575, %v577
  %v586 = vsel %vm441, %v579, %v581
  %v587 = vsel %vm441, %v581, %v583
  %v592 = vadd.f32 %v521, %v584
  %v593 = vadd.f32 %v522, %v585
  %v594 = vadd.f32 %v523, %v586
  %v595 = vadd.f32 %v524, %v587
  %v596 = vld [vmem:[%s0] sm:$0x77]
  %v597 = vld [vmem:[%s0 + $0x8] sm:$0x7]
  %598 = vrot.lane.b32.xlu0 %v33, 16
  %v599 = vpop.permute.xlu0 %598
  %v600 = vrot.slane %v599, 4
  %vm601 = vcmask 130048
  %v602 = vsel %vm601, %v600, %v599
  %v605 = vmul.f32 %v596, %v602
  %v606 = vmul.f32 %v597, %v600
  %607 = vset.pattern.permute.xlu0 9
  %608 = vperm.xlu0 %607, %v20
  %v609 = vpop.permute.xlu0 %608
  %611 = vset.pattern.permute.xlu0 9
  %612 = vperm.xlu0 %611, %v21
  %v613 = vpop.permute.xlu0 %612
  %v617 = vlaneseq
  %v618 = vshrl.u32 %v617, 7
  %v619 = vsub.s32 0, %v618
  %v620 = vrot.slane %v605, %v619
  %v621 = vlaneseq
  %v622 = vshrl.u32 %v621, 7
  %v623 = vsub.s32 4, %v622
  %v624 = vrot.slane %v605, %v623
  %v625 = vlaneseq
  %v626 = vshrl.u32 %v625, 7
  %v627 = vsub.s32 0, %v626
  %v628 = vrot.slane %v606, %v627
  %v632 = vlaneseq
  %v633 = vshrl.u32 %v632, 7
  %v634 = vsub.s32 0, %v633
  %v635 = vrot.slane %v620, %v634
  %v636 = vlaneseq
  %v637 = vshrl.u32 %v636, 7
  %v638 = vsub.s32 0, %v637
  %v639 = vrot.slane %v624, %v638
  %v640 = vlaneseq
  %v641 = vshrl.u32 %v640, 7
  %v642 = vsub.s32 0, %v641
  %v643 = vrot.slane %v628, %v642
  %v644 = vmul.f32 %v609, %v635
  %v645 = vmul.f32 %v609, %v639
  %v646 = vmul.f32 %v609, %v643
  %v647 = vmul.f32 %v613, %v635
  %v648 = vmul.f32 %v613, %v639
  %v649 = vmul.f32 %v613, %v643
  %656 = vrot.lane.b32.xlu0 %v644, 112
  %v657 = vpop.permute.xlu0 %656
  %658 = vrot.lane.b32.xlu0 %v645, 112
  %v659 = vpop.permute.xlu0 %658
  %660 = vrot.lane.b32.xlu0 %v646, 112
  %v661 = vpop.permute.xlu0 %660
  %662 = vrot.lane.b32.xlu0 %v647, 112
  %v663 = vpop.permute.xlu0 %662
  %664 = vrot.lane.b32.xlu0 %v648, 112
  %v665 = vpop.permute.xlu0 %664
  %666 = vrot.lane.b32.xlu0 %v649, 112
  %v667 = vpop.permute.xlu0 %666
  %vm668 = vcmask 916480
  %v669 = vsel %vm668, %v657, %v659
  %v670 = vsel %vm668, %v659, %v661
  %v671 = vsel %vm668, %v663, %v665
  %v672 = vsel %vm668, %v665, %v667
  %v677 = vadd.f32 %v592, %v669
  %v678 = vadd.f32 %v593, %v670
  %v679 = vadd.f32 %v594, %v671
  %v680 = vadd.f32 %v595, %v672
  %681 = vset.pattern.permute.xlu0 10
  %682 = vperm.xlu0 %681, %v20
  %v683 = vpop.permute.xlu0 %682
  %685 = vset.pattern.permute.xlu0 10
  %686 = vperm.xlu0 %685, %v21
  %v687 = vpop.permute.xlu0 %686
  %v689 = vlaneseq
  %v690 = vshrl.u32 %v689, 7
  %v691 = vsub.s32 1, %v690
  %v692 = vrot.slane %v605, %v691
  %v693 = vlaneseq
  %v694 = vshrl.u32 %v693, 7
  %v695 = vsub.s32 5, %v694
  %v696 = vrot.slane %v605, %v695
  %v697 = vlaneseq
  %v698 = vshrl.u32 %v697, 7
  %v699 = vsub.s32 1, %v698
  %v700 = vrot.slane %v606, %v699
  %v704 = vlaneseq
  %v705 = vshrl.u32 %v704, 7
  %v706 = vsub.s32 1, %v705
  %v707 = vrot.slane %v692, %v706
  %v708 = vlaneseq
  %v709 = vshrl.u32 %v708, 7
  %v710 = vsub.s32 1, %v709
  %v711 = vrot.slane %v696, %v710
  %v712 = vlaneseq
  %v713 = vshrl.u32 %v712, 7
  %v714 = vsub.s32 1, %v713
  %v715 = vrot.slane %v700, %v714
  %v716 = vmul.f32 %v683, %v707
  %v717 = vmul.f32 %v683, %v711
  %v718 = vmul.f32 %v683, %v715
  %v719 = vmul.f32 %v687, %v707
  %v720 = vmul.f32 %v687, %v711
  %v721 = vmul.f32 %v687, %v715
  %728 = vrot.lane.b32.xlu0 %v716, 112
  %v729 = vpop.permute.xlu0 %728
  %730 = vrot.lane.b32.xlu0 %v717, 112
  %v731 = vpop.permute.xlu0 %730
  %732 = vrot.lane.b32.xlu0 %v718, 112
  %v733 = vpop.permute.xlu0 %732
  %734 = vrot.lane.b32.xlu0 %v719, 112
  %v735 = vpop.permute.xlu0 %734
  %736 = vrot.lane.b32.xlu0 %v720, 112
  %v737 = vpop.permute.xlu0 %736
  %738 = vrot.lane.b32.xlu0 %v721, 112
  %v739 = vpop.permute.xlu0 %738
  %v740 = vsel %vm668, %v729, %v731
  %v741 = vsel %vm668, %v731, %v733
  %v742 = vsel %vm668, %v735, %v737
  %v743 = vsel %vm668, %v737, %v739
  %v748 = vadd.f32 %v677, %v740
  %v749 = vadd.f32 %v678, %v741
  %v750 = vadd.f32 %v679, %v742
  %v751 = vadd.f32 %v680, %v743
  %752 = vset.pattern.permute.xlu0 11
  %753 = vperm.xlu0 %752, %v20
  %v754 = vpop.permute.xlu0 %753
  %756 = vset.pattern.permute.xlu0 11
  %757 = vperm.xlu0 %756, %v21
  %v758 = vpop.permute.xlu0 %757
  %v760 = vlaneseq
  %v761 = vshrl.u32 %v760, 7
  %v762 = vsub.s32 2, %v761
  %v763 = vrot.slane %v605, %v762
  %v764 = vlaneseq
  %v765 = vshrl.u32 %v764, 7
  %v766 = vsub.s32 6, %v765
  %v767 = vrot.slane %v605, %v766
  %v768 = vlaneseq
  %v769 = vshrl.u32 %v768, 7
  %v770 = vsub.s32 2, %v769
  %v771 = vrot.slane %v606, %v770
  %v775 = vlaneseq
  %v776 = vshrl.u32 %v775, 7
  %v777 = vsub.s32 2, %v776
  %v778 = vrot.slane %v763, %v777
  %v779 = vlaneseq
  %v780 = vshrl.u32 %v779, 7
  %v781 = vsub.s32 2, %v780
  %v782 = vrot.slane %v767, %v781
  %v783 = vlaneseq
  %v784 = vshrl.u32 %v783, 7
  %v785 = vsub.s32 2, %v784
  %v786 = vrot.slane %v771, %v785
  %v787 = vmul.f32 %v754, %v778
  %v788 = vmul.f32 %v754, %v782
  %v789 = vmul.f32 %v754, %v786
  %v790 = vmul.f32 %v758, %v778
  %v791 = vmul.f32 %v758, %v782
  %v792 = vmul.f32 %v758, %v786
  %799 = vrot.lane.b32.xlu0 %v787, 112
  %v800 = vpop.permute.xlu0 %799
  %801 = vrot.lane.b32.xlu0 %v788, 112
  %v802 = vpop.permute.xlu0 %801
  %803 = vrot.lane.b32.xlu0 %v789, 112
  %v804 = vpop.permute.xlu0 %803
  %805 = vrot.lane.b32.xlu0 %v790, 112
  %v806 = vpop.permute.xlu0 %805
  %807 = vrot.lane.b32.xlu0 %v791, 112
  %v808 = vpop.permute.xlu0 %807
  %809 = vrot.lane.b32.xlu0 %v792, 112
  %v810 = vpop.permute.xlu0 %809
  %v811 = vsel %vm668, %v800, %v802
  %v812 = vsel %vm668, %v802, %v804
  %v813 = vsel %vm668, %v806, %v808
  %v814 = vsel %vm668, %v808, %v810
  %v819 = vadd.f32 %v748, %v811
  %v820 = vadd.f32 %v749, %v812
  %v821 = vadd.f32 %v750, %v813
  %v822 = vadd.f32 %v751, %v814
  %v823 = vld [vmem:[%s0] sm:$0x77]
  %v824 = vld [vmem:[%s0 + $0x8] sm:$0x7]
  %825 = vset.pattern.permute.xlu0 12
  %826 = vperm.xlu0 %825, %v20
  %v827 = vpop.permute.xlu0 %826
  %829 = vset.pattern.permute.xlu0 12
  %830 = vperm.xlu0 %829, %v21
  %v831 = vpop.permute.xlu0 %830
  %v835 = vlaneseq
  %v836 = vshrl.u32 %v835, 7
  %v837 = vsub.s32 0, %v836
  %v838 = vrot.slane %v823, %v837
  %v839 = vlaneseq
  %v840 = vshrl.u32 %v839, 7
  %v841 = vsub.s32 4, %v840
  %v842 = vrot.slane %v823, %v841
  %v843 = vlaneseq
  %v844 = vshrl.u32 %v843, 7
  %v845 = vsub.s32 0, %v844
  %v846 = vrot.slane %v824, %v845
  %v850 = vlaneseq
  %v851 = vshrl.u32 %v850, 7
  %v852 = vsub.s32 0, %v851
  %v853 = vrot.slane %v838, %v852
  %v854 = vlaneseq
  %v855 = vshrl.u32 %v854, 7
  %v856 = vsub.s32 0, %v855
  %v857 = vrot.slane %v842, %v856
  %v858 = vlaneseq
  %v859 = vshrl.u32 %v858, 7
  %v860 = vsub.s32 0, %v859
  %v861 = vrot.slane %v846, %v860
  %v862 = vmul.f32 %v827, %v853
  %v863 = vmul.f32 %v827, %v857
  %v864 = vmul.f32 %v827, %v861
  %v865 = vmul.f32 %v831, %v853
  %v866 = vmul.f32 %v831, %v857
  %v867 = vmul.f32 %v831, %v861
  %874 = vrot.lane.b32.xlu0 %v862, 111
  %v875 = vpop.permute.xlu0 %874
  %876 = vrot.lane.b32.xlu0 %v863, 111
  %v877 = vpop.permute.xlu0 %876
  %878 = vrot.lane.b32.xlu0 %v864, 111
  %v879 = vpop.permute.xlu0 %878
  %880 = vrot.lane.b32.xlu0 %v865, 111
  %v881 = vpop.permute.xlu0 %880
  %882 = vrot.lane.b32.xlu0 %v866, 111
  %v883 = vpop.permute.xlu0 %882
  %884 = vrot.lane.b32.xlu0 %v867, 111
  %v885 = vpop.permute.xlu0 %884
  %vm886 = vcmask 908288
  %v887 = vsel %vm886, %v875, %v877
  %v888 = vsel %vm886, %v877, %v879
  %v889 = vsel %vm886, %v881, %v883
  %v890 = vsel %vm886, %v883, %v885
  %v895 = vadd.f32 %v819, %v887
  %v896 = vadd.f32 %v820, %v888
  %v897 = vadd.f32 %v821, %v889
  %v898 = vadd.f32 %v822, %v890
  %899 = vset.pattern.permute.xlu0 13
  %900 = vperm.xlu0 %899, %v20
  %v901 = vpop.permute.xlu0 %900
  %903 = vset.pattern.permute.xlu0 13
  %904 = vperm.xlu0 %903, %v21
  %v905 = vpop.permute.xlu0 %904
  %v907 = vlaneseq
  %v908 = vshrl.u32 %v907, 7
  %v909 = vsub.s32 1, %v908
  %v910 = vrot.slane %v823, %v909
  %v911 = vlaneseq
  %v912 = vshrl.u32 %v911, 7
  %v913 = vsub.s32 5, %v912
  %v914 = vrot.slane %v823, %v913
  %v915 = vlaneseq
  %v916 = vshrl.u32 %v915, 7
  %v917 = vsub.s32 1, %v916
  %v918 = vrot.slane %v824, %v917
  %v922 = vlaneseq
  %v923 = vshrl.u32 %v922, 7
  %v924 = vsub.s32 1, %v923
  %v925 = vrot.slane %v910, %v924
  %v926 = vlaneseq
  %v927 = vshrl.u32 %v926, 7
  %v928 = vsub.s32 1, %v927
  %v929 = vrot.slane %v914, %v928
  %v930 = vlaneseq
  %v931 = vshrl.u32 %v930, 7
  %v932 = vsub.s32 1, %v931
  %v933 = vrot.slane %v918, %v932
  %v934 = vmul.f32 %v901, %v925
  %v935 = vmul.f32 %v901, %v929
  %v936 = vmul.f32 %v901, %v933
  %v937 = vmul.f32 %v905, %v925
  %v938 = vmul.f32 %v905, %v929
  %v939 = vmul.f32 %v905, %v933
  %946 = vrot.lane.b32.xlu0 %v934, 111
  %v947 = vpop.permute.xlu0 %946
  %948 = vrot.lane.b32.xlu0 %v935, 111
  %v949 = vpop.permute.xlu0 %948
  %950 = vrot.lane.b32.xlu0 %v936, 111
  %v951 = vpop.permute.xlu0 %950
  %952 = vrot.lane.b32.xlu0 %v937, 111
  %v953 = vpop.permute.xlu0 %952
  %954 = vrot.lane.b32.xlu0 %v938, 111
  %v955 = vpop.permute.xlu0 %954
  %956 = vrot.lane.b32.xlu0 %v939, 111
  %v957 = vpop.permute.xlu0 %956
  %v958 = vsel %vm886, %v947, %v949
  %v959 = vsel %vm886, %v949, %v951
  %v960 = vsel %vm886, %v953, %v955
  %v961 = vsel %vm886, %v955, %v957
  %v966 = vadd.f32 %v895, %v958
  %v967 = vadd.f32 %v896, %v959
  %v968 = vadd.f32 %v897, %v960
  %v969 = vadd.f32 %v898, %v961
  %970 = vset.pattern.permute.xlu0 14
  %971 = vperm.xlu0 %970, %v20
  %v972 = vpop.permute.xlu0 %971
  %974 = vset.pattern.permute.xlu0 14
  %975 = vperm.xlu0 %974, %v21
  %v976 = vpop.permute.xlu0 %975
  %v978 = vlaneseq
  %v979 = vshrl.u32 %v978, 7
  %v980 = vsub.s32 2, %v979
  %v981 = vrot.slane %v823, %v980
  %v982 = vlaneseq
  %v983 = vshrl.u32 %v982, 7
  %v984 = vsub.s32 6, %v983
  %v985 = vrot.slane %v823, %v984
  %v986 = vlaneseq
  %v987 = vshrl.u32 %v986, 7
  %v988 = vsub.s32 2, %v987
  %v989 = vrot.slane %v824, %v988
  %v993 = vlaneseq
  %v994 = vshrl.u32 %v993, 7
  %v995 = vsub.s32 2, %v994
  %v996 = vrot.slane %v981, %v995
  %v997 = vlaneseq
  %v998 = vshrl.u32 %v997, 7
  %v999 = vsub.s32 2, %v998
  %v1000 = vrot.slane %v985, %v999
  %v1001 = vlaneseq
  %v1002 = vshrl.u32 %v1001, 7
  %v1003 = vsub.s32 2, %v1002
  %v1004 = vrot.slane %v989, %v1003
  %v1005 = vmul.f32 %v972, %v996
  %v1006 = vmul.f32 %v972, %v1000
  %v1007 = vmul.f32 %v972, %v1004
  %v1008 = vmul.f32 %v976, %v996
  %v1009 = vmul.f32 %v976, %v1000
  %v1010 = vmul.f32 %v976, %v1004
  %1017 = vrot.lane.b32.xlu0 %v1005, 111
  %v1018 = vpop.permute.xlu0 %1017
  %1019 = vrot.lane.b32.xlu0 %v1006, 111
  %v1020 = vpop.permute.xlu0 %1019
  %1021 = vrot.lane.b32.xlu0 %v1007, 111
  %v1022 = vpop.permute.xlu0 %1021
  %1023 = vrot.lane.b32.xlu0 %v1008, 111
  %v1024 = vpop.permute.xlu0 %1023
  %1025 = vrot.lane.b32.xlu0 %v1009, 111
  %v1026 = vpop.permute.xlu0 %1025
  %1027 = vrot.lane.b32.xlu0 %v1010, 111
  %v1028 = vpop.permute.xlu0 %1027
  %v1029 = vsel %vm886, %v1018, %v1020
  %v1030 = vsel %vm886, %v1020, %v1022
  %v1031 = vsel %vm886, %v1024, %v1026
  %v1032 = vsel %vm886, %v1026, %v1028
  %v1037 = vadd.f32 %v966, %v1029
  %v1038 = vadd.f32 %v967, %v1030
  %v1039 = vadd.f32 %v968, %v1031
  %v1040 = vadd.f32 %v969, %v1032
  %1041 = vrot.lane.b32.xlu0 %v370, 18
  %v1042 = vpop.permute.xlu0 %1041
  %v1043 = vrot.slane %v1042, 4
  %vm1044 = vcmask 146432
  %v1045 = vsel %vm1044, %v1043, %v1042
  %v1048 = vmul.f32 %v823, %v1045
  %v1049 = vmul.f32 %v824, %v1043
  %1050 = vset.pattern.permute.xlu0 15
  %1051 = vperm.xlu0 %1050, %v20
  %v1052 = vpop.permute.xlu0 %1051
  %1054 = vset.pattern.permute.xlu0 15
  %1055 = vperm.xlu0 %1054, %v21
  %v1056 = vpop.permute.xlu0 %1055
  %v1060 = vlaneseq
  %v1061 = vshrl.u32 %v1060, 7
  %v1062 = vsub.s32 0, %v1061
  %v1063 = vrot.slane %v1048, %v1062
  %v1064 = vlaneseq
  %v1065 = vshrl.u32 %v1064, 7
  %v1066 = vsub.s32 4, %v1065
  %v1067 = vrot.slane %v1048, %v1066
  %v1068 = vlaneseq
  %v1069 = vshrl.u32 %v1068, 7
  %v1070 = vsub.s32 0, %v1069
  %v1071 = vrot.slane %v1049, %v1070
  %v1075 = vlaneseq
  %v1076 = vshrl.u32 %v1075, 7
  %v1077 = vsub.s32 0, %v1076
  %v1078 = vrot.slane %v1063, %v1077
  %v1079 = vlaneseq
  %v1080 = vshrl.u32 %v1079, 7
  %v1081 = vsub.s32 0, %v1080
  %v1082 = vrot.slane %v1067, %v1081
  %v1083 = vlaneseq
  %v1084 = vshrl.u32 %v1083, 7
  %v1085 = vsub.s32 0, %v1084
  %v1086 = vrot.slane %v1071, %v1085
  %v1087 = vmul.f32 %v1052, %v1078
  %v1088 = vmul.f32 %v1052, %v1082
  %v1089 = vmul.f32 %v1052, %v1086
  %v1090 = vmul.f32 %v1056, %v1078
  %v1091 = vmul.f32 %v1056, %v1082
  %v1092 = vmul.f32 %v1056, %v1086
  %1099 = vrot.lane.b32.xlu0 %v1087, 110
  %v1100 = vpop.permute.xlu0 %1099
  %1101 = vrot.lane.b32.xlu0 %v1088, 110
  %v1102 = vpop.permute.xlu0 %1101
  %1103 = vrot.lane.b32.xlu0 %v1089, 110
  %v1104 = vpop.permute.xlu0 %1103
  %1105 = vrot.lane.b32.xlu0 %v1090, 110
  %v1106 = vpop.permute.xlu0 %1105
  %1107 = vrot.lane.b32.xlu0 %v1091, 110
  %v1108 = vpop.permute.xlu0 %1107
  %1109 = vrot.lane.b32.xlu0 %v1092, 110
  %v1110 = vpop.permute.xlu0 %1109
  %vm1111 = vcmask 900096
  %v1112 = vsel %vm1111, %v1100, %v1102
  %v1113 = vsel %vm1111, %v1102, %v1104
  %v1114 = vsel %vm1111, %v1106, %v1108
  %v1115 = vsel %vm1111, %v1108, %v1110
  %v1120 = vadd.f32 %v1037, %v1112
  %v1121 = vadd.f32 %v1038, %v1113
  %v1122 = vadd.f32 %v1039, %v1114
  %v1123 = vadd.f32 %v1040, %v1115
  %1124 = vset.pattern.permute.xlu0 16
  %1125 = vperm.xlu0 %1124, %v20
  %v1126 = vpop.permute.xlu0 %1125
  %1128 = vset.pattern.permute.xlu0 16
  %1129 = vperm.xlu0 %1128, %v21
  %v1130 = vpop.permute.xlu0 %1129
  %v1132 = vlaneseq
  %v1133 = vshrl.u32 %v1132, 7
  %v1134 = vsub.s32 1, %v1133
  %v1135 = vrot.slane %v1048, %v1134
  %v1136 = vlaneseq
  %v1137 = vshrl.u32 %v1136, 7
  %v1138 = vsub.s32 5, %v1137
  %v1139 = vrot.slane %v1048, %v1138
  %v1140 = vlaneseq
  %v1141 = vshrl.u32 %v1140, 7
  %v1142 = vsub.s32 1, %v1141
  %v1143 = vrot.slane %v1049, %v1142
  %v1147 = vlaneseq
  %v1148 = vshrl.u32 %v1147, 7
  %v1149 = vsub.s32 1, %v1148
  %v1150 = vrot.slane %v1135, %v1149
  %v1151 = vlaneseq
  %v1152 = vshrl.u32 %v1151, 7
  %v1153 = vsub.s32 1, %v1152
  %v1154 = vrot.slane %v1139, %v1153
  %v1155 = vlaneseq
  %v1156 = vshrl.u32 %v1155, 7
  %v1157 = vsub.s32 1, %v1156
  %v1158 = vrot.slane %v1143, %v1157
  %v1159 = vmul.f32 %v1126, %v1150
  %v1160 = vmul.f32 %v1126, %v1154
  %v1161 = vmul.f32 %v1126, %v1158
  %v1162 = vmul.f32 %v1130, %v1150
  %v1163 = vmul.f32 %v1130, %v1154
  %v1164 = vmul.f32 %v1130, %v1158
  %1171 = vrot.lane.b32.xlu0 %v1159, 110
  %v1172 = vpop.permute.xlu0 %1171
  %1173 = vrot.lane.b32.xlu0 %v1160, 110
  %v1174 = vpop.permute.xlu0 %1173
  %1175 = vrot.lane.b32.xlu0 %v1161, 110
  %v1176 = vpop.permute.xlu0 %1175
  %1177 = vrot.lane.b32.xlu0 %v1162, 110
  %v1178 = vpop.permute.xlu0 %1177
  %1179 = vrot.lane.b32.xlu0 %v1163, 110
  %v1180 = vpop.permute.xlu0 %1179
  %1181 = vrot.lane.b32.xlu0 %v1164, 110
  %v1182 = vpop.permute.xlu0 %1181
  %v1183 = vsel %vm1111, %v1172, %v1174
  %v1184 = vsel %vm1111, %v1174, %v1176
  %v1185 = vsel %vm1111, %v1178, %v1180
  %v1186 = vsel %vm1111, %v1180, %v1182
  %v1191 = vadd.f32 %v1120, %v1183
  %v1192 = vadd.f32 %v1121, %v1184
  %v1193 = vadd.f32 %v1122, %v1185
  %v1194 = vadd.f32 %v1123, %v1186
  %1195 = vset.pattern.permute.xlu0 17
  %1196 = vperm.xlu0 %1195, %v20
  %v1197 = vpop.permute.xlu0 %1196
  %1199 = vset.pattern.permute.xlu0 17
  %1200 = vperm.xlu0 %1199, %v21
  %v1201 = vpop.permute.xlu0 %1200
  %v1203 = vlaneseq
  %v1204 = vshrl.u32 %v1203, 7
  %v1205 = vsub.s32 2, %v1204
  %v1206 = vrot.slane %v1048, %v1205
  %v1207 = vlaneseq
  %v1208 = vshrl.u32 %v1207, 7
  %v1209 = vsub.s32 6, %v1208
  %v1210 = vrot.slane %v1048, %v1209
  %v1211 = vlaneseq
  %v1212 = vshrl.u32 %v1211, 7
  %v1213 = vsub.s32 2, %v1212
  %v1214 = vrot.slane %v1049, %v1213
  %v1218 = vlaneseq
  %v1219 = vshrl.u32 %v1218, 7
  %v1220 = vsub.s32 2, %v1219
  %v1221 = vrot.slane %v1206, %v1220
  %v1222 = vlaneseq
  %v1223 = vshrl.u32 %v1222, 7
  %v1224 = vsub.s32 2, %v1223
  %v1225 = vrot.slane %v1210, %v1224
  %v1226 = vlaneseq
  %v1227 = vshrl.u32 %v1226, 7
  %v1228 = vsub.s32 2, %v1227
  %v1229 = vrot.slane %v1214, %v1228
  %v1230 = vmul.f32 %v1197, %v1221
  %v1231 = vmul.f32 %v1197, %v1225
  %v1232 = vmul.f32 %v1197, %v1229
  %v1233 = vmul.f32 %v1201, %v1221
  %v1234 = vmul.f32 %v1201, %v1225
  %v1235 = vmul.f32 %v1201, %v1229
  %1242 = vrot.lane.b32.xlu0 %v1230, 110
  %v1243 = vpop.permute.xlu0 %1242
  %1244 = vrot.lane.b32.xlu0 %v1231, 110
  %v1245 = vpop.permute.xlu0 %1244
  %1246 = vrot.lane.b32.xlu0 %v1232, 110
  %v1247 = vpop.permute.xlu0 %1246
  %1248 = vrot.lane.b32.xlu0 %v1233, 110
  %v1249 = vpop.permute.xlu0 %1248
  %1250 = vrot.lane.b32.xlu0 %v1234, 110
  %v1251 = vpop.permute.xlu0 %1250
  %1252 = vrot.lane.b32.xlu0 %v1235, 110
  %v1253 = vpop.permute.xlu0 %1252
  %v1254 = vsel %vm1111, %v1243, %v1245
  %v1255 = vsel %vm1111, %v1245, %v1247
  %v1256 = vsel %vm1111, %v1249, %v1251
  %v1257 = vsel %vm1111, %v1251, %v1253
  %v1262 = vadd.f32 %v1191, %v1254
  %v1263 = vadd.f32 %v1192, %v1255
  %v1264 = vadd.f32 %v1193, %v1256
  %v1265 = vadd.f32 %v1194, %v1257
  %v1266 = vld [vmem:[%s0] sm:$0x77]
  %v1267 = vld [vmem:[%s0 + $0x8] sm:$0x7]
  %1268 = vrot.lane.b32.xlu0 %v33, 32
  %v1269 = vpop.permute.xlu0 %1268
  %v1270 = vrot.slane %v1269, 4
  %vm1271 = vcmask 261120
  %v1272 = vsel %vm1271, %v1270, %v1269
  %v1275 = vmul.f32 %v1266, %v1272
  %v1276 = vmul.f32 %v1267, %v1270
  %1277 = vset.pattern.permute.xlu0 18
  %1278 = vperm.xlu0 %1277, %v20
  %v1279 = vpop.permute.xlu0 %1278
  %1281 = vset.pattern.permute.xlu0 18
  %1282 = vperm.xlu0 %1281, %v21
  %v1283 = vpop.permute.xlu0 %1282
  %v1287 = vlaneseq
  %v1288 = vshrl.u32 %v1287, 7
  %v1289 = vsub.s32 0, %v1288
  %v1290 = vrot.slane %v1275, %v1289
  %v1291 = vlaneseq
  %v1292 = vshrl.u32 %v1291, 7
  %v1293 = vsub.s32 4, %v1292
  %v1294 = vrot.slane %v1275, %v1293
  %v1295 = vlaneseq
  %v1296 = vshrl.u32 %v1295, 7
  %v1297 = vsub.s32 0, %v1296
  %v1298 = vrot.slane %v1276, %v1297
  %v1302 = vlaneseq
  %v1303 = vshrl.u32 %v1302, 7
  %v1304 = vsub.s32 0, %v1303
  %v1305 = vrot.slane %v1290, %v1304
  %v1306 = vlaneseq
  %v1307 = vshrl.u32 %v1306, 7
  %v1308 = vsub.s32 0, %v1307
  %v1309 = vrot.slane %v1294, %v1308
  %v1310 = vlaneseq
  %v1311 = vshrl.u32 %v1310, 7
  %v1312 = vsub.s32 0, %v1311
  %v1313 = vrot.slane %v1298, %v1312
  %v1314 = vmul.f32 %v1279, %v1305
  %v1315 = vmul.f32 %v1279, %v1309
  %v1316 = vmul.f32 %v1279, %v1313
  %v1317 = vmul.f32 %v1283, %v1305
  %v1318 = vmul.f32 %v1283, %v1309
  %v1319 = vmul.f32 %v1283, %v1313
  %1326 = vrot.lane.b32.xlu0 %v1314, 96
  %v1327 = vpop.permute.xlu0 %1326
  %1328 = vrot.lane.b32.xlu0 %v1315, 96
  %v1329 = vpop.permute.xlu0 %1328
  %1330 = vrot.lane.b32.xlu0 %v1316, 96
  %v1331 = vpop.permute.xlu0 %1330
  %1332 = vrot.lane.b32.xlu0 %v1317, 96
  %v1333 = vpop.permute.xlu0 %1332
  %1334 = vrot.lane.b32.xlu0 %v1318, 96
  %v1335 = vpop.permute.xlu0 %1334
  %1336 = vrot.lane.b32.xlu0 %v1319, 96
  %v1337 = vpop.permute.xlu0 %1336
  %vm1338 = vcmask 785408
  %v1339 = vsel %vm1338, %v1327, %v1329
  %v1340 = vsel %vm1338, %v1329, %v1331
  %v1341 = vsel %vm1338, %v1333, %v1335
  %v1342 = vsel %vm1338, %v1335, %v1337
  %v1347 = vadd.f32 %v1262, %v1339
  %v1348 = vadd.f32 %v1263, %v1340
  %v1349 = vadd.f32 %v1264, %v1341
  %v1350 = vadd.f32 %v1265, %v1342
  %1351 = vset.pattern.permute.xlu0 19
  %1352 = vperm.xlu0 %1351, %v20
  %v1353 = vpop.permute.xlu0 %1352
  %1355 = vset.pattern.permute.xlu0 19
  %1356 = vperm.xlu0 %1355, %v21
  %v1357 = vpop.permute.xlu0 %1356
  %v1359 = vlaneseq
  %v1360 = vshrl.u32 %v1359, 7
  %v1361 = vsub.s32 1, %v1360
  %v1362 = vrot.slane %v1275, %v1361
  %v1363 = vlaneseq
  %v1364 = vshrl.u32 %v1363, 7
  %v1365 = vsub.s32 5, %v1364
  %v1366 = vrot.slane %v1275, %v1365
  %v1367 = vlaneseq
  %v1368 = vshrl.u32 %v1367, 7
  %v1369 = vsub.s32 1, %v1368
  %v1370 = vrot.slane %v1276, %v1369
  %v1374 = vlaneseq
  %v1375 = vshrl.u32 %v1374, 7
  %v1376 = vsub.s32 1, %v1375
  %v1377 = vrot.slane %v1362, %v1376
  %v1378 = vlaneseq
  %v1379 = vshrl.u32 %v1378, 7
  %v1380 = vsub.s32 1, %v1379
  %v1381 = vrot.slane %v1366, %v1380
  %v1382 = vlaneseq
  %v1383 = vshrl.u32 %v1382, 7
  %v1384 = vsub.s32 1, %v1383
  %v1385 = vrot.slane %v1370, %v1384
  %v1386 = vmul.f32 %v1353, %v1377
  %v1387 = vmul.f32 %v1353, %v1381
  %v1388 = vmul.f32 %v1353, %v1385
  %v1389 = vmul.f32 %v1357, %v1377
  %v1390 = vmul.f32 %v1357, %v1381
  %v1391 = vmul.f32 %v1357, %v1385
  %1398 = vrot.lane.b32.xlu0 %v1386, 96
  %v1399 = vpop.permute.xlu0 %1398
  %1400 = vrot.lane.b32.xlu0 %v1387, 96
  %v1401 = vpop.permute.xlu0 %1400
  %1402 = vrot.lane.b32.xlu0 %v1388, 96
  %v1403 = vpop.permute.xlu0 %1402
  %1404 = vrot.lane.b32.xlu0 %v1389, 96
  %v1405 = vpop.permute.xlu0 %1404
  %1406 = vrot.lane.b32.xlu0 %v1390, 96
  %v1407 = vpop.permute.xlu0 %1406
  %1408 = vrot.lane.b32.xlu0 %v1391, 96
  %v1409 = vpop.permute.xlu0 %1408
  %v1410 = vsel %vm1338, %v1399, %v1401
  %v1411 = vsel %vm1338, %v1401, %v1403
  %v1412 = vsel %vm1338, %v1405, %v1407
  %v1413 = vsel %vm1338, %v1407, %v1409
  %v1418 = vadd.f32 %v1347, %v1410
  %v1419 = vadd.f32 %v1348, %v1411
  %v1420 = vadd.f32 %v1349, %v1412
  %v1421 = vadd.f32 %v1350, %v1413
  %1422 = vset.pattern.permute.xlu0 20
  %1423 = vperm.xlu0 %1422, %v20
  %v1424 = vpop.permute.xlu0 %1423
  %1426 = vset.pattern.permute.xlu0 20
  %1427 = vperm.xlu0 %1426, %v21
  %v1428 = vpop.permute.xlu0 %1427
  %v1430 = vlaneseq
  %v1431 = vshrl.u32 %v1430, 7
  %v1432 = vsub.s32 2, %v1431
  %v1433 = vrot.slane %v1275, %v1432
  %v1434 = vlaneseq
  %v1435 = vshrl.u32 %v1434, 7
  %v1436 = vsub.s32 6, %v1435
  %v1437 = vrot.slane %v1275, %v1436
  %v1438 = vlaneseq
  %v1439 = vshrl.u32 %v1438, 7
  %v1440 = vsub.s32 2, %v1439
  %v1441 = vrot.slane %v1276, %v1440
  %v1445 = vlaneseq
  %v1446 = vshrl.u32 %v1445, 7
  %v1447 = vsub.s32 2, %v1446
  %v1448 = vrot.slane %v1433, %v1447
  %v1449 = vlaneseq
  %v1450 = vshrl.u32 %v1449, 7
  %v1451 = vsub.s32 2, %v1450
  %v1452 = vrot.slane %v1437, %v1451
  %v1453 = vlaneseq
  %v1454 = vshrl.u32 %v1453, 7
  %v1455 = vsub.s32 2, %v1454
  %v1456 = vrot.slane %v1441, %v1455
  %v1457 = vmul.f32 %v1424, %v1448
  %v1458 = vmul.f32 %v1424, %v1452
  %v1459 = vmul.f32 %v1424, %v1456
  %v1460 = vmul.f32 %v1428, %v1448
  %v1461 = vmul.f32 %v1428, %v1452
  %v1462 = vmul.f32 %v1428, %v1456
  %1469 = vrot.lane.b32.xlu0 %v1457, 96
  %v1470 = vpop.permute.xlu0 %1469
  %1471 = vrot.lane.b32.xlu0 %v1458, 96
  %v1472 = vpop.permute.xlu0 %1471
  %1473 = vrot.lane.b32.xlu0 %v1459, 96
  %v1474 = vpop.permute.xlu0 %1473
  %1475 = vrot.lane.b32.xlu0 %v1460, 96
  %v1476 = vpop.permute.xlu0 %1475
  %1477 = vrot.lane.b32.xlu0 %v1461, 96
  %v1478 = vpop.permute.xlu0 %1477
  %1479 = vrot.lane.b32.xlu0 %v1462, 96
  %v1480 = vpop.permute.xlu0 %1479
  %v1481 = vsel %vm1338, %v1470, %v1472
  %v1482 = vsel %vm1338, %v1472, %v1474
  %v1483 = vsel %vm1338, %v1476, %v1478
  %v1484 = vsel %vm1338, %v1478, %v1480
  %v1489 = vadd.f32 %v1418, %v1481
  %v1490 = vadd.f32 %v1419, %v1482
  %v1491 = vadd.f32 %v1420, %v1483
  %v1492 = vadd.f32 %v1421, %v1484
  %v1493 = vld [vmem:[%s0] sm:$0x77]
  %v1494 = vld [vmem:[%s0 + $0x8] sm:$0x7]
  %1495 = vset.pattern.permute.xlu0 21
  %1496 = vperm.xlu0 %1495, %v20
  %v1497 = vpop.permute.xlu0 %1496
  %1499 = vset.pattern.permute.xlu0 21
  %1500 = vperm.xlu0 %1499, %v21
  %v1501 = vpop.permute.xlu0 %1500
  %v1505 = vlaneseq
  %v1506 = vshrl.u32 %v1505, 7
  %v1507 = vsub.s32 0, %v1506
  %v1508 = vrot.slane %v1493, %v1507
  %v1509 = vlaneseq
  %v1510 = vshrl.u32 %v1509, 7
  %v1511 = vsub.s32 4, %v1510
  %v1512 = vrot.slane %v1493, %v1511
  %v1513 = vlaneseq
  %v1514 = vshrl.u32 %v1513, 7
  %v1515 = vsub.s32 0, %v1514
  %v1516 = vrot.slane %v1494, %v1515
  %v1520 = vlaneseq
  %v1521 = vshrl.u32 %v1520, 7
  %v1522 = vsub.s32 0, %v1521
  %v1523 = vrot.slane %v1508, %v1522
  %v1524 = vlaneseq
  %v1525 = vshrl.u32 %v1524, 7
  %v1526 = vsub.s32 0, %v1525
  %v1527 = vrot.slane %v1512, %v1526
  %v1528 = vlaneseq
  %v1529 = vshrl.u32 %v1528, 7
  %v1530 = vsub.s32 0, %v1529
  %v1531 = vrot.slane %v1516, %v1530
  %v1532 = vmul.f32 %v1497, %v1523
  %v1533 = vmul.f32 %v1497, %v1527
  %v1534 = vmul.f32 %v1497, %v1531
  %v1535 = vmul.f32 %v1501, %v1523
  %v1536 = vmul.f32 %v1501, %v1527
  %v1537 = vmul.f32 %v1501, %v1531
  %1544 = vrot.lane.b32.xlu0 %v1532, 95
  %v1545 = vpop.permute.xlu0 %1544
  %1546 = vrot.lane.b32.xlu0 %v1533, 95
  %v1547 = vpop.permute.xlu0 %1546
  %1548 = vrot.lane.b32.xlu0 %v1534, 95
  %v1549 = vpop.permute.xlu0 %1548
  %1550 = vrot.lane.b32.xlu0 %v1535, 95
  %v1551 = vpop.permute.xlu0 %1550
  %1552 = vrot.lane.b32.xlu0 %v1536, 95
  %v1553 = vpop.permute.xlu0 %1552
  %1554 = vrot.lane.b32.xlu0 %v1537, 95
  %v1555 = vpop.permute.xlu0 %1554
  %vm1556 = vcmask 777216
  %v1557 = vsel %vm1556, %v1545, %v1547
  %v1558 = vsel %vm1556, %v1547, %v1549
  %v1559 = vsel %vm1556, %v1551, %v1553
  %v1560 = vsel %vm1556, %v1553, %v1555
  %v1565 = vadd.f32 %v1489, %v1557
  %v1566 = vadd.f32 %v1490, %v1558
  %v1567 = vadd.f32 %v1491, %v1559
  %v1568 = vadd.f32 %v1492, %v1560
  %1569 = vset.pattern.permute.xlu0 22
  %1570 = vperm.xlu0 %1569, %v20
  %v1571 = vpop.permute.xlu0 %1570
  %1573 = vset.pattern.permute.xlu0 22
  %1574 = vperm.xlu0 %1573, %v21
  %v1575 = vpop.permute.xlu0 %1574
  %v1577 = vlaneseq
  %v1578 = vshrl.u32 %v1577, 7
  %v1579 = vsub.s32 1, %v1578
  %v1580 = vrot.slane %v1493, %v1579
  %v1581 = vlaneseq
  %v1582 = vshrl.u32 %v1581, 7
  %v1583 = vsub.s32 5, %v1582
  %v1584 = vrot.slane %v1493, %v1583
  %v1585 = vlaneseq
  %v1586 = vshrl.u32 %v1585, 7
  %v1587 = vsub.s32 1, %v1586
  %v1588 = vrot.slane %v1494, %v1587
  %v1592 = vlaneseq
  %v1593 = vshrl.u32 %v1592, 7
  %v1594 = vsub.s32 1, %v1593
  %v1595 = vrot.slane %v1580, %v1594
  %v1596 = vlaneseq
  %v1597 = vshrl.u32 %v1596, 7
  %v1598 = vsub.s32 1, %v1597
  %v1599 = vrot.slane %v1584, %v1598
  %v1600 = vlaneseq
  %v1601 = vshrl.u32 %v1600, 7
  %v1602 = vsub.s32 1, %v1601
  %v1603 = vrot.slane %v1588, %v1602
  %v1604 = vmul.f32 %v1571, %v1595
  %v1605 = vmul.f32 %v1571, %v1599
  %v1606 = vmul.f32 %v1571, %v1603
  %v1607 = vmul.f32 %v1575, %v1595
  %v1608 = vmul.f32 %v1575, %v1599
  %v1609 = vmul.f32 %v1575, %v1603
  %1616 = vrot.lane.b32.xlu0 %v1604, 95
  %v1617 = vpop.permute.xlu0 %1616
  %1618 = vrot.lane.b32.xlu0 %v1605, 95
  %v1619 = vpop.permute.xlu0 %1618
  %1620 = vrot.lane.b32.xlu0 %v1606, 95
  %v1621 = vpop.permute.xlu0 %1620
  %1622 = vrot.lane.b32.xlu0 %v1607, 95
  %v1623 = vpop.permute.xlu0 %1622
  %1624 = vrot.lane.b32.xlu0 %v1608, 95
  %v1625 = vpop.permute.xlu0 %1624
  %1626 = vrot.lane.b32.xlu0 %v1609, 95
  %v1627 = vpop.permute.xlu0 %1626
  %v1628 = vsel %vm1556, %v1617, %v1619
  %v1629 = vsel %vm1556, %v1619, %v1621
  %v1630 = vsel %vm1556, %v1623, %v1625
  %v1631 = vsel %vm1556, %v1625, %v1627
  %v1636 = vadd.f32 %v1565, %v1628
  %v1637 = vadd.f32 %v1566, %v1629
  %v1638 = vadd.f32 %v1567, %v1630
  %v1639 = vadd.f32 %v1568, %v1631
  %1640 = vset.pattern.permute.xlu0 23
  %1641 = vperm.xlu0 %1640, %v20
  %v1642 = vpop.permute.xlu0 %1641
  %1644 = vset.pattern.permute.xlu0 23
  %1645 = vperm.xlu0 %1644, %v21
  %v1646 = vpop.permute.xlu0 %1645
  %v1648 = vlaneseq
  %v1649 = vshrl.u32 %v1648, 7
  %v1650 = vsub.s32 2, %v1649
  %v1651 = vrot.slane %v1493, %v1650
  %v1652 = vlaneseq
  %v1653 = vshrl.u32 %v1652, 7
  %v1654 = vsub.s32 6, %v1653
  %v1655 = vrot.slane %v1493, %v1654
  %v1656 = vlaneseq
  %v1657 = vshrl.u32 %v1656, 7
  %v1658 = vsub.s32 2, %v1657
  %v1659 = vrot.slane %v1494, %v1658
  %v1663 = vlaneseq
  %v1664 = vshrl.u32 %v1663, 7
  %v1665 = vsub.s32 2, %v1664
  %v1666 = vrot.slane %v1651, %v1665
  %v1667 = vlaneseq
  %v1668 = vshrl.u32 %v1667, 7
  %v1669 = vsub.s32 2, %v1668
  %v1670 = vrot.slane %v1655, %v1669
  %v1671 = vlaneseq
  %v1672 = vshrl.u32 %v1671, 7
  %v1673 = vsub.s32 2, %v1672
  %v1674 = vrot.slane %v1659, %v1673
  %v1675 = vmul.f32 %v1642, %v1666
  %v1676 = vmul.f32 %v1642, %v1670
  %v1677 = vmul.f32 %v1642, %v1674
  %v1678 = vmul.f32 %v1646, %v1666
  %v1679 = vmul.f32 %v1646, %v1670
  %v1680 = vmul.f32 %v1646, %v1674
  %1687 = vrot.lane.b32.xlu0 %v1675, 95
  %v1688 = vpop.permute.xlu0 %1687
  %1689 = vrot.lane.b32.xlu0 %v1676, 95
  %v1690 = vpop.permute.xlu0 %1689
  %1691 = vrot.lane.b32.xlu0 %v1677, 95
  %v1692 = vpop.permute.xlu0 %1691
  %1693 = vrot.lane.b32.xlu0 %v1678, 95
  %v1694 = vpop.permute.xlu0 %1693
  %1695 = vrot.lane.b32.xlu0 %v1679, 95
  %v1696 = vpop.permute.xlu0 %1695
  %1697 = vrot.lane.b32.xlu0 %v1680, 95
  %v1698 = vpop.permute.xlu0 %1697
  %v1699 = vsel %vm1556, %v1688, %v1690
  %v1700 = vsel %vm1556, %v1690, %v1692
  %v1701 = vsel %vm1556, %v1694, %v1696
  %v1702 = vsel %vm1556, %v1696, %v1698
  %v1707 = vadd.f32 %v1636, %v1699
  %v1708 = vadd.f32 %v1637, %v1700
  %v1709 = vadd.f32 %v1638, %v1701
  %v1710 = vadd.f32 %v1639, %v1702
  %1711 = vrot.lane.b32.xlu0 %v370, 34
  %v1712 = vpop.permute.xlu0 %1711
  %v1713 = vrot.slane %v1712, 4
  %vm1714 = vcmask 277504
  %v1715 = vsel %vm1714, %v1713, %v1712
  %v1718 = vmul.f32 %v1493, %v1715
  %v1719 = vmul.f32 %v1494, %v1713
  %1720 = vset.pattern.permute.xlu0 24
  %1721 = vperm.xlu0 %1720, %v20
  %v1722 = vpop.permute.xlu0 %1721
  %1724 = vset.pattern.permute.xlu0 24
  %1725 = vperm.xlu0 %1724, %v21
  %v1726 = vpop.permute.xlu0 %1725
  %v1730 = vlaneseq
  %v1731 = vshrl.u32 %v1730, 7
  %v1732 = vsub.s32 0, %v1731
  %v1733 = vrot.slane %v1718, %v1732
  %v1734 = vlaneseq
  %v1735 = vshrl.u32 %v1734, 7
  %v1736 = vsub.s32 4, %v1735
  %v1737 = vrot.slane %v1718, %v1736
  %v1738 = vlaneseq
  %v1739 = vshrl.u32 %v1738, 7
  %v1740 = vsub.s32 0, %v1739
  %v1741 = vrot.slane %v1719, %v1740
  %v1745 = vlaneseq
  %v1746 = vshrl.u32 %v1745, 7
  %v1747 = vsub.s32 0, %v1746
  %v1748 = vrot.slane %v1733, %v1747
  %v1749 = vlaneseq
  %v1750 = vshrl.u32 %v1749, 7
  %v1751 = vsub.s32 0, %v1750
  %v1752 = vrot.slane %v1737, %v1751
  %v1753 = vlaneseq
  %v1754 = vshrl.u32 %v1753, 7
  %v1755 = vsub.s32 0, %v1754
  %v1756 = vrot.slane %v1741, %v1755
  %v1757 = vmul.f32 %v1722, %v1748
  %v1758 = vmul.f32 %v1722, %v1752
  %v1759 = vmul.f32 %v1722, %v1756
  %v1760 = vmul.f32 %v1726, %v1748
  %v1761 = vmul.f32 %v1726, %v1752
  %v1762 = vmul.f32 %v1726, %v1756
  %1769 = vrot.lane.b32.xlu0 %v1757, 94
  %v1770 = vpop.permute.xlu0 %1769
  %1771 = vrot.lane.b32.xlu0 %v1758, 94
  %v1772 = vpop.permute.xlu0 %1771
  %1773 = vrot.lane.b32.xlu0 %v1759, 94
  %v1774 = vpop.permute.xlu0 %1773
  %1775 = vrot.lane.b32.xlu0 %v1760, 94
  %v1776 = vpop.permute.xlu0 %1775
  %1777 = vrot.lane.b32.xlu0 %v1761, 94
  %v1778 = vpop.permute.xlu0 %1777
  %1779 = vrot.lane.b32.xlu0 %v1762, 94
  %v1780 = vpop.permute.xlu0 %1779
  %vm1781 = vcmask 769024
  %v1782 = vsel %vm1781, %v1770, %v1772
  %v1783 = vsel %vm1781, %v1772, %v1774
  %v1784 = vsel %vm1781, %v1776, %v1778
  %v1785 = vsel %vm1781, %v1778, %v1780
  %v1790 = vadd.f32 %v1707, %v1782
  %v1791 = vadd.f32 %v1708, %v1783
  %v1792 = vadd.f32 %v1709, %v1784
  %v1793 = vadd.f32 %v1710, %v1785
  %1794 = vset.pattern.permute.xlu0 25
  %1795 = vperm.xlu0 %1794, %v20
  %v1796 = vpop.permute.xlu0 %1795
  %1798 = vset.pattern.permute.xlu0 25
  %1799 = vperm.xlu0 %1798, %v21
  %v1800 = vpop.permute.xlu0 %1799
  %v1802 = vlaneseq
  %v1803 = vshrl.u32 %v1802, 7
  %v1804 = vsub.s32 1, %v1803
  %v1805 = vrot.slane %v1718, %v1804
  %v1806 = vlaneseq
  %v1807 = vshrl.u32 %v1806, 7
  %v1808 = vsub.s32 5, %v1807
  %v1809 = vrot.slane %v1718, %v1808
  %v1810 = vlaneseq
  %v1811 = vshrl.u32 %v1810, 7
  %v1812 = vsub.s32 1, %v1811
  %v1813 = vrot.slane %v1719, %v1812
  %v1817 = vlaneseq
  %v1818 = vshrl.u32 %v1817, 7
  %v1819 = vsub.s32 1, %v1818
  %v1820 = vrot.slane %v1805, %v1819
  %v1821 = vlaneseq
  %v1822 = vshrl.u32 %v1821, 7
  %v1823 = vsub.s32 1, %v1822
  %v1824 = vrot.slane %v1809, %v1823
  %v1825 = vlaneseq
  %v1826 = vshrl.u32 %v1825, 7
  %v1827 = vsub.s32 1, %v1826
  %v1828 = vrot.slane %v1813, %v1827
  %v1829 = vmul.f32 %v1796, %v1820
  %v1830 = vmul.f32 %v1796, %v1824
  %v1831 = vmul.f32 %v1796, %v1828
  %v1832 = vmul.f32 %v1800, %v1820
  %v1833 = vmul.f32 %v1800, %v1824
  %v1834 = vmul.f32 %v1800, %v1828
  %1841 = vrot.lane.b32.xlu0 %v1829, 94
  %v1842 = vpop.permute.xlu0 %1841
  %1843 = vrot.lane.b32.xlu0 %v1830, 94
  %v1844 = vpop.permute.xlu0 %1843
  %1845 = vrot.lane.b32.xlu0 %v1831, 94
  %v1846 = vpop.permute.xlu0 %1845
  %1847 = vrot.lane.b32.xlu0 %v1832, 94
  %v1848 = vpop.permute.xlu0 %1847
  %1849 = vrot.lane.b32.xlu0 %v1833, 94
  %v1850 = vpop.permute.xlu0 %1849
  %1851 = vrot.lane.b32.xlu0 %v1834, 94
  %v1852 = vpop.permute.xlu0 %1851
  %v1853 = vsel %vm1781, %v1842, %v1844
  %v1854 = vsel %vm1781, %v1844, %v1846
  %v1855 = vsel %vm1781, %v1848, %v1850
  %v1856 = vsel %vm1781, %v1850, %v1852
  %v1861 = vadd.f32 %v1790, %v1853
  %v1862 = vadd.f32 %v1791, %v1854
  %v1863 = vadd.f32 %v1792, %v1855
  %v1864 = vadd.f32 %v1793, %v1856
  %1865 = vset.pattern.permute.xlu0 26
  %1866 = vperm.xlu0 %1865, %v20
  %v1867 = vpop.permute.xlu0 %1866
  %1869 = vset.pattern.permute.xlu0 26
  %1870 = vperm.xlu0 %1869, %v21
  %v1871 = vpop.permute.xlu0 %1870
  %v1873 = vlaneseq
  %v1874 = vshrl.u32 %v1873, 7
  %v1875 = vsub.s32 2, %v1874
  %v1876 = vrot.slane %v1718, %v1875
  %v1877 = vlaneseq
  %v1878 = vshrl.u32 %v1877, 7
  %v1879 = vsub.s32 6, %v1878
  %v1880 = vrot.slane %v1718, %v1879
  %v1881 = vlaneseq
  %v1882 = vshrl.u32 %v1881, 7
  %v1883 = vsub.s32 2, %v1882
  %v1884 = vrot.slane %v1719, %v1883
  %v1888 = vlaneseq
  %v1889 = vshrl.u32 %v1888, 7
  %v1890 = vsub.s32 2, %v1889
  %v1891 = vrot.slane %v1876, %v1890
  %v1892 = vlaneseq
  %v1893 = vshrl.u32 %v1892, 7
  %v1894 = vsub.s32 2, %v1893
  %v1895 = vrot.slane %v1880, %v1894
  %v1896 = vlaneseq
  %v1897 = vshrl.u32 %v1896, 7
  %v1898 = vsub.s32 2, %v1897
  %v1899 = vrot.slane %v1884, %v1898
  %v1900 = vmul.f32 %v1867, %v1891
  %v1901 = vmul.f32 %v1867, %v1895
  %v1902 = vmul.f32 %v1867, %v1899
  %v1903 = vmul.f32 %v1871, %v1891
  %v1904 = vmul.f32 %v1871, %v1895
  %v1905 = vmul.f32 %v1871, %v1899
  %1912 = vrot.lane.b32.xlu0 %v1900, 94
  %v1913 = vpop.permute.xlu0 %1912
  %1914 = vrot.lane.b32.xlu0 %v1901, 94
  %v1915 = vpop.permute.xlu0 %1914
  %1916 = vrot.lane.b32.xlu0 %v1902, 94
  %v1917 = vpop.permute.xlu0 %1916
  %1918 = vrot.lane.b32.xlu0 %v1903, 94
  %v1919 = vpop.permute.xlu0 %1918
  %1920 = vrot.lane.b32.xlu0 %v1904, 94
  %v1921 = vpop.permute.xlu0 %1920
  %1922 = vrot.lane.b32.xlu0 %v1905, 94
  %v1923 = vpop.permute.xlu0 %1922
  %v1924 = vsel %vm1781, %v1913, %v1915
  %v1925 = vsel %vm1781, %v1915, %v1917
  %v1926 = vsel %vm1781, %v1919, %v1921
  %v1927 = vsel %vm1781, %v1921, %v1923
  %v1932 = vadd.f32 %v1861, %v1924
  %v1933 = vadd.f32 %v1862, %v1925
  %v1934 = vadd.f32 %v1863, %v1926
  %v1935 = vadd.f32 %v1864, %v1927
  %s1936 = scalar_lea.vmem %s0, 12
  %v1937 = vld [vmem:[%s1936] sm:$0x77]
  %v1938 = vmul.f32 %v1937, %v33
  %v1940 = vlaneseq
  %v1941 = vshrl.u32 %v1940, 7
  %v1942 = vsub.s32 0, %v1941
  %v1943 = vrot.slane %v1938, %v1942
  %v1944 = vlaneseq
  %v1945 = vshrl.u32 %v1944, 7
  %v1946 = vsub.s32 4, %v1945
  %v1947 = vrot.slane %v1938, %v1946
  %v1950 = vlaneseq
  %v1951 = vshrl.u32 %v1950, 7
  %v1952 = vsub.s32 0, %v1951
  %v1953 = vrot.slane %v1943, %v1952
  %v1954 = vlaneseq
  %v1955 = vshrl.u32 %v1954, 7
  %v1956 = vsub.s32 0, %v1955
  %v1957 = vrot.slane %v1947, %v1956
  %v1958 = vmul.f32 %v39, %v1953
  %v1959 = vmul.f32 %v39, %v1957
  %v1960 = vmul.f32 %v44, %v1953
  %v1961 = vmul.f32 %v44, %v1957
  %v1962 = vadd.f32 %v1958, 0.0
  %v1963 = vadd.f32 %v1959, 0.0
  %v1964 = vadd.f32 %v1960, 0.0
  %v1965 = vadd.f32 %v1961, 0.0
  %v1966 = vlaneseq
  %v1967 = vshrl.u32 %v1966, 7
  %v1968 = vsub.s32 1, %v1967
  %v1969 = vrot.slane %v1938, %v1968
  %v1970 = vlaneseq
  %v1971 = vshrl.u32 %v1970, 7
  %v1972 = vsub.s32 5, %v1971
  %v1973 = vrot.slane %v1938, %v1972
  %v1976 = vlaneseq
  %v1977 = vshrl.u32 %v1976, 7
  %v1978 = vsub.s32 1, %v1977
  %v1979 = vrot.slane %v1969, %v1978
  %v1980 = vlaneseq
  %v1981 = vshrl.u32 %v1980, 7
  %v1982 = vsub.s32 1, %v1981
  %v1983 = vrot.slane %v1973, %v1982
  %v1984 = vmul.f32 %v75, %v1979
  %v1985 = vmul.f32 %v75, %v1983
  %v1986 = vmul.f32 %v79, %v1979
  %v1987 = vmul.f32 %v79, %v1983
  %v1988 = vadd.f32 %v1962, %v1984
  %v1989 = vadd.f32 %v1963, %v1985
  %v1990 = vadd.f32 %v1964, %v1986
  %v1991 = vadd.f32 %v1965, %v1987
  %v1992 = vlaneseq
  %v1993 = vshrl.u32 %v1992, 7
  %v1994 = vsub.s32 2, %v1993
  %v1995 = vrot.slane %v1938, %v1994
  %v1996 = vlaneseq
  %v1997 = vshrl.u32 %v1996, 7
  %v1998 = vsub.s32 6, %v1997
  %v1999 = vrot.slane %v1938, %v1998
  %v2002 = vlaneseq
  %v2003 = vshrl.u32 %v2002, 7
  %v2004 = vsub.s32 2, %v2003
  %v2005 = vrot.slane %v1995, %v2004
  %v2006 = vlaneseq
  %v2007 = vshrl.u32 %v2006, 7
  %v2008 = vsub.s32 2, %v2007
  %v2009 = vrot.slane %v1999, %v2008
  %v2010 = vmul.f32 %v109, %v2005
  %v2011 = vmul.f32 %v109, %v2009
  %v2012 = vmul.f32 %v113, %v2005
  %v2013 = vmul.f32 %v113, %v2009
  %v2014 = vadd.f32 %v1988, %v2010
  %v2015 = vadd.f32 %v1989, %v2011
  %v2016 = vadd.f32 %v1990, %v2012
  %v2017 = vadd.f32 %v1991, %v2013
  %v2018 = vld [vmem:[%s1936 + $0x8] sm:$0x7]
  %v2021 = vlaneseq
  %v2022 = vshrl.u32 %v2021, 7
  %v2023 = vsub.s32 0, %v2022
  %v2024 = vrot.slane %v1937, %v2023
  %v2025 = vlaneseq
  %v2026 = vshrl.u32 %v2025, 7
  %v2027 = vsub.s32 4, %v2026
  %v2028 = vrot.slane %v1937, %v2027
  %v2029 = vlaneseq
  %v2030 = vshrl.u32 %v2029, 7
  %v2031 = vsub.s32 0, %v2030
  %v2032 = vrot.slane %v2018, %v2031
  %v2036 = vlaneseq
  %v2037 = vshrl.u32 %v2036, 7
  %v2038 = vsub.s32 0, %v2037
  %v2039 = vrot.slane %v2024, %v2038
  %v2040 = vlaneseq
  %v2041 = vshrl.u32 %v2040, 7
  %v2042 = vsub.s32 0, %v2041
  %v2043 = vrot.slane %v2028, %v2042
  %v2044 = vlaneseq
  %v2045 = vshrl.u32 %v2044, 7
  %v2046 = vsub.s32 0, %v2045
  %v2047 = vrot.slane %v2032, %v2046
  %v2048 = vmul.f32 %v145, %v2039
  %v2049 = vmul.f32 %v145, %v2043
  %v2050 = vmul.f32 %v145, %v2047
  %v2051 = vmul.f32 %v149, %v2039
  %v2052 = vmul.f32 %v149, %v2043
  %v2053 = vmul.f32 %v149, %v2047
  %2060 = vrot.lane.b32.xlu0 %v2048, 127
  %v2061 = vpop.permute.xlu0 %2060
  %2062 = vrot.lane.b32.xlu0 %v2049, 127
  %v2063 = vpop.permute.xlu0 %2062
  %2064 = vrot.lane.b32.xlu0 %v2050, 127
  %v2065 = vpop.permute.xlu0 %2064
  %2066 = vrot.lane.b32.xlu0 %v2051, 127
  %v2067 = vpop.permute.xlu0 %2066
  %2068 = vrot.lane.b32.xlu0 %v2052, 127
  %v2069 = vpop.permute.xlu0 %2068
  %2070 = vrot.lane.b32.xlu0 %v2053, 127
  %v2071 = vpop.permute.xlu0 %2070
  %v2072 = vsel %vm204, %v2061, %v2063
  %v2073 = vsel %vm204, %v2063, %v2065
  %v2074 = vsel %vm204, %v2067, %v2069
  %v2075 = vsel %vm204, %v2069, %v2071
  %v2080 = vadd.f32 %v2014, %v2072
  %v2081 = vadd.f32 %v2015, %v2073
  %v2082 = vadd.f32 %v2016, %v2074
  %v2083 = vadd.f32 %v2017, %v2075
  %v2084 = vlaneseq
  %v2085 = vshrl.u32 %v2084, 7
  %v2086 = vsub.s32 1, %v2085
  %v2087 = vrot.slane %v1937, %v2086
  %v2088 = vlaneseq
  %v2089 = vshrl.u32 %v2088, 7
  %v2090 = vsub.s32 5, %v2089
  %v2091 = vrot.slane %v1937, %v2090
  %v2092 = vlaneseq
  %v2093 = vshrl.u32 %v2092, 7
  %v2094 = vsub.s32 1, %v2093
  %v2095 = vrot.slane %v2018, %v2094
  %v2099 = vlaneseq
  %v2100 = vshrl.u32 %v2099, 7
  %v2101 = vsub.s32 1, %v2100
  %v2102 = vrot.slane %v2087, %v2101
  %v2103 = vlaneseq
  %v2104 = vshrl.u32 %v2103, 7
  %v2105 = vsub.s32 1, %v2104
  %v2106 = vrot.slane %v2091, %v2105
  %v2107 = vlaneseq
  %v2108 = vshrl.u32 %v2107, 7
  %v2109 = vsub.s32 1, %v2108
  %v2110 = vrot.slane %v2095, %v2109
  %v2111 = vmul.f32 %v219, %v2102
  %v2112 = vmul.f32 %v219, %v2106
  %v2113 = vmul.f32 %v219, %v2110
  %v2114 = vmul.f32 %v223, %v2102
  %v2115 = vmul.f32 %v223, %v2106
  %v2116 = vmul.f32 %v223, %v2110
  %2123 = vrot.lane.b32.xlu0 %v2111, 127
  %v2124 = vpop.permute.xlu0 %2123
  %2125 = vrot.lane.b32.xlu0 %v2112, 127
  %v2126 = vpop.permute.xlu0 %2125
  %2127 = vrot.lane.b32.xlu0 %v2113, 127
  %v2128 = vpop.permute.xlu0 %2127
  %2129 = vrot.lane.b32.xlu0 %v2114, 127
  %v2130 = vpop.permute.xlu0 %2129
  %2131 = vrot.lane.b32.xlu0 %v2115, 127
  %v2132 = vpop.permute.xlu0 %2131
  %2133 = vrot.lane.b32.xlu0 %v2116, 127
  %v2134 = vpop.permute.xlu0 %2133
  %v2135 = vsel %vm204, %v2124, %v2126
  %v2136 = vsel %vm204, %v2126, %v2128
  %v2137 = vsel %vm204, %v2130, %v2132
  %v2138 = vsel %vm204, %v2132, %v2134
  %v2143 = vadd.f32 %v2080, %v2135
  %v2144 = vadd.f32 %v2081, %v2136
  %v2145 = vadd.f32 %v2082, %v2137
  %v2146 = vadd.f32 %v2083, %v2138
  %v2147 = vlaneseq
  %v2148 = vshrl.u32 %v2147, 7
  %v2149 = vsub.s32 2, %v2148
  %v2150 = vrot.slane %v1937, %v2149
  %v2151 = vlaneseq
  %v2152 = vshrl.u32 %v2151, 7
  %v2153 = vsub.s32 6, %v2152
  %v2154 = vrot.slane %v1937, %v2153
  %v2155 = vlaneseq
  %v2156 = vshrl.u32 %v2155, 7
  %v2157 = vsub.s32 2, %v2156
  %v2158 = vrot.slane %v2018, %v2157
  %v2162 = vlaneseq
  %v2163 = vshrl.u32 %v2162, 7
  %v2164 = vsub.s32 2, %v2163
  %v2165 = vrot.slane %v2150, %v2164
  %v2166 = vlaneseq
  %v2167 = vshrl.u32 %v2166, 7
  %v2168 = vsub.s32 2, %v2167
  %v2169 = vrot.slane %v2154, %v2168
  %v2170 = vlaneseq
  %v2171 = vshrl.u32 %v2170, 7
  %v2172 = vsub.s32 2, %v2171
  %v2173 = vrot.slane %v2158, %v2172
  %v2174 = vmul.f32 %v290, %v2165
  %v2175 = vmul.f32 %v290, %v2169
  %v2176 = vmul.f32 %v290, %v2173
  %v2177 = vmul.f32 %v294, %v2165
  %v2178 = vmul.f32 %v294, %v2169
  %v2179 = vmul.f32 %v294, %v2173
  %2186 = vrot.lane.b32.xlu0 %v2174, 127
  %v2187 = vpop.permute.xlu0 %2186
  %2188 = vrot.lane.b32.xlu0 %v2175, 127
  %v2189 = vpop.permute.xlu0 %2188
  %2190 = vrot.lane.b32.xlu0 %v2176, 127
  %v2191 = vpop.permute.xlu0 %2190
  %2192 = vrot.lane.b32.xlu0 %v2177, 127
  %v2193 = vpop.permute.xlu0 %2192
  %2194 = vrot.lane.b32.xlu0 %v2178, 127
  %v2195 = vpop.permute.xlu0 %2194
  %2196 = vrot.lane.b32.xlu0 %v2179, 127
  %v2197 = vpop.permute.xlu0 %2196
  %v2198 = vsel %vm204, %v2187, %v2189
  %v2199 = vsel %vm204, %v2189, %v2191
  %v2200 = vsel %vm204, %v2193, %v2195
  %v2201 = vsel %vm204, %v2195, %v2197
  %v2206 = vadd.f32 %v2143, %v2198
  %v2207 = vadd.f32 %v2144, %v2199
  %v2208 = vadd.f32 %v2145, %v2200
  %v2209 = vadd.f32 %v2146, %v2201
  %v2210 = vmul.f32 %v1937, %v375
  %v2211 = vmul.f32 %v2018, %v373
  %v2214 = vlaneseq
  %v2215 = vshrl.u32 %v2214, 7
  %v2216 = vsub.s32 0, %v2215
  %v2217 = vrot.slane %v2210, %v2216
  %v2218 = vlaneseq
  %v2219 = vshrl.u32 %v2218, 7
  %v2220 = vsub.s32 4, %v2219
  %v2221 = vrot.slane %v2210, %v2220
  %v2222 = vlaneseq
  %v2223 = vshrl.u32 %v2222, 7
  %v2224 = vsub.s32 0, %v2223
  %v2225 = vrot.slane %v2211, %v2224
  %v2229 = vlaneseq
  %v2230 = vshrl.u32 %v2229, 7
  %v2231 = vsub.s32 0, %v2230
  %v2232 = vrot.slane %v2217, %v2231
  %v2233 = vlaneseq
  %v2234 = vshrl.u32 %v2233, 7
  %v2235 = vsub.s32 0, %v2234
  %v2236 = vrot.slane %v2221, %v2235
  %v2237 = vlaneseq
  %v2238 = vshrl.u32 %v2237, 7
  %v2239 = vsub.s32 0, %v2238
  %v2240 = vrot.slane %v2225, %v2239
  %v2241 = vmul.f32 %v382, %v2232
  %v2242 = vmul.f32 %v382, %v2236
  %v2243 = vmul.f32 %v382, %v2240
  %v2244 = vmul.f32 %v386, %v2232
  %v2245 = vmul.f32 %v386, %v2236
  %v2246 = vmul.f32 %v386, %v2240
  %2253 = vrot.lane.b32.xlu0 %v2241, 126
  %v2254 = vpop.permute.xlu0 %2253
  %2255 = vrot.lane.b32.xlu0 %v2242, 126
  %v2256 = vpop.permute.xlu0 %2255
  %2257 = vrot.lane.b32.xlu0 %v2243, 126
  %v2258 = vpop.permute.xlu0 %2257
  %2259 = vrot.lane.b32.xlu0 %v2244, 126
  %v2260 = vpop.permute.xlu0 %2259
  %2261 = vrot.lane.b32.xlu0 %v2245, 126
  %v2262 = vpop.permute.xlu0 %2261
  %2263 = vrot.lane.b32.xlu0 %v2246, 126
  %v2264 = vpop.permute.xlu0 %2263
  %v2265 = vsel %vm441, %v2254, %v2256
  %v2266 = vsel %vm441, %v2256, %v2258
  %v2267 = vsel %vm441, %v2260, %v2262
  %v2268 = vsel %vm441, %v2262, %v2264
  %v2273 = vadd.f32 %v2206, %v2265
  %v2274 = vadd.f32 %v2207, %v2266
  %v2275 = vadd.f32 %v2208, %v2267
  %v2276 = vadd.f32 %v2209, %v2268
  %v2277 = vlaneseq
  %v2278 = vshrl.u32 %v2277, 7
  %v2279 = vsub.s32 1, %v2278
  %v2280 = vrot.slane %v2210, %v2279
  %v2281 = vlaneseq
  %v2282 = vshrl.u32 %v2281, 7
  %v2283 = vsub.s32 5, %v2282
  %v2284 = vrot.slane %v2210, %v2283
  %v2285 = vlaneseq
  %v2286 = vshrl.u32 %v2285, 7
  %v2287 = vsub.s32 1, %v2286
  %v2288 = vrot.slane %v2211, %v2287
  %v2292 = vlaneseq
  %v2293 = vshrl.u32 %v2292, 7
  %v2294 = vsub.s32 1, %v2293
  %v2295 = vrot.slane %v2280, %v2294
  %v2296 = vlaneseq
  %v2297 = vshrl.u32 %v2296, 7
  %v2298 = vsub.s32 1, %v2297
  %v2299 = vrot.slane %v2284, %v2298
  %v2300 = vlaneseq
  %v2301 = vshrl.u32 %v2300, 7
  %v2302 = vsub.s32 1, %v2301
  %v2303 = vrot.slane %v2288, %v2302
  %v2304 = vmul.f32 %v456, %v2295
  %v2305 = vmul.f32 %v456, %v2299
  %v2306 = vmul.f32 %v456, %v2303
  %v2307 = vmul.f32 %v460, %v2295
  %v2308 = vmul.f32 %v460, %v2299
  %v2309 = vmul.f32 %v460, %v2303
  %2316 = vrot.lane.b32.xlu0 %v2304, 126
  %v2317 = vpop.permute.xlu0 %2316
  %2318 = vrot.lane.b32.xlu0 %v2305, 126
  %v2319 = vpop.permute.xlu0 %2318
  %2320 = vrot.lane.b32.xlu0 %v2306, 126
  %v2321 = vpop.permute.xlu0 %2320
  %2322 = vrot.lane.b32.xlu0 %v2307, 126
  %v2323 = vpop.permute.xlu0 %2322
  %2324 = vrot.lane.b32.xlu0 %v2308, 126
  %v2325 = vpop.permute.xlu0 %2324
  %2326 = vrot.lane.b32.xlu0 %v2309, 126
  %v2327 = vpop.permute.xlu0 %2326
  %v2328 = vsel %vm441, %v2317, %v2319
  %v2329 = vsel %vm441, %v2319, %v2321
  %v2330 = vsel %vm441, %v2323, %v2325
  %v2331 = vsel %vm441, %v2325, %v2327
  %v2336 = vadd.f32 %v2273, %v2328
  %v2337 = vadd.f32 %v2274, %v2329
  %v2338 = vadd.f32 %v2275, %v2330
  %v2339 = vadd.f32 %v2276, %v2331
  %v2340 = vlaneseq
  %v2341 = vshrl.u32 %v2340, 7
  %v2342 = vsub.s32 2, %v2341
  %v2343 = vrot.slane %v2210, %v2342
  %v2344 = vlaneseq
  %v2345 = vshrl.u32 %v2344, 7
  %v2346 = vsub.s32 6, %v2345
  %v2347 = vrot.slane %v2210, %v2346
  %v2348 = vlaneseq
  %v2349 = vshrl.u32 %v2348, 7
  %v2350 = vsub.s32 2, %v2349
  %v2351 = vrot.slane %v2211, %v2350
  %v2355 = vlaneseq
  %v2356 = vshrl.u32 %v2355, 7
  %v2357 = vsub.s32 2, %v2356
  %v2358 = vrot.slane %v2343, %v2357
  %v2359 = vlaneseq
  %v2360 = vshrl.u32 %v2359, 7
  %v2361 = vsub.s32 2, %v2360
  %v2362 = vrot.slane %v2347, %v2361
  %v2363 = vlaneseq
  %v2364 = vshrl.u32 %v2363, 7
  %v2365 = vsub.s32 2, %v2364
  %v2366 = vrot.slane %v2351, %v2365
  %v2367 = vmul.f32 %v527, %v2358
  %v2368 = vmul.f32 %v527, %v2362
  %v2369 = vmul.f32 %v527, %v2366
  %v2370 = vmul.f32 %v531, %v2358
  %v2371 = vmul.f32 %v531, %v2362
  %v2372 = vmul.f32 %v531, %v2366
  %2379 = vrot.lane.b32.xlu0 %v2367, 126
  %v2380 = vpop.permute.xlu0 %2379
  %2381 = vrot.lane.b32.xlu0 %v2368, 126
  %v2382 = vpop.permute.xlu0 %2381
  %2383 = vrot.lane.b32.xlu0 %v2369, 126
  %v2384 = vpop.permute.xlu0 %2383
  %2385 = vrot.lane.b32.xlu0 %v2370, 126
  %v2386 = vpop.permute.xlu0 %2385
  %2387 = vrot.lane.b32.xlu0 %v2371, 126
  %v2388 = vpop.permute.xlu0 %2387
  %2389 = vrot.lane.b32.xlu0 %v2372, 126
  %v2390 = vpop.permute.xlu0 %2389
  %v2391 = vsel %vm441, %v2380, %v2382
  %v2392 = vsel %vm441, %v2382, %v2384
  %v2393 = vsel %vm441, %v2386, %v2388
  %v2394 = vsel %vm441, %v2388, %v2390
  %v2399 = vadd.f32 %v2336, %v2391
  %v2400 = vadd.f32 %v2337, %v2392
  %v2401 = vadd.f32 %v2338, %v2393
  %v2402 = vadd.f32 %v2339, %v2394
  %v2403 = vmul.f32 %v1937, %v602
  %v2404 = vmul.f32 %v2018, %v600
  %v2407 = vlaneseq
  %v2408 = vshrl.u32 %v2407, 7
  %v2409 = vsub.s32 0, %v2408
  %v2410 = vrot.slane %v2403, %v2409
  %v2411 = vlaneseq
  %v2412 = vshrl.u32 %v2411, 7
  %v2413 = vsub.s32 4, %v2412
  %v2414 = vrot.slane %v2403, %v2413
  %v2415 = vlaneseq
  %v2416 = vshrl.u32 %v2415, 7
  %v2417 = vsub.s32 0, %v2416
  %v2418 = vrot.slane %v2404, %v2417
  %v2422 = vlaneseq
  %v2423 = vshrl.u32 %v2422, 7
  %v2424 = vsub.s32 0, %v2423
  %v2425 = vrot.slane %v2410, %v2424
  %v2426 = vlaneseq
  %v2427 = vshrl.u32 %v2426, 7
  %v2428 = vsub.s32 0, %v2427
  %v2429 = vrot.slane %v2414, %v2428
  %v2430 = vlaneseq
  %v2431 = vshrl.u32 %v2430, 7
  %v2432 = vsub.s32 0, %v2431
  %v2433 = vrot.slane %v2418, %v2432
  %v2434 = vmul.f32 %v609, %v2425
  %v2435 = vmul.f32 %v609, %v2429
  %v2436 = vmul.f32 %v609, %v2433
  %v2437 = vmul.f32 %v613, %v2425
  %v2438 = vmul.f32 %v613, %v2429
  %v2439 = vmul.f32 %v613, %v2433
  %2446 = vrot.lane.b32.xlu0 %v2434, 112
  %v2447 = vpop.permute.xlu0 %2446
  %2448 = vrot.lane.b32.xlu0 %v2435, 112
  %v2449 = vpop.permute.xlu0 %2448
  %2450 = vrot.lane.b32.xlu0 %v2436, 112
  %v2451 = vpop.permute.xlu0 %2450
  %2452 = vrot.lane.b32.xlu0 %v2437, 112
  %v2453 = vpop.permute.xlu0 %2452
  %2454 = vrot.lane.b32.xlu0 %v2438, 112
  %v2455 = vpop.permute.xlu0 %2454
  %2456 = vrot.lane.b32.xlu0 %v2439, 112
  %v2457 = vpop.permute.xlu0 %2456
  %v2458 = vsel %vm668, %v2447, %v2449
  %v2459 = vsel %vm668, %v2449, %v2451
  %v2460 = vsel %vm668, %v2453, %v2455
  %v2461 = vsel %vm668, %v2455, %v2457
  %v2466 = vadd.f32 %v2399, %v2458
  %v2467 = vadd.f32 %v2400, %v2459
  %v2468 = vadd.f32 %v2401, %v2460
  %v2469 = vadd.f32 %v2402, %v2461
  %v2470 = vlaneseq
  %v2471 = vshrl.u32 %v2470, 7
  %v2472 = vsub.s32 1, %v2471
  %v2473 = vrot.slane %v2403, %v2472
  %v2474 = vlaneseq
  %v2475 = vshrl.u32 %v2474, 7
  %v2476 = vsub.s32 5, %v2475
  %v2477 = vrot.slane %v2403, %v2476
  %v2478 = vlaneseq
  %v2479 = vshrl.u32 %v2478, 7
  %v2480 = vsub.s32 1, %v2479
  %v2481 = vrot.slane %v2404, %v2480
  %v2485 = vlaneseq
  %v2486 = vshrl.u32 %v2485, 7
  %v2487 = vsub.s32 1, %v2486
  %v2488 = vrot.slane %v2473, %v2487
  %v2489 = vlaneseq
  %v2490 = vshrl.u32 %v2489, 7
  %v2491 = vsub.s32 1, %v2490
  %v2492 = vrot.slane %v2477, %v2491
  %v2493 = vlaneseq
  %v2494 = vshrl.u32 %v2493, 7
  %v2495 = vsub.s32 1, %v2494
  %v2496 = vrot.slane %v2481, %v2495
  %v2497 = vmul.f32 %v683, %v2488
  %v2498 = vmul.f32 %v683, %v2492
  %v2499 = vmul.f32 %v683, %v2496
  %v2500 = vmul.f32 %v687, %v2488
  %v2501 = vmul.f32 %v687, %v2492
  %v2502 = vmul.f32 %v687, %v2496
  %2509 = vrot.lane.b32.xlu0 %v2497, 112
  %v2510 = vpop.permute.xlu0 %2509
  %2511 = vrot.lane.b32.xlu0 %v2498, 112
  %v2512 = vpop.permute.xlu0 %2511
  %2513 = vrot.lane.b32.xlu0 %v2499, 112
  %v2514 = vpop.permute.xlu0 %2513
  %2515 = vrot.lane.b32.xlu0 %v2500, 112
  %v2516 = vpop.permute.xlu0 %2515
  %2517 = vrot.lane.b32.xlu0 %v2501, 112
  %v2518 = vpop.permute.xlu0 %2517
  %2519 = vrot.lane.b32.xlu0 %v2502, 112
  %v2520 = vpop.permute.xlu0 %2519
  %v2521 = vsel %vm668, %v2510, %v2512
  %v2522 = vsel %vm668, %v2512, %v2514
  %v2523 = vsel %vm668, %v2516, %v2518
  %v2524 = vsel %vm668, %v2518, %v2520
  %v2529 = vadd.f32 %v2466, %v2521
  %v2530 = vadd.f32 %v2467, %v2522
  %v2531 = vadd.f32 %v2468, %v2523
  %v2532 = vadd.f32 %v2469, %v2524
  %v2533 = vlaneseq
  %v2534 = vshrl.u32 %v2533, 7
  %v2535 = vsub.s32 2, %v2534
  %v2536 = vrot.slane %v2403, %v2535
  %v2537 = vlaneseq
  %v2538 = vshrl.u32 %v2537, 7
  %v2539 = vsub.s32 6, %v2538
  %v2540 = vrot.slane %v2403, %v2539
  %v2541 = vlaneseq
  %v2542 = vshrl.u32 %v2541, 7
  %v2543 = vsub.s32 2, %v2542
  %v2544 = vrot.slane %v2404, %v2543
  %v2548 = vlaneseq
  %v2549 = vshrl.u32 %v2548, 7
  %v2550 = vsub.s32 2, %v2549
  %v2551 = vrot.slane %v2536, %v2550
  %v2552 = vlaneseq
  %v2553 = vshrl.u32 %v2552, 7
  %v2554 = vsub.s32 2, %v2553
  %v2555 = vrot.slane %v2540, %v2554
  %v2556 = vlaneseq
  %v2557 = vshrl.u32 %v2556, 7
  %v2558 = vsub.s32 2, %v2557
  %v2559 = vrot.slane %v2544, %v2558
  %v2560 = vmul.f32 %v754, %v2551
  %v2561 = vmul.f32 %v754, %v2555
  %v2562 = vmul.f32 %v754, %v2559
  %v2563 = vmul.f32 %v758, %v2551
  %v2564 = vmul.f32 %v758, %v2555
  %v2565 = vmul.f32 %v758, %v2559
  %2572 = vrot.lane.b32.xlu0 %v2560, 112
  %v2573 = vpop.permute.xlu0 %2572
  %2574 = vrot.lane.b32.xlu0 %v2561, 112
  %v2575 = vpop.permute.xlu0 %2574
  %2576 = vrot.lane.b32.xlu0 %v2562, 112
  %v2577 = vpop.permute.xlu0 %2576
  %2578 = vrot.lane.b32.xlu0 %v2563, 112
  %v2579 = vpop.permute.xlu0 %2578
  %2580 = vrot.lane.b32.xlu0 %v2564, 112
  %v2581 = vpop.permute.xlu0 %2580
  %2582 = vrot.lane.b32.xlu0 %v2565, 112
  %v2583 = vpop.permute.xlu0 %2582
  %v2584 = vsel %vm668, %v2573, %v2575
  %v2585 = vsel %vm668, %v2575, %v2577
  %v2586 = vsel %vm668, %v2579, %v2581
  %v2587 = vsel %vm668, %v2581, %v2583
  %v2592 = vadd.f32 %v2529, %v2584
  %v2593 = vadd.f32 %v2530, %v2585
  %v2594 = vadd.f32 %v2531, %v2586
  %v2595 = vadd.f32 %v2532, %v2587
  %v2596 = vmul.f32 %v827, %v2039
  %v2597 = vmul.f32 %v827, %v2043
  %v2598 = vmul.f32 %v827, %v2047
  %v2599 = vmul.f32 %v831, %v2039
  %v2600 = vmul.f32 %v831, %v2043
  %v2601 = vmul.f32 %v831, %v2047
  %2608 = vrot.lane.b32.xlu0 %v2596, 111
  %v2609 = vpop.permute.xlu0 %2608
  %2610 = vrot.lane.b32.xlu0 %v2597, 111
  %v2611 = vpop.permute.xlu0 %2610
  %2612 = vrot.lane.b32.xlu0 %v2598, 111
  %v2613 = vpop.permute.xlu0 %2612
  %2614 = vrot.lane.b32.xlu0 %v2599, 111
  %v2615 = vpop.permute.xlu0 %2614
  %2616 = vrot.lane.b32.xlu0 %v2600, 111
  %v2617 = vpop.permute.xlu0 %2616
  %2618 = vrot.lane.b32.xlu0 %v2601, 111
  %v2619 = vpop.permute.xlu0 %2618
  %v2620 = vsel %vm886, %v2609, %v2611
  %v2621 = vsel %vm886, %v2611, %v2613
  %v2622 = vsel %vm886, %v2615, %v2617
  %v2623 = vsel %vm886, %v2617, %v2619
  %v2628 = vadd.f32 %v2592, %v2620
  %v2629 = vadd.f32 %v2593, %v2621
  %v2630 = vadd.f32 %v2594, %v2622
  %v2631 = vadd.f32 %v2595, %v2623
  %v2632 = vmul.f32 %v901, %v2102
  %v2633 = vmul.f32 %v901, %v2106
  %v2634 = vmul.f32 %v901, %v2110
  %v2635 = vmul.f32 %v905, %v2102
  %v2636 = vmul.f32 %v905, %v2106
  %v2637 = vmul.f32 %v905, %v2110
  %2644 = vrot.lane.b32.xlu0 %v2632, 111
  %v2645 = vpop.permute.xlu0 %2644
  %2646 = vrot.lane.b32.xlu0 %v2633, 111
  %v2647 = vpop.permute.xlu0 %2646
  %2648 = vrot.lane.b32.xlu0 %v2634, 111
  %v2649 = vpop.permute.xlu0 %2648
  %2650 = vrot.lane.b32.xlu0 %v2635, 111
  %v2651 = vpop.permute.xlu0 %2650
  %2652 = vrot.lane.b32.xlu0 %v2636, 111
  %v2653 = vpop.permute.xlu0 %2652
  %2654 = vrot.lane.b32.xlu0 %v2637, 111
  %v2655 = vpop.permute.xlu0 %2654
  %v2656 = vsel %vm886, %v2645, %v2647
  %v2657 = vsel %vm886, %v2647, %v2649
  %v2658 = vsel %vm886, %v2651, %v2653
  %v2659 = vsel %vm886, %v2653, %v2655
  %v2664 = vadd.f32 %v2628, %v2656
  %v2665 = vadd.f32 %v2629, %v2657
  %v2666 = vadd.f32 %v2630, %v2658
  %v2667 = vadd.f32 %v2631, %v2659
  %v2668 = vmul.f32 %v972, %v2165
  %v2669 = vmul.f32 %v972, %v2169
  %v2670 = vmul.f32 %v972, %v2173
  %v2671 = vmul.f32 %v976, %v2165
  %v2672 = vmul.f32 %v976, %v2169
  %v2673 = vmul.f32 %v976, %v2173
  %2680 = vrot.lane.b32.xlu0 %v2668, 111
  %v2681 = vpop.permute.xlu0 %2680
  %2682 = vrot.lane.b32.xlu0 %v2669, 111
  %v2683 = vpop.permute.xlu0 %2682
  %2684 = vrot.lane.b32.xlu0 %v2670, 111
  %v2685 = vpop.permute.xlu0 %2684
  %2686 = vrot.lane.b32.xlu0 %v2671, 111
  %v2687 = vpop.permute.xlu0 %2686
  %2688 = vrot.lane.b32.xlu0 %v2672, 111
  %v2689 = vpop.permute.xlu0 %2688
  %2690 = vrot.lane.b32.xlu0 %v2673, 111
  %v2691 = vpop.permute.xlu0 %2690
  %v2692 = vsel %vm886, %v2681, %v2683
  %v2693 = vsel %vm886, %v2683, %v2685
  %v2694 = vsel %vm886, %v2687, %v2689
  %v2695 = vsel %vm886, %v2689, %v2691
  %v2700 = vadd.f32 %v2664, %v2692
  %v2701 = vadd.f32 %v2665, %v2693
  %v2702 = vadd.f32 %v2666, %v2694
  %v2703 = vadd.f32 %v2667, %v2695
  %v2704 = vmul.f32 %v1937, %v1045
  %v2705 = vmul.f32 %v2018, %v1043
  %v2708 = vlaneseq
  %v2709 = vshrl.u32 %v2708, 7
  %v2710 = vsub.s32 0, %v2709
  %v2711 = vrot.slane %v2704, %v2710
  %v2712 = vlaneseq
  %v2713 = vshrl.u32 %v2712, 7
  %v2714 = vsub.s32 4, %v2713
  %v2715 = vrot.slane %v2704, %v2714
  %v2716 = vlaneseq
  %v2717 = vshrl.u32 %v2716, 7
  %v2718 = vsub.s32 0, %v2717
  %v2719 = vrot.slane %v2705, %v2718
  %v2723 = vlaneseq
  %v2724 = vshrl.u32 %v2723, 7
  %v2725 = vsub.s32 0, %v2724
  %v2726 = vrot.slane %v2711, %v2725
  %v2727 = vlaneseq
  %v2728 = vshrl.u32 %v2727, 7
  %v2729 = vsub.s32 0, %v2728
  %v2730 = vrot.slane %v2715, %v2729
  %v2731 = vlaneseq
  %v2732 = vshrl.u32 %v2731, 7
  %v2733 = vsub.s32 0, %v2732
  %v2734 = vrot.slane %v2719, %v2733
  %v2735 = vmul.f32 %v1052, %v2726
  %v2736 = vmul.f32 %v1052, %v2730
  %v2737 = vmul.f32 %v1052, %v2734
  %v2738 = vmul.f32 %v1056, %v2726
  %v2739 = vmul.f32 %v1056, %v2730
  %v2740 = vmul.f32 %v1056, %v2734
  %2747 = vrot.lane.b32.xlu0 %v2735, 110
  %v2748 = vpop.permute.xlu0 %2747
  %2749 = vrot.lane.b32.xlu0 %v2736, 110
  %v2750 = vpop.permute.xlu0 %2749
  %2751 = vrot.lane.b32.xlu0 %v2737, 110
  %v2752 = vpop.permute.xlu0 %2751
  %2753 = vrot.lane.b32.xlu0 %v2738, 110
  %v2754 = vpop.permute.xlu0 %2753
  %2755 = vrot.lane.b32.xlu0 %v2739, 110
  %v2756 = vpop.permute.xlu0 %2755
  %2757 = vrot.lane.b32.xlu0 %v2740, 110
  %v2758 = vpop.permute.xlu0 %2757
  %v2759 = vsel %vm1111, %v2748, %v2750
  %v2760 = vsel %vm1111, %v2750, %v2752
  %v2761 = vsel %vm1111, %v2754, %v2756
  %v2762 = vsel %vm1111, %v2756, %v2758
  %v2767 = vadd.f32 %v2700, %v2759
  %v2768 = vadd.f32 %v2701, %v2760
  %v2769 = vadd.f32 %v2702, %v2761
  %v2770 = vadd.f32 %v2703, %v2762
  %v2771 = vlaneseq
  %v2772 = vshrl.u32 %v2771, 7
  %v2773 = vsub.s32 1, %v2772
  %v2774 = vrot.slane %v2704, %v2773
  %v2775 = vlaneseq
  %v2776 = vshrl.u32 %v2775, 7
  %v2777 = vsub.s32 5, %v2776
  %v2778 = vrot.slane %v2704, %v2777
  %v2779 = vlaneseq
  %v2780 = vshrl.u32 %v2779, 7
  %v2781 = vsub.s32 1, %v2780
  %v2782 = vrot.slane %v2705, %v2781
  %v2786 = vlaneseq
  %v2787 = vshrl.u32 %v2786, 7
  %v2788 = vsub.s32 1, %v2787
  %v2789 = vrot.slane %v2774, %v2788
  %v2790 = vlaneseq
  %v2791 = vshrl.u32 %v2790, 7
  %v2792 = vsub.s32 1, %v2791
  %v2793 = vrot.slane %v2778, %v2792
  %v2794 = vlaneseq
  %v2795 = vshrl.u32 %v2794, 7
  %v2796 = vsub.s32 1, %v2795
  %v2797 = vrot.slane %v2782, %v2796
  %v2798 = vmul.f32 %v1126, %v2789
  %v2799 = vmul.f32 %v1126, %v2793
  %v2800 = vmul.f32 %v1126, %v2797
  %v2801 = vmul.f32 %v1130, %v2789
  %v2802 = vmul.f32 %v1130, %v2793
  %v2803 = vmul.f32 %v1130, %v2797
  %2810 = vrot.lane.b32.xlu0 %v2798, 110
  %v2811 = vpop.permute.xlu0 %2810
  %2812 = vrot.lane.b32.xlu0 %v2799, 110
  %v2813 = vpop.permute.xlu0 %2812
  %2814 = vrot.lane.b32.xlu0 %v2800, 110
  %v2815 = vpop.permute.xlu0 %2814
  %2816 = vrot.lane.b32.xlu0 %v2801, 110
  %v2817 = vpop.permute.xlu0 %2816
  %2818 = vrot.lane.b32.xlu0 %v2802, 110
  %v2819 = vpop.permute.xlu0 %2818
  %2820 = vrot.lane.b32.xlu0 %v2803, 110
  %v2821 = vpop.permute.xlu0 %2820
  %v2822 = vsel %vm1111, %v2811, %v2813
  %v2823 = vsel %vm1111, %v2813, %v2815
  %v2824 = vsel %vm1111, %v2817, %v2819
  %v2825 = vsel %vm1111, %v2819, %v2821
  %v2830 = vadd.f32 %v2767, %v2822
  %v2831 = vadd.f32 %v2768, %v2823
  %v2832 = vadd.f32 %v2769, %v2824
  %v2833 = vadd.f32 %v2770, %v2825
  %v2834 = vlaneseq
  %v2835 = vshrl.u32 %v2834, 7
  %v2836 = vsub.s32 2, %v2835
  %v2837 = vrot.slane %v2704, %v2836
  %v2838 = vlaneseq
  %v2839 = vshrl.u32 %v2838, 7
  %v2840 = vsub.s32 6, %v2839
  %v2841 = vrot.slane %v2704, %v2840
  %v2842 = vlaneseq
  %v2843 = vshrl.u32 %v2842, 7
  %v2844 = vsub.s32 2, %v2843
  %v2845 = vrot.slane %v2705, %v2844
  %v2849 = vlaneseq
  %v2850 = vshrl.u32 %v2849, 7
  %v2851 = vsub.s32 2, %v2850
  %v2852 = vrot.slane %v2837, %v2851
  %v2853 = vlaneseq
  %v2854 = vshrl.u32 %v2853, 7
  %v2855 = vsub.s32 2, %v2854
  %v2856 = vrot.slane %v2841, %v2855
  %v2857 = vlaneseq
  %v2858 = vshrl.u32 %v2857, 7
  %v2859 = vsub.s32 2, %v2858
  %v2860 = vrot.slane %v2845, %v2859
  %v2861 = vmul.f32 %v1197, %v2852
  %v2862 = vmul.f32 %v1197, %v2856
  %v2863 = vmul.f32 %v1197, %v2860
  %v2864 = vmul.f32 %v1201, %v2852
  %v2865 = vmul.f32 %v1201, %v2856
  %v2866 = vmul.f32 %v1201, %v2860
  %2873 = vrot.lane.b32.xlu0 %v2861, 110
  %v2874 = vpop.permute.xlu0 %2873
  %2875 = vrot.lane.b32.xlu0 %v2862, 110
  %v2876 = vpop.permute.xlu0 %2875
  %2877 = vrot.lane.b32.xlu0 %v2863, 110
  %v2878 = vpop.permute.xlu0 %2877
  %2879 = vrot.lane.b32.xlu0 %v2864, 110
  %v2880 = vpop.permute.xlu0 %2879
  %2881 = vrot.lane.b32.xlu0 %v2865, 110
  %v2882 = vpop.permute.xlu0 %2881
  %2883 = vrot.lane.b32.xlu0 %v2866, 110
  %v2884 = vpop.permute.xlu0 %2883
  %v2885 = vsel %vm1111, %v2874, %v2876
  %v2886 = vsel %vm1111, %v2876, %v2878
  %v2887 = vsel %vm1111, %v2880, %v2882
  %v2888 = vsel %vm1111, %v2882, %v2884
  %v2893 = vadd.f32 %v2830, %v2885
  %v2894 = vadd.f32 %v2831, %v2886
  %v2895 = vadd.f32 %v2832, %v2887
  %v2896 = vadd.f32 %v2833, %v2888
  %v2897 = vmul.f32 %v1937, %v1272
  %v2898 = vmul.f32 %v2018, %v1270
  %v2901 = vlaneseq
  %v2902 = vshrl.u32 %v2901, 7
  %v2903 = vsub.s32 0, %v2902
  %v2904 = vrot.slane %v2897, %v2903
  %v2905 = vlaneseq
  %v2906 = vshrl.u32 %v2905, 7
  %v2907 = vsub.s32 4, %v2906
  %v2908 = vrot.slane %v2897, %v2907
  %v2909 = vlaneseq
  %v2910 = vshrl.u32 %v2909, 7
  %v2911 = vsub.s32 0, %v2910
  %v2912 = vrot.slane %v2898, %v2911
  %v2916 = vlaneseq
  %v2917 = vshrl.u32 %v2916, 7
  %v2918 = vsub.s32 0, %v2917
  %v2919 = vrot.slane %v2904, %v2918
  %v2920 = vlaneseq
  %v2921 = vshrl.u32 %v2920, 7
  %v2922 = vsub.s32 0, %v2921
  %v2923 = vrot.slane %v2908, %v2922
  %v2924 = vlaneseq
  %v2925 = vshrl.u32 %v2924, 7
  %v2926 = vsub.s32 0, %v2925
  %v2927 = vrot.slane %v2912, %v2926
  %v2928 = vmul.f32 %v1279, %v2919
  %v2929 = vmul.f32 %v1279, %v2923
  %v2930 = vmul.f32 %v1279, %v2927
  %v2931 = vmul.f32 %v1283, %v2919
  %v2932 = vmul.f32 %v1283, %v2923
  %v2933 = vmul.f32 %v1283, %v2927
  %2940 = vrot.lane.b32.xlu0 %v2928, 96
  %v2941 = vpop.permute.xlu0 %2940
  %2942 = vrot.lane.b32.xlu0 %v2929, 96
  %v2943 = vpop.permute.xlu0 %2942
  %2944 = vrot.lane.b32.xlu0 %v2930, 96
  %v2945 = vpop.permute.xlu0 %2944
  %2946 = vrot.lane.b32.xlu0 %v2931, 96
  %v2947 = vpop.permute.xlu0 %2946
  %2948 = vrot.lane.b32.xlu0 %v2932, 96
  %v2949 = vpop.permute.xlu0 %2948
  %2950 = vrot.lane.b32.xlu0 %v2933, 96
  %v2951 = vpop.permute.xlu0 %2950
  %v2952 = vsel %vm1338, %v2941, %v2943
  %v2953 = vsel %vm1338, %v2943, %v2945
  %v2954 = vsel %vm1338, %v2947, %v2949
  %v2955 = vsel %vm1338, %v2949, %v2951
  %v2960 = vadd.f32 %v2893, %v2952
  %v2961 = vadd.f32 %v2894, %v2953
  %v2962 = vadd.f32 %v2895, %v2954
  %v2963 = vadd.f32 %v2896, %v2955
  %v2964 = vlaneseq
  %v2965 = vshrl.u32 %v2964, 7
  %v2966 = vsub.s32 1, %v2965
  %v2967 = vrot.slane %v2897, %v2966
  %v2968 = vlaneseq
  %v2969 = vshrl.u32 %v2968, 7
  %v2970 = vsub.s32 5, %v2969
  %v2971 = vrot.slane %v2897, %v2970
  %v2972 = vlaneseq
  %v2973 = vshrl.u32 %v2972, 7
  %v2974 = vsub.s32 1, %v2973
  %v2975 = vrot.slane %v2898, %v2974
  %v2979 = vlaneseq
  %v2980 = vshrl.u32 %v2979, 7
  %v2981 = vsub.s32 1, %v2980
  %v2982 = vrot.slane %v2967, %v2981
  %v2983 = vlaneseq
  %v2984 = vshrl.u32 %v2983, 7
  %v2985 = vsub.s32 1, %v2984
  %v2986 = vrot.slane %v2971, %v2985
  %v2987 = vlaneseq
  %v2988 = vshrl.u32 %v2987, 7
  %v2989 = vsub.s32 1, %v2988
  %v2990 = vrot.slane %v2975, %v2989
  %v2991 = vmul.f32 %v1353, %v2982
  %v2992 = vmul.f32 %v1353, %v2986
  %v2993 = vmul.f32 %v1353, %v2990
  %v2994 = vmul.f32 %v1357, %v2982
  %v2995 = vmul.f32 %v1357, %v2986
  %v2996 = vmul.f32 %v1357, %v2990
  %3003 = vrot.lane.b32.xlu0 %v2991, 96
  %v3004 = vpop.permute.xlu0 %3003
  %3005 = vrot.lane.b32.xlu0 %v2992, 96
  %v3006 = vpop.permute.xlu0 %3005
  %3007 = vrot.lane.b32.xlu0 %v2993, 96
  %v3008 = vpop.permute.xlu0 %3007
  %3009 = vrot.lane.b32.xlu0 %v2994, 96
  %v3010 = vpop.permute.xlu0 %3009
  %3011 = vrot.lane.b32.xlu0 %v2995, 96
  %v3012 = vpop.permute.xlu0 %3011
  %3013 = vrot.lane.b32.xlu0 %v2996, 96
  %v3014 = vpop.permute.xlu0 %3013
  %v3015 = vsel %vm1338, %v3004, %v3006
  %v3016 = vsel %vm1338, %v3006, %v3008
  %v3017 = vsel %vm1338, %v3010, %v3012
  %v3018 = vsel %vm1338, %v3012, %v3014
  %v3023 = vadd.f32 %v2960, %v3015
  %v3024 = vadd.f32 %v2961, %v3016
  %v3025 = vadd.f32 %v2962, %v3017
  %v3026 = vadd.f32 %v2963, %v3018
  %v3027 = vlaneseq
  %v3028 = vshrl.u32 %v3027, 7
  %v3029 = vsub.s32 2, %v3028
  %v3030 = vrot.slane %v2897, %v3029
  %v3031 = vlaneseq
  %v3032 = vshrl.u32 %v3031, 7
  %v3033 = vsub.s32 6, %v3032
  %v3034 = vrot.slane %v2897, %v3033
  %v3035 = vlaneseq
  %v3036 = vshrl.u32 %v3035, 7
  %v3037 = vsub.s32 2, %v3036
  %v3038 = vrot.slane %v2898, %v3037
  %v3042 = vlaneseq
  %v3043 = vshrl.u32 %v3042, 7
  %v3044 = vsub.s32 2, %v3043
  %v3045 = vrot.slane %v3030, %v3044
  %v3046 = vlaneseq
  %v3047 = vshrl.u32 %v3046, 7
  %v3048 = vsub.s32 2, %v3047
  %v3049 = vrot.slane %v3034, %v3048
  %v3050 = vlaneseq
  %v3051 = vshrl.u32 %v3050, 7
  %v3052 = vsub.s32 2, %v3051
  %v3053 = vrot.slane %v3038, %v3052
  %v3054 = vmul.f32 %v1424, %v3045
  %v3055 = vmul.f32 %v1424, %v3049
  %v3056 = vmul.f32 %v1424, %v3053
  %v3057 = vmul.f32 %v1428, %v3045
  %v3058 = vmul.f32 %v1428, %v3049
  %v3059 = vmul.f32 %v1428, %v3053
  %3066 = vrot.lane.b32.xlu0 %v3054, 96
  %v3067 = vpop.permute.xlu0 %3066
  %3068 = vrot.lane.b32.xlu0 %v3055, 96
  %v3069 = vpop.permute.xlu0 %3068
  %3070 = vrot.lane.b32.xlu0 %v3056, 96
  %v3071 = vpop.permute.xlu0 %3070
  %3072 = vrot.lane.b32.xlu0 %v3057, 96
  %v3073 = vpop.permute.xlu0 %3072
  %3074 = vrot.lane.b32.xlu0 %v3058, 96
  %v3075 = vpop.permute.xlu0 %3074
  %3076 = vrot.lane.b32.xlu0 %v3059, 96
  %v3077 = vpop.permute.xlu0 %3076
  %v3078 = vsel %vm1338, %v3067, %v3069
  %v3079 = vsel %vm1338, %v3069, %v3071
  %v3080 = vsel %vm1338, %v3073, %v3075
  %v3081 = vsel %vm1338, %v3075, %v3077
  %v3086 = vadd.f32 %v3023, %v3078
  %v3087 = vadd.f32 %v3024, %v3079
  %v3088 = vadd.f32 %v3025, %v3080
  %v3089 = vadd.f32 %v3026, %v3081
  %v3090 = vmul.f32 %v1497, %v2039
  %v3091 = vmul.f32 %v1497, %v2043
  %v3092 = vmul.f32 %v1497, %v2047
  %v3093 = vmul.f32 %v1501, %v2039
  %v3094 = vmul.f32 %v1501, %v2043
  %v3095 = vmul.f32 %v1501, %v2047
  %3102 = vrot.lane.b32.xlu0 %v3090, 95
  %v3103 = vpop.permute.xlu0 %3102
  %3104 = vrot.lane.b32.xlu0 %v3091, 95
  %v3105 = vpop.permute.xlu0 %3104
  %3106 = vrot.lane.b32.xlu0 %v3092, 95
  %v3107 = vpop.permute.xlu0 %3106
  %3108 = vrot.lane.b32.xlu0 %v3093, 95
  %v3109 = vpop.permute.xlu0 %3108
  %3110 = vrot.lane.b32.xlu0 %v3094, 95
  %v3111 = vpop.permute.xlu0 %3110
  %3112 = vrot.lane.b32.xlu0 %v3095, 95
  %v3113 = vpop.permute.xlu0 %3112
  %v3114 = vsel %vm1556, %v3103, %v3105
  %v3115 = vsel %vm1556, %v3105, %v3107
  %v3116 = vsel %vm1556, %v3109, %v3111
  %v3117 = vsel %vm1556, %v3111, %v3113
  %v3122 = vadd.f32 %v3086, %v3114
  %v3123 = vadd.f32 %v3087, %v3115
  %v3124 = vadd.f32 %v3088, %v3116
  %v3125 = vadd.f32 %v3089, %v3117
  %v3126 = vmul.f32 %v1571, %v2102
  %v3127 = vmul.f32 %v1571, %v2106
  %v3128 = vmul.f32 %v1571, %v2110
  %v3129 = vmul.f32 %v1575, %v2102
  %v3130 = vmul.f32 %v1575, %v2106
  %v3131 = vmul.f32 %v1575, %v2110
  %3138 = vrot.lane.b32.xlu0 %v3126, 95
  %v3139 = vpop.permute.xlu0 %3138
  %3140 = vrot.lane.b32.xlu0 %v3127, 95
  %v3141 = vpop.permute.xlu0 %3140
  %3142 = vrot.lane.b32.xlu0 %v3128, 95
  %v3143 = vpop.permute.xlu0 %3142
  %3144 = vrot.lane.b32.xlu0 %v3129, 95
  %v3145 = vpop.permute.xlu0 %3144
  %3146 = vrot.lane.b32.xlu0 %v3130, 95
  %v3147 = vpop.permute.xlu0 %3146
  %3148 = vrot.lane.b32.xlu0 %v3131, 95
  %v3149 = vpop.permute.xlu0 %3148
  %v3150 = vsel %vm1556, %v3139, %v3141
  %v3151 = vsel %vm1556, %v3141, %v3143
  %v3152 = vsel %vm1556, %v3145, %v3147
  %v3153 = vsel %vm1556, %v3147, %v3149
  %v3158 = vadd.f32 %v3122, %v3150
  %v3159 = vadd.f32 %v3123, %v3151
  %v3160 = vadd.f32 %v3124, %v3152
  %v3161 = vadd.f32 %v3125, %v3153
  %v3162 = vmul.f32 %v1642, %v2165
  %v3163 = vmul.f32 %v1642, %v2169
  %v3164 = vmul.f32 %v1642, %v2173
  %v3165 = vmul.f32 %v1646, %v2165
  %v3166 = vmul.f32 %v1646, %v2169
  %v3167 = vmul.f32 %v1646, %v2173
  %3174 = vrot.lane.b32.xlu0 %v3162, 95
  %v3175 = vpop.permute.xlu0 %3174
  %3176 = vrot.lane.b32.xlu0 %v3163, 95
  %v3177 = vpop.permute.xlu0 %3176
  %3178 = vrot.lane.b32.xlu0 %v3164, 95
  %v3179 = vpop.permute.xlu0 %3178
  %3180 = vrot.lane.b32.xlu0 %v3165, 95
  %v3181 = vpop.permute.xlu0 %3180
  %3182 = vrot.lane.b32.xlu0 %v3166, 95
  %v3183 = vpop.permute.xlu0 %3182
  %3184 = vrot.lane.b32.xlu0 %v3167, 95
  %v3185 = vpop.permute.xlu0 %3184
  %v3186 = vsel %vm1556, %v3175, %v3177
  %v3187 = vsel %vm1556, %v3177, %v3179
  %v3188 = vsel %vm1556, %v3181, %v3183
  %v3189 = vsel %vm1556, %v3183, %v3185
  %v3194 = vadd.f32 %v3158, %v3186
  %v3195 = vadd.f32 %v3159, %v3187
  %v3196 = vadd.f32 %v3160, %v3188
  %v3197 = vadd.f32 %v3161, %v3189
  %v3198 = vmul.f32 %v1937, %v1715
  %v3199 = vmul.f32 %v2018, %v1713
  %v3202 = vlaneseq
  %v3203 = vshrl.u32 %v3202, 7
  %v3204 = vsub.s32 0, %v3203
  %v3205 = vrot.slane %v3198, %v3204
  %v3206 = vlaneseq
  %v3207 = vshrl.u32 %v3206, 7
  %v3208 = vsub.s32 4, %v3207
  %v3209 = vrot.slane %v3198, %v3208
  %v3210 = vlaneseq
  %v3211 = vshrl.u32 %v3210, 7
  %v3212 = vsub.s32 0, %v3211
  %v3213 = vrot.slane %v3199, %v3212
  %v3217 = vlaneseq
  %v3218 = vshrl.u32 %v3217, 7
  %v3219 = vsub.s32 0, %v3218
  %v3220 = vrot.slane %v3205, %v3219
  %v3221 = vlaneseq
  %v3222 = vshrl.u32 %v3221, 7
  %v3223 = vsub.s32 0, %v3222
  %v3224 = vrot.slane %v3209, %v3223
  %v3225 = vlaneseq
  %v3226 = vshrl.u32 %v3225, 7
  %v3227 = vsub.s32 0, %v3226
  %v3228 = vrot.slane %v3213, %v3227
  %v3229 = vmul.f32 %v1722, %v3220
  %v3230 = vmul.f32 %v1722, %v3224
  %v3231 = vmul.f32 %v1722, %v3228
  %v3232 = vmul.f32 %v1726, %v3220
  %v3233 = vmul.f32 %v1726, %v3224
  %v3234 = vmul.f32 %v1726, %v3228
  %3241 = vrot.lane.b32.xlu0 %v3229, 94
  %v3242 = vpop.permute.xlu0 %3241
  %3243 = vrot.lane.b32.xlu0 %v3230, 94
  %v3244 = vpop.permute.xlu0 %3243
  %3245 = vrot.lane.b32.xlu0 %v3231, 94
  %v3246 = vpop.permute.xlu0 %3245
  %3247 = vrot.lane.b32.xlu0 %v3232, 94
  %v3248 = vpop.permute.xlu0 %3247
  %3249 = vrot.lane.b32.xlu0 %v3233, 94
  %v3250 = vpop.permute.xlu0 %3249
  %3251 = vrot.lane.b32.xlu0 %v3234, 94
  %v3252 = vpop.permute.xlu0 %3251
  %v3253 = vsel %vm1781, %v3242, %v3244
  %v3254 = vsel %vm1781, %v3244, %v3246
  %v3255 = vsel %vm1781, %v3248, %v3250
  %v3256 = vsel %vm1781, %v3250, %v3252
  %v3261 = vadd.f32 %v3194, %v3253
  %v3262 = vadd.f32 %v3195, %v3254
  %v3263 = vadd.f32 %v3196, %v3255
  %v3264 = vadd.f32 %v3197, %v3256
  %v3265 = vlaneseq
  %v3266 = vshrl.u32 %v3265, 7
  %v3267 = vsub.s32 1, %v3266
  %v3268 = vrot.slane %v3198, %v3267
  %v3269 = vlaneseq
  %v3270 = vshrl.u32 %v3269, 7
  %v3271 = vsub.s32 5, %v3270
  %v3272 = vrot.slane %v3198, %v3271
  %v3273 = vlaneseq
  %v3274 = vshrl.u32 %v3273, 7
  %v3275 = vsub.s32 1, %v3274
  %v3276 = vrot.slane %v3199, %v3275
  %v3280 = vlaneseq
  %v3281 = vshrl.u32 %v3280, 7
  %v3282 = vsub.s32 1, %v3281
  %v3283 = vrot.slane %v3268, %v3282
  %v3284 = vlaneseq
  %v3285 = vshrl.u32 %v3284, 7
  %v3286 = vsub.s32 1, %v3285
  %v3287 = vrot.slane %v3272, %v3286
  %v3288 = vlaneseq
  %v3289 = vshrl.u32 %v3288, 7
  %v3290 = vsub.s32 1, %v3289
  %v3291 = vrot.slane %v3276, %v3290
  %v3292 = vmul.f32 %v1796, %v3283
  %v3293 = vmul.f32 %v1796, %v3287
  %v3294 = vmul.f32 %v1796, %v3291
  %v3295 = vmul.f32 %v1800, %v3283
  %v3296 = vmul.f32 %v1800, %v3287
  %v3297 = vmul.f32 %v1800, %v3291
  %3304 = vrot.lane.b32.xlu0 %v3292, 94
  %v3305 = vpop.permute.xlu0 %3304
  %3306 = vrot.lane.b32.xlu0 %v3293, 94
  %v3307 = vpop.permute.xlu0 %3306
  %3308 = vrot.lane.b32.xlu0 %v3294, 94
  %v3309 = vpop.permute.xlu0 %3308
  %3310 = vrot.lane.b32.xlu0 %v3295, 94
  %v3311 = vpop.permute.xlu0 %3310
  %3312 = vrot.lane.b32.xlu0 %v3296, 94
  %v3313 = vpop.permute.xlu0 %3312
  %3314 = vrot.lane.b32.xlu0 %v3297, 94
  %v3315 = vpop.permute.xlu0 %3314
  %v3316 = vsel %vm1781, %v3305, %v3307
  %v3317 = vsel %vm1781, %v3307, %v3309
  %v3318 = vsel %vm1781, %v3311, %v3313
  %v3319 = vsel %vm1781, %v3313, %v3315
  %v3324 = vadd.f32 %v3261, %v3316
  %v3325 = vadd.f32 %v3262, %v3317
  %v3326 = vadd.f32 %v3263, %v3318
  %v3327 = vadd.f32 %v3264, %v3319
  %v3328 = vlaneseq
  %v3329 = vshrl.u32 %v3328, 7
  %v3330 = vsub.s32 2, %v3329
  %v3331 = vrot.slane %v3198, %v3330
  %v3332 = vlaneseq
  %v3333 = vshrl.u32 %v3332, 7
  %v3334 = vsub.s32 6, %v3333
  %v3335 = vrot.slane %v3198, %v3334
  %v3336 = vlaneseq
  %v3337 = vshrl.u32 %v3336, 7
  %v3338 = vsub.s32 2, %v3337
  %v3339 = vrot.slane %v3199, %v3338
  %v3343 = vlaneseq
  %v3344 = vshrl.u32 %v3343, 7
  %v3345 = vsub.s32 2, %v3344
  %v3346 = vrot.slane %v3331, %v3345
  %v3347 = vlaneseq
  %v3348 = vshrl.u32 %v3347, 7
  %v3349 = vsub.s32 2, %v3348
  %v3350 = vrot.slane %v3335, %v3349
  %v3351 = vlaneseq
  %v3352 = vshrl.u32 %v3351, 7
  %v3353 = vsub.s32 2, %v3352
  %v3354 = vrot.slane %v3339, %v3353
  %v3355 = vmul.f32 %v1867, %v3346
  %v3356 = vmul.f32 %v1867, %v3350
  %v3357 = vmul.f32 %v1867, %v3354
  %v3358 = vmul.f32 %v1871, %v3346
  %v3359 = vmul.f32 %v1871, %v3350
  %v3360 = vmul.f32 %v1871, %v3354
  %3367 = vrot.lane.b32.xlu0 %v3355, 94
  %v3368 = vpop.permute.xlu0 %3367
  %3369 = vrot.lane.b32.xlu0 %v3356, 94
  %v3370 = vpop.permute.xlu0 %3369
  %3371 = vrot.lane.b32.xlu0 %v3357, 94
  %v3372 = vpop.permute.xlu0 %3371
  %3373 = vrot.lane.b32.xlu0 %v3358, 94
  %v3374 = vpop.permute.xlu0 %3373
  %3375 = vrot.lane.b32.xlu0 %v3359, 94
  %v3376 = vpop.permute.xlu0 %3375
  %3377 = vrot.lane.b32.xlu0 %v3360, 94
  %v3378 = vpop.permute.xlu0 %3377
  %v3379 = vsel %vm1781, %v3368, %v3370
  %v3380 = vsel %vm1781, %v3370, %v3372
  %v3381 = vsel %vm1781, %v3374, %v3376
  %v3382 = vsel %vm1781, %v3376, %v3378
  %v3387 = vadd.f32 %v3324, %v3379
  %v3388 = vadd.f32 %v3325, %v3380
  %v3389 = vadd.f32 %v3326, %v3381
  %v3390 = vadd.f32 %v3327, %v3382
  %v3391 = vadd.f32 %v1932, %v1933
  %3392 = vadd.xlane.f32.xlu0 %v3391
  %v3393 = vpop.xlane.xlu0 %3392
  %v3394 = vadd.f32 %v1934, %v1935
  %3395 = vadd.xlane.f32.xlu0 %v3394
  %v3396 = vpop.xlane.xlu0 %3395
  %v3397 = vadd.f32 %v3387, %v3388
  %3398 = vadd.xlane.f32.xlu0 %v3397
  %v3399 = vpop.xlane.xlu0 %3398
  %v3400 = vadd.f32 %v3389, %v3390
  %3401 = vadd.xlane.f32.xlu0 %v3400
  %v3402 = vpop.xlane.xlu0 %3401
  %v3403 = vadd.f32 %v3393, %v3399
  %v3404 = vadd.f32 %v3396, %v3402
  %v3405 = vmul.f32 %v3403, 0.001953125
  %v3406 = vmul.f32 %v3404, 0.001953125
  %v3407 = vsub.f32 %v1932, %v3405
  %v3408 = vsub.f32 %v1933, %v3405
  %v3409 = vsub.f32 %v1934, %v3406
  %v3410 = vsub.f32 %v1935, %v3406
  %v3411 = vsub.f32 %v3387, %v3405
  %v3412 = vsub.f32 %v3388, %v3405
  %v3413 = vsub.f32 %v3389, %v3406
  %v3414 = vsub.f32 %v3390, %v3406
  %v3415 = vmul.f32 %v3407, %v3407
  %v3416 = vmul.f32 %v3408, %v3408
  %v3417 = vmul.f32 %v3409, %v3409
  %v3418 = vmul.f32 %v3410, %v3410
  %v3419 = vadd.f32 %v3415, %v3416
  %3420 = vadd.xlane.f32.xlu0 %v3419
  %v3421 = vpop.xlane.xlu0 %3420
  %v3422 = vadd.f32 %v3417, %v3418
  %3423 = vadd.xlane.f32.xlu0 %v3422
  %v3424 = vpop.xlane.xlu0 %3423
  %v3425 = vmul.f32 %v3411, %v3411
  %v3426 = vmul.f32 %v3412, %v3412
  %v3427 = vmul.f32 %v3413, %v3413
  %v3428 = vmul.f32 %v3414, %v3414
  %v3429 = vadd.f32 %v3425, %v3426
  %3430 = vadd.xlane.f32.xlu0 %v3429
  %v3431 = vpop.xlane.xlu0 %3430
  %v3432 = vadd.f32 %v3427, %v3428
  %3433 = vadd.xlane.f32.xlu0 %v3432
  %v3434 = vpop.xlane.xlu0 %3433
  %v3435 = vadd.f32 %v3421, %v3431
  %v3436 = vadd.f32 %v3424, %v3434
  %v3437 = vmul.f32 %v3435, 0.001953125
  %v3438 = vmul.f32 %v3436, 0.001953125
  %v3439 = vld [vmem:[%s3] sm:$0xff]
  %v3440 = vld [vmem:[%s3 + $0x8] sm:$0xff]
  %v3441 = vadd.f32 %v3437, 1e-05
  %v3442 = vadd.f32 %v3438, 1e-05
  %v3443 = vrsqrt.pop %v3441
  %v3444 = vrsqrt.pop %v3442
  %v3445 = vmul.f32 %v3439, %v3443
  %v3446 = vmul.f32 %v3440, %v3444
  %v3447 = vld [vmem:[%s4] sm:$0xff]
  %v3448 = vld [vmem:[%s4 + $0x8] sm:$0xff]
  %3450 = vset.pattern.permute.xlu0 0
  %3451 = vperm.xlu0 %3450, %v3445
  %v3452 = vpop.permute.xlu0 %3451
  %3455 = vset.pattern.permute.xlu0 0
  %3456 = vperm.xlu0 %3455, %v3446
  %v3457 = vpop.permute.xlu0 %3456
  %v3459 = vmul.f32 %v3407, %v3452
  %v3460 = vmul.f32 %v3408, %v3452
  %v3461 = vmul.f32 %v3409, %v3457
  %v3462 = vmul.f32 %v3410, %v3457
  %3464 = vset.pattern.permute.xlu0 0
  %3465 = vperm.xlu0 %3464, %v3447
  %v3466 = vpop.permute.xlu0 %3465
  %3469 = vset.pattern.permute.xlu0 0
  %3470 = vperm.xlu0 %3469, %v3448
  %v3471 = vpop.permute.xlu0 %3470
  %v3473 = vadd.f32 %v3459, %v3466
  %v3474 = vadd.f32 %v3460, %v3466
  %v3475 = vadd.f32 %v3461, %v3471
  %v3476 = vadd.f32 %v3462, %v3471
  %vm3477 = vcmp.gt.f32.partialorder %v3473, 0.0
  %vm3478 = vcmp.gt.f32.partialorder %v3474, 0.0
  %vm3479 = vcmp.gt.f32.partialorder %v3475, 0.0
  %vm3480 = vcmp.gt.f32.partialorder %v3476, 0.0
  %v3481 = vmul.f32 %v3473, 0.1
  %v3482 = vmul.f32 %v3474, 0.1
  %v3483 = vmul.f32 %v3475, 0.1
  %v3484 = vmul.f32 %v3476, 0.1
  %v3485 = vsel %vm3477, %v3473, %v3481
  %v3486 = vsel %vm3478, %v3474, %v3482
  %v3487 = vsel %vm3479, %v3475, %v3483
  %v3488 = vsel %vm3480, %v3476, %v3484
  %3489 = vst [vmem:[%s5] sm:$0xff] %v3485
  %3490 = vst [vmem:[%s5 + $0x8] sm:$0xff] %v3486
  %3491 = vst [vmem:[%s5 + $0x10] sm:$0xff] %v3487
  %3492 = vst [vmem:[%s5 + $0x18] sm:$0xff] %v3488
  %v3493 = vmul.f32 %v3411, %v3452
  %v3494 = vmul.f32 %v3412, %v3452
  %v3495 = vmul.f32 %v3413, %v3457
  %v3496 = vmul.f32 %v3414, %v3457
  %v3497 = vadd.f32 %v3493, %v3466
  %v3498 = vadd.f32 %v3494, %v3466
  %v3499 = vadd.f32 %v3495, %v3471
  %v3500 = vadd.f32 %v3496, %v3471
  %vm3501 = vcmp.gt.f32.partialorder %v3497, 0.0
  %vm3502 = vcmp.gt.f32.partialorder %v3498, 0.0
  %vm3503 = vcmp.gt.f32.partialorder %v3499, 0.0
  %vm3504 = vcmp.gt.f32.partialorder %v3500, 0.0
  %v3505 = vmul.f32 %v3497, 0.1
  %v3506 = vmul.f32 %v3498, 0.1
  %v3507 = vmul.f32 %v3499, 0.1
  %v3508 = vmul.f32 %v3500, 0.1
  %v3509 = vsel %vm3501, %v3497, %v3505
  %v3510 = vsel %vm3502, %v3498, %v3506
  %v3511 = vsel %vm3503, %v3499, %v3507
  %v3512 = vsel %vm3504, %v3500, %v3508
  %s3513 = scalar_lea.vmem %s5, 32
  %3514 = vst [vmem:[%s3513] sm:$0xff] %v3509
  %3515 = vst [vmem:[%s3513 + $0x8] sm:$0xff] %v3510
  %3516 = vst [vmem:[%s3513 + $0x10] sm:$0xff] %v3511
  %3517 = vst [vmem:[%s3513 + $0x18] sm:$0xff] %v3512
  // Predicated region
  $region22: #{cnn_forward.1} parent=0 // pred_check
    _
  $region23: #{cnn_forward.1} parent=0 // pred_check_branch
    %3519 = sbr.rel (0) target = $region25
  $region24: #{cnn_forward.1} parent=0 // pred_region
    _
  $region25: #{cnn_forward.1} parent=0 // pred_fallthru
    _
  // Predicated region
  $region26: #{cnn_forward.1} parent=0 // pred_check
    _
  $region27: #{cnn_forward.1} parent=0 // pred_check_branch
    %3521 = sbr.rel (0) target = $region29
  $region28: #{cnn_forward.1} parent=0 // pred_region
    _
  $region29: #{cnn_forward.1} parent=0 // pred_fallthru
    _

</llo_original>
